<compile_context>
chip_gen: v7x
topology: tpu7x:2x2x1
jax: 0.10.0
libtpu: 0.0.40
codegen_flags: <defaults>
</compile_context>

<pallas_src>
import functools

import numpy as np

import jax
import jax.numpy as jnp
from jax.experimental import pallas as pl
from jax.experimental.pallas import tpu as pltpu

# ----------------------------- configuration -------------------------------
B = 2                          # batch
IMG_SIZE = 16                  # img_size
HW = IMG_SIZE * IMG_SIZE       # 256 pixels = 2 full lanes of 128
ZER_CHANNELS = 8               # simulator zer has ZER_CHANNELS + 2 coeffs
WIDTH = 32                     # NAFNet width
INIT_KS = 13                   # init_ks  (ks_map value = init_ks / 100)
KS = 3                         # conv kernel size of the NAFNet-style stacks


# ----------------------------- static helpers ------------------------------
def _tap_masks():
    """(K*K, HW) f32 validity mask for each 3x3 tap on a 16x16 image."""
    p = np.arange(HW)
    i, j = p // IMG_SIZE, p % IMG_SIZE
    rows = []
    for dh in range(KS):
        for dw in range(KS):
            di, dj = dh - KS // 2, dw - KS // 2
            valid = ((i + di >= 0) & (i + di < IMG_SIZE) &
                     (j + dj >= 0) & (j + dj < IMG_SIZE))
            rows.append(valid.astype(np.float32))
    return jnp.asarray(np.stack(rows, axis=0))


def im2col_T(x_nhwc, ksize):
    """Wrapper-side im2col: (B,H,W,Cin) -> patch^T (B, K*K*Cin, H*W),
    tap-major / channel-minor row ordering (matches w.reshape(K*K*Cin, Cout))."""
    Bn, H, W, Cin = x_nhwc.shape
    pad = ksize // 2
    xp = jnp.pad(x_nhwc, ((0, 0), (pad, pad), (pad, pad), (0, 0)))
    taps = [xp[:, dh:dh + H, dw:dw + W, :]
            for dh in range(ksize) for dw in range(ksize)]
    patches = jnp.stack(taps, axis=3)                       # (B,H,W,K*K,Cin)
    patches = patches.reshape(Bn, H * W, ksize * ksize * Cin)
    return jnp.transpose(patches, (0, 2, 1))                # (B,K*K*Cin,H*W)


# --------------------------- in-kernel building blocks ----------------------
def _im2col_rows(h, masks_ref):
    """h: (C, HW) f32 -> patch^T (K*K*C, HW) bf16 via masked lane rolls."""
    pieces = []
    for dh in range(KS):
        for dw in range(KS):
            t = dh * KS + dw
            s = (dh - KS // 2) * IMG_SIZE + (dw - KS // 2)
            shifted = h if s == 0 else pltpu.roll(h, (-s) % HW, 1)
            pieces.append(shifted * masks_ref[t:t + 1, :])
    return jnp.concatenate(pieces, axis=0).astype(jnp.bfloat16)


def _conv(w_ref, x_bf16, b_ref):
    """(Cout, K) bf16 @ (K, HW) bf16 -> f32 accumulate, + per-channel bias."""
    return jnp.dot(w_ref[...], x_bf16,
                   preferred_element_type=jnp.float32) + b_ref[...]


def _naf_block(h, masks_ref, wc1_ref, bc1_ref, wc2_ref, bc2_ref):
    """3x3 conv -> SimpleGate -> 1x1 conv -> residual, fully VMEM-resident."""
    y = _conv(wc1_ref, _im2col_rows(h, masks_ref), bc1_ref)   # (WIDTH, HW)
    gate = y[:WIDTH // 2, :] * y[WIDTH // 2:, :]              # SimpleGate
    y = _conv(wc2_ref, gate.astype(jnp.bfloat16), bc2_ref)    # 1x1 conv
    return h + y


# ------------------------------ fused kernels -------------------------------
def _encoder_kernel(masks_ref, xp_ref, eps_ref,
                    wi_ref, bi_ref, wc1_ref, bc1_ref, wc2_ref, bc2_ref,
                    we_ref, be_ref,
                    mu_ref, lv_ref, z_ref):
    h = _conv(wi_ref, xp_ref[0], bi_ref)                      # intro 3x3 conv
    h = _naf_block(h, masks_ref, wc1_ref, bc1_ref, wc2_ref, bc2_ref)
    out = _conv(we_ref, _im2col_rows(h, masks_ref), be_ref)   # end 3x3 -> (2,HW)
    mu = out[0:1, :]
    lv = jnp.clip(out[1:2, :], -10.0, 10.0)
    z = eps_ref[0] * jnp.exp(0.5 * lv) + mu                   # reparameterize
    mu_ref[0] = mu
    lv_ref[0] = lv
    z_ref[0] = z


def _decoder_kernel(masks_ref, xp_ref,
                    wi_ref, bi_ref, wc1_ref, bc1_ref, wc2_ref, bc2_ref,
                    we_ref, be_ref,
                    out_ref):
    h = _conv(wi_ref, xp_ref[0], bi_ref)                      # intro 3x3 conv
    h = _naf_block(h, masks_ref, wc1_ref, bc1_ref, wc2_ref, bc2_ref)
    out_ref[0] = _conv(we_ref, _im2col_rows(h, masks_ref), be_ref)   # (1, HW)


# ----------------------------- pallas_call wrappers --------------------------
def _weight_args_specs(params, names):
    args, specs = [], []
    for name in names:
        w, bias = params[name]
        args += [w, bias]
        specs += [pl.BlockSpec(w.shape, lambda b: (0, 0)),
                  pl.BlockSpec(bias.shape, lambda b: (0, 0))]
    return args, specs


def encoder_reparam(params, masks, enc_patch, eps):
    Bn = enc_patch.shape[0]
    w_args, w_specs = _weight_args_specs(
        params, ("enc_intro", "enc_blk_c1", "enc_blk_c2", "enc_end"))
    out3 = jax.ShapeDtypeStruct((Bn, 1, HW), jnp.float32)
    return pl.pallas_call(
        _encoder_kernel,
        out_shape=(out3, out3, out3),                         # mu, log_var, z
        grid=(Bn,),
        in_specs=[
            pl.BlockSpec(masks.shape, lambda b: (0, 0)),
            pl.BlockSpec((1,) + enc_patch.shape[1:], lambda b: (b, 0, 0)),
            pl.BlockSpec((1, 1, HW), lambda b: (b, 0, 0)),
        ] + w_specs,
        out_specs=tuple(pl.BlockSpec((1, 1, HW), lambda b: (b, 0, 0))
                        for _ in range(3)),
        compiler_params=pltpu.CompilerParams(
            dimension_semantics=("parallel",)),
    )(masks, enc_patch, eps, *w_args)


def decoder_fwd(params, masks, dec_patch):
    Bn = dec_patch.shape[0]
    w_args, w_specs = _weight_args_specs(
        params, ("dec_intro", "dec_blk_c1", "dec_blk_c2", "dec_end"))
    return pl.pallas_call(
        _decoder_kernel,
        out_shape=jax.ShapeDtypeStruct((Bn, 1, HW), jnp.float32),
        grid=(Bn,),
        in_specs=[
            pl.BlockSpec(masks.shape, lambda b: (0, 0)),
            pl.BlockSpec((1,) + dec_patch.shape[1:], lambda b: (b, 0, 0)),
        ] + w_specs,
        out_specs=pl.BlockSpec((1, 1, HW), lambda b: (b, 0, 0)),
        compiler_params=pltpu.CompilerParams(
            dimension_semantics=("parallel",)),
    )(masks, dec_patch, *w_args)


# ------------------------------ parameters ----------------------------------
def _conv_params(key, ksize, cin, cout, scale=0.1):
    kw, kb = jax.random.split(key)
    w = scale * jax.random.normal(kw, (ksize * ksize, cin, cout), jnp.float32)
    b = scale * jax.random.normal(kb, (1, cout), jnp.float32)
    # Kernel layout: W^T (Cout, K*K*Cin) bf16 for the MXU, bias (Cout, 1) f32.
    w_t = jnp.transpose(w.reshape(ksize * ksize * cin, cout)).astype(jnp.bfloat16)
    b_t = jnp.transpose(b)
    return w_t, b_t


def init_params(key):
    # TODO(synk): NAFNet / NAFNet_zer full block definitions are not provided;
    # the encoder/decoder here are simplified NAFNet-style conv stacks that
    # preserve the module's I/O channel/shape contract.
    ks = jax.random.split(key, 8)
    enc_in = ZER_CHANNELS + 1          # encoder img_channel = zer_channels + 1
    return {
        "enc_intro":  _conv_params(ks[0], KS, enc_in, WIDTH),
        "enc_blk_c1": _conv_params(ks[1], KS, WIDTH, WIDTH),
        "enc_blk_c2": _conv_params(ks[2], 1, WIDTH // 2, WIDTH),
        "enc_end":    _conv_params(ks[3], KS, WIDTH, 2),        # -> (mu, log_var)
        "dec_intro":  _conv_params(ks[4], KS, 2, WIDTH),
        "dec_blk_c1": _conv_params(ks[5], KS, WIDTH, WIDTH),
        "dec_blk_c2": _conv_params(ks[6], 1, WIDTH // 2, WIDTH),
        "dec_end":    _conv_params(ks[7], KS, WIDTH, 1),
    }


# ------------------------------- forward ------------------------------------
def simulation(inp_imgs, key):
    # TODO(synk): the optical turbulence `Simulator` is an external module
    # (loads sim_path weights, random per-sample params); replaced here with
    # deterministic placeholders matching its output shapes.
    Bn, _, H, W = inp_imgs.shape
    degraded = inp_imgs
    tilt_img = inp_imgs
    zer = jax.random.normal(key, (Bn, H, W, ZER_CHANNELS + 2), jnp.float32)
    ks_map = jnp.full((Bn, H, W, 1), INIT_KS / 100.0, jnp.float32)
    return degraded, tilt_img, zer, ks_map


def zernike_vae_forward(params, inp_imgs, key):
    Bn = inp_imgs.shape[0]
    k_sim, k_eps = jax.random.split(key)
    degraded, tilt_img, zer, ks_map = simulation(inp_imgs, k_sim)

    masks = _tap_masks()                                        # (9, HW) const

    # zer_w_size = cat(zer[..., 2:], ks_map): 9-channel encoder input.
    zer_w_size = jnp.concatenate([zer[..., 2:], ks_map], axis=-1)
    enc_patch = im2col_T(zer_w_size, KS).astype(jnp.bfloat16)   # (B, 81, HW)

    eps = jax.random.normal(k_eps, (Bn, 1, HW), jnp.float32)
    mu, log_var, z = encoder_reparam(params, masks, enc_patch, eps)  # (B,1,HW)

    # decoder input: concat(tilt_img, z) channel-wise, wrapper-side im2col.
    tilt_nhwc = jnp.transpose(tilt_img, (0, 2, 3, 1))           # (B,H,W,1)
    z_nhwc = z.reshape(Bn, IMG_SIZE, IMG_SIZE, 1)
    dec_patch = im2col_T(jnp.concatenate([tilt_nhwc, z_nhwc], axis=-1),
                         KS).astype(jnp.bfloat16)               # (B, 18, HW)
    re_degraded = decoder_fwd(params, masks, dec_patch)         # (B, 1, HW)

    to_nchw = lambda r: r.reshape(Bn, 1, IMG_SIZE, IMG_SIZE)
    return (degraded, to_nchw(re_degraded), zer,
            to_nchw(z), to_nchw(mu), to_nchw(log_var))


# --------------------------------- main --------------------------------------
if __name__ == "__main__":
    root = jax.random.PRNGKey(0)
    k_params, k_input, k_fwd = jax.random.split(root, 3)

    params = init_params(k_params)
    inp_imgs = jax.random.normal(k_input, (B, 1, IMG_SIZE, IMG_SIZE), jnp.float32)

    fwd = jax.jit(functools.partial(zernike_vae_forward, params))
    outs = jax.block_until_ready(fwd(inp_imgs, k_fwd))

    degraded, re_degraded, zer, z, mu, log_var = outs
    assert degraded.shape == (B, 1, IMG_SIZE, IMG_SIZE)
    assert re_degraded.shape == (B, 1, IMG_SIZE, IMG_SIZE)
    assert zer.shape == (B, IMG_SIZE, IMG_SIZE, ZER_CHANNELS + 2)
    assert z.shape == (B, 1, IMG_SIZE, IMG_SIZE)
    assert mu.shape == (B, 1, IMG_SIZE, IMG_SIZE)
    assert log_var.shape == (B, 1, IMG_SIZE, IMG_SIZE)
    assert all(bool(jnp.isfinite(o).all()) for o in outs)

    print("KERNEL_OK")
</pallas_src>

<mosaic_0001>
module attributes {stable_mosaic.version = 11 : i64} {
  func.func @_encoder_kernel(%arg0: i32, %arg1: memref<9x256xf32, #tpu.memory_space<vmem>>, %arg2: memref<1x81x256xbf16, #tpu.memory_space<vmem>>, %arg3: memref<1x1x256xf32, #tpu.memory_space<vmem>>, %arg4: memref<32x81xbf16, #tpu.memory_space<vmem>>, %arg5: memref<32x1xf32, #tpu.memory_space<vmem>>, %arg6: memref<32x288xbf16, #tpu.memory_space<vmem>>, %arg7: memref<32x1xf32, #tpu.memory_space<vmem>>, %arg8: memref<32x16xbf16, #tpu.memory_space<vmem>>, %arg9: memref<32x1xf32, #tpu.memory_space<vmem>>, %arg10: memref<2x288xbf16, #tpu.memory_space<vmem>>, %arg11: memref<2x1xf32, #tpu.memory_space<vmem>>, %arg12: memref<1x1x256xf32, #tpu.memory_space<vmem>>, %arg13: memref<1x1x256xf32, #tpu.memory_space<vmem>>, %arg14: memref<1x1x256xf32, #tpu.memory_space<vmem>>) attributes {dimension_semantics = [#tpu.dimension_semantics<parallel>], iteration_bounds = array<i64: 2>, scalar_prefetch = 0 : i64, scratch_operands = 0 : i64, tpu.core_type = #tpu.core_type<tc>, window_params = [{pipeline_mode = #tpu.pipeline_mode<synchronous>, transform_indices = @transform_0, window_bounds = array<i64: 9, 256>}, {transform_indices = @transform_1, window_bounds = array<i64: 1, 81, 256>}, {transform_indices = @transform_2, window_bounds = array<i64: 1, 1, 256>}, {pipeline_mode = #tpu.pipeline_mode<synchronous>, transform_indices = @transform_3, window_bounds = array<i64: 32, 81>}, {pipeline_mode = #tpu.pipeline_mode<synchronous>, transform_indices = @transform_4, window_bounds = array<i64: 32, 1>}, {pipeline_mode = #tpu.pipeline_mode<synchronous>, transform_indices = @transform_5, window_bounds = array<i64: 32, 288>}, {pipeline_mode = #tpu.pipeline_mode<synchronous>, transform_indices = @transform_6, window_bounds = array<i64: 32, 1>}, {pipeline_mode = #tpu.pipeline_mode<synchronous>, transform_indices = @transform_7, window_bounds = array<i64: 32, 16>}, {pipeline_mode = #tpu.pipeline_mode<synchronous>, transform_indices = @transform_8, window_bounds = array<i64: 32, 1>}, {pipeline_mode = #tpu.pipeline_mode<synchronous>, transform_indices = @transform_9, window_bounds = array<i64: 2, 288>}, {pipeline_mode = #tpu.pipeline_mode<synchronous>, transform_indices = @transform_10, window_bounds = array<i64: 2, 1>}, {transform_indices = @transform_11, window_bounds = array<i64: 1, 1, 256>}, {transform_indices = @transform_12, window_bounds = array<i64: 1, 1, 256>}, {transform_indices = @transform_13, window_bounds = array<i64: 1, 1, 256>}]} {
    %c0 = arith.constant 0 : index
    %c0_0 = arith.constant 0 : index
    %c0_1 = arith.constant 0 : index
    %0 = vector.load %arg2[%c0, %c0_0, %c0_1] : memref<1x81x256xbf16, #tpu.memory_space<vmem>>, vector<1x81x256xbf16>
    %1 = vector.shape_cast %0 : vector<1x81x256xbf16> to vector<81x256xbf16>
    %c0_2 = arith.constant 0 : index
    %c0_3 = arith.constant 0 : index
    %2 = vector.load %arg4[%c0_2, %c0_3] : memref<32x81xbf16, #tpu.memory_space<vmem>>, vector<32x81xbf16>
    %cst = arith.constant dense<0.000000e+00> : vector<32x256xf32>
    %3 = tpu.matmul %2, %1, %cst {dimension_numbers = #tpu.dot_dimension_numbers<[1], [0], [0], [1], [0, 0, 1, 1], [], []>} : vector<32x81xbf16>, vector<81x256xbf16>, vector<32x256xf32> -> vector<32x256xf32>
    %c0_4 = arith.constant 0 : index
    %c0_5 = arith.constant 0 : index
    %4 = vector.load %arg5[%c0_4, %c0_5] : memref<32x1xf32, #tpu.memory_space<vmem>>, vector<32x1xf32>
    %5 = vector.broadcast %4 : vector<32x1xf32> to vector<32x256xf32>
    %6 = arith.addf %3, %5 : vector<32x256xf32>
    %c17_i32 = arith.constant 17 : i32
    %7 = tpu.dynamic_rotate %6 by %c17_i32 dim 1 : vector<32x256xf32>, i32 -> vector<32x256xf32>
    %c0_6 = arith.constant 0 : index
    %c0_7 = arith.constant 0 : index
    %8 = vector.load %arg1[%c0_6, %c0_7] : memref<9x256xf32, #tpu.memory_space<vmem>>, vector<1x256xf32>
    %9 = vector.broadcast %8 : vector<1x256xf32> to vector<32x256xf32>
    %10 = arith.mulf %7, %9 : vector<32x256xf32>
    %c16_i32 = arith.constant 16 : i32
    %11 = tpu.dynamic_rotate %6 by %c16_i32 dim 1 : vector<32x256xf32>, i32 -> vector<32x256xf32>
    %c1 = arith.constant 1 : index
    %c0_8 = arith.constant 0 : index
    %12 = vector.load %arg1[%c1, %c0_8] : memref<9x256xf32, #tpu.memory_space<vmem>>, vector<1x256xf32>
    %13 = vector.broadcast %12 : vector<1x256xf32> to vector<32x256xf32>
    %14 = arith.mulf %11, %13 : vector<32x256xf32>
    %c15_i32 = arith.constant 15 : i32
    %15 = tpu.dynamic_rotate %6 by %c15_i32 dim 1 : vector<32x256xf32>, i32 -> vector<32x256xf32>
    %c2 = arith.constant 2 : index
    %c0_9 = arith.constant 0 : index
    %16 = vector.load %arg1[%c2, %c0_9] : memref<9x256xf32, #tpu.memory_space<vmem>>, vector<1x256xf32>
    %17 = vector.broadcast %16 : vector<1x256xf32> to vector<32x256xf32>
    %18 = arith.mulf %15, %17 : vector<32x256xf32>
    %c1_i32 = arith.constant 1 : i32
    %19 = tpu.dynamic_rotate %6 by %c1_i32 dim 1 : vector<32x256xf32>, i32 -> vector<32x256xf32>
    %c3 = arith.constant 3 : index
    %c0_10 = arith.constant 0 : index
    %20 = vector.load %arg1[%c3, %c0_10] : memref<9x256xf32, #tpu.memory_space<vmem>>, vector<1x256xf32>
    %21 = vector.broadcast %20 : vector<1x256xf32> to vector<32x256xf32>
    %22 = arith.mulf %19, %21 : vector<32x256xf32>
    %c4 = arith.constant 4 : index
    %c0_11 = arith.constant 0 : index
    %23 = vector.load %arg1[%c4, %c0_11] : memref<9x256xf32, #tpu.memory_space<vmem>>, vector<1x256xf32>
    %24 = vector.broadcast %23 : vector<1x256xf32> to vector<32x256xf32>
    %25 = arith.mulf %6, %24 : vector<32x256xf32>
    %c255_i32 = arith.constant 255 : i32
    %26 = tpu.dynamic_rotate %6 by %c255_i32 dim 1 : vector<32x256xf32>, i32 -> vector<32x256xf32>
    %c5 = arith.constant 5 : index
    %c0_12 = arith.constant 0 : index
    %27 = vector.load %arg1[%c5, %c0_12] : memref<9x256xf32, #tpu.memory_space<vmem>>, vector<1x256xf32>
    %28 = vector.broadcast %27 : vector<1x256xf32> to vector<32x256xf32>
    %29 = arith.mulf %26, %28 : vector<32x256xf32>
    %c241_i32 = arith.constant 241 : i32
    %30 = tpu.dynamic_rotate %6 by %c241_i32 dim 1 : vector<32x256xf32>, i32 -> vector<32x256xf32>
    %c6 = arith.constant 6 : index
    %c0_13 = arith.constant 0 : index
    %31 = vector.load %arg1[%c6, %c0_13] : memref<9x256xf32, #tpu.memory_space<vmem>>, vector<1x256xf32>
    %32 = vector.broadcast %31 : vector<1x256xf32> to vector<32x256xf32>
    %33 = arith.mulf %30, %32 : vector<32x256xf32>
    %c240_i32 = arith.constant 240 : i32
    %34 = tpu.dynamic_rotate %6 by %c240_i32 dim 1 : vector<32x256xf32>, i32 -> vector<32x256xf32>
    %c7 = arith.constant 7 : index
    %c0_14 = arith.constant 0 : index
    %35 = vector.load %arg1[%c7, %c0_14] : memref<9x256xf32, #tpu.memory_space<vmem>>, vector<1x256xf32>
    %36 = vector.broadcast %35 : vector<1x256xf32> to vector<32x256xf32>
    %37 = arith.mulf %34, %36 : vector<32x256xf32>
    %c239_i32 = arith.constant 239 : i32
    %38 = tpu.dynamic_rotate %6 by %c239_i32 dim 1 : vector<32x256xf32>, i32 -> vector<32x256xf32>
    %c8 = arith.constant 8 : index
    %c0_15 = arith.constant 0 : index
    %39 = vector.load %arg1[%c8, %c0_15] : memref<9x256xf32, #tpu.memory_space<vmem>>, vector<1x256xf32>
    %40 = vector.broadcast %39 : vector<1x256xf32> to vector<32x256xf32>
    %41 = arith.mulf %38, %40 : vector<32x256xf32>
    %42 = tpu.concatenate %10, %14, %18, %22, %25, %29, %33, %37, %41 in 0 : vector<32x256xf32>, vector<32x256xf32>, vector<32x256xf32>, vector<32x256xf32>, vector<32x256xf32>, vector<32x256xf32>, vector<32x256xf32>, vector<32x256xf32>, vector<32x256xf32> -> vector<288x256xf32>
    %43 = arith.truncf %42 : vector<288x256xf32> to vector<288x256xbf16>
    %c0_16 = arith.constant 0 : index
    %c0_17 = arith.constant 0 : index
    %44 = vector.load %arg6[%c0_16, %c0_17] : memref<32x288xbf16, #tpu.memory_space<vmem>>, vector<32x288xbf16>
    %cst_18 = arith.constant dense<0.000000e+00> : vector<32x256xf32>
    %45 = tpu.matmul %44, %43, %cst_18 {dimension_numbers = #tpu.dot_dimension_numbers<[1], [0], [0], [1], [0, 0, 1, 1], [], []>} : vector<32x288xbf16>, vector<288x256xbf16>, vector<32x256xf32> -> vector<32x256xf32>
    %c0_19 = arith.constant 0 : index
    %c0_20 = arith.constant 0 : index
    %46 = vector.load %arg7[%c0_19, %c0_20] : memref<32x1xf32, #tpu.memory_space<vmem>>, vector<32x1xf32>
    %47 = vector.broadcast %46 : vector<32x1xf32> to vector<32x256xf32>
    %48 = arith.addf %45, %47 : vector<32x256xf32>
    %49 = vector.extract_strided_slice %48 {offsets = [0, 0], sizes = [16, 256], strides = [1, 1]} : vector<32x256xf32> to vector<16x256xf32>
    %50 = vector.extract_strided_slice %48 {offsets = [16, 0], sizes = [16, 256], strides = [1, 1]} : vector<32x256xf32> to vector<16x256xf32>
    %51 = arith.mulf %49, %50 : vector<16x256xf32>
    %52 = arith.truncf %51 : vector<16x256xf32> to vector<16x256xbf16>
    %c0_21 = arith.constant 0 : index
    %c0_22 = arith.constant 0 : index
    %53 = vector.load %arg8[%c0_21, %c0_22] : memref<32x16xbf16, #tpu.memory_space<vmem>>, vector<32x16xbf16>
    %cst_23 = arith.constant dense<0.000000e+00> : vector<32x256xf32>
    %54 = tpu.matmul %53, %52, %cst_23 {dimension_numbers = #tpu.dot_dimension_numbers<[1], [0], [0], [1], [0, 0, 1, 1], [], []>} : vector<32x16xbf16>, vector<16x256xbf16>, vector<32x256xf32> -> vector<32x256xf32>
    %c0_24 = arith.constant 0 : index
    %c0_25 = arith.constant 0 : index
    %55 = vector.load %arg9[%c0_24, %c0_25] : memref<32x1xf32, #tpu.memory_space<vmem>>, vector<32x1xf32>
    %56 = vector.broadcast %55 : vector<32x1xf32> to vector<32x256xf32>
    %57 = arith.addf %54, %56 : vector<32x256xf32>
    %58 = arith.addf %6, %57 : vector<32x256xf32>
    %c17_i32_26 = arith.constant 17 : i32
    %59 = tpu.dynamic_rotate %58 by %c17_i32_26 dim 1 : vector<32x256xf32>, i32 -> vector<32x256xf32>
    %c0_27 = arith.constant 0 : index
    %c0_28 = arith.constant 0 : index
    %60 = vector.load %arg1[%c0_27, %c0_28] : memref<9x256xf32, #tpu.memory_space<vmem>>, vector<1x256xf32>
    %61 = vector.broadcast %60 : vector<1x256xf32> to vector<32x256xf32>
    %62 = arith.mulf %59, %61 : vector<32x256xf32>
    %c16_i32_29 = arith.constant 16 : i32
    %63 = tpu.dynamic_rotate %58 by %c16_i32_29 dim 1 : vector<32x256xf32>, i32 -> vector<32x256xf32>
    %c1_30 = arith.constant 1 : index
    %c0_31 = arith.constant 0 : index
    %64 = vector.load %arg1[%c1_30, %c0_31] : memref<9x256xf32, #tpu.memory_space<vmem>>, vector<1x256xf32>
    %65 = vector.broadcast %64 : vector<1x256xf32> to vector<32x256xf32>
    %66 = arith.mulf %63, %65 : vector<32x256xf32>
    %c15_i32_32 = arith.constant 15 : i32
    %67 = tpu.dynamic_rotate %58 by %c15_i32_32 dim 1 : vector<32x256xf32>, i32 -> vector<32x256xf32>
    %c2_33 = arith.constant 2 : index
    %c0_34 = arith.constant 0 : index
    %68 = vector.load %arg1[%c2_33, %c0_34] : memref<9x256xf32, #tpu.memory_space<vmem>>, vector<1x256xf32>
    %69 = vector.broadcast %68 : vector<1x256xf32> to vector<32x256xf32>
    %70 = arith.mulf %67, %69 : vector<32x256xf32>
    %c1_i32_35 = arith.constant 1 : i32
    %71 = tpu.dynamic_rotate %58 by %c1_i32_35 dim 1 : vector<32x256xf32>, i32 -> vector<32x256xf32>
    %c3_36 = arith.constant 3 : index
    %c0_37 = arith.constant 0 : index
    %72 = vector.load %arg1[%c3_36, %c0_37] : memref<9x256xf32, #tpu.memory_space<vmem>>, vector<1x256xf32>
    %73 = vector.broadcast %72 : vector<1x256xf32> to vector<32x256xf32>
    %74 = arith.mulf %71, %73 : vector<32x256xf32>
    %c4_38 = arith.constant 4 : index
    %c0_39 = arith.constant 0 : index
    %75 = vector.load %arg1[%c4_38, %c0_39] : memref<9x256xf32, #tpu.memory_space<vmem>>, vector<1x256xf32>
    %76 = vector.broadcast %75 : vector<1x256xf32> to vector<32x256xf32>
    %77 = arith.mulf %58, %76 : vector<32x256xf32>
    %c255_i32_40 = arith.constant 255 : i32
    %78 = tpu.dynamic_rotate %58 by %c255_i32_40 dim 1 : vector<32x256xf32>, i32 -> vector<32x256xf32>
    %c5_41 = arith.constant 5 : index
    %c0_42 = arith.constant 0 : index
    %79 = vector.load %arg1[%c5_41, %c0_42] : memref<9x256xf32, #tpu.memory_space<vmem>>, vector<1x256xf32>
    %80 = vector.broadcast %79 : vector<1x256xf32> to vector<32x256xf32>
    %81 = arith.mulf %78, %80 : vector<32x256xf32>
    %c241_i32_43 = arith.constant 241 : i32
    %82 = tpu.dynamic_rotate %58 by %c241_i32_43 dim 1 : vector<32x256xf32>, i32 -> vector<32x256xf32>
    %c6_44 = arith.constant 6 : index
    %c0_45 = arith.constant 0 : index
    %83 = vector.load %arg1[%c6_44, %c0_45] : memref<9x256xf32, #tpu.memory_space<vmem>>, vector<1x256xf32>
    %84 = vector.broadcast %83 : vector<1x256xf32> to vector<32x256xf32>
    %85 = arith.mulf %82, %84 : vector<32x256xf32>
    %c240_i32_46 = arith.constant 240 : i32
    %86 = tpu.dynamic_rotate %58 by %c240_i32_46 dim 1 : vector<32x256xf32>, i32 -> vector<32x256xf32>
    %c7_47 = arith.constant 7 : index
    %c0_48 = arith.constant 0 : index
    %87 = vector.load %arg1[%c7_47, %c0_48] : memref<9x256xf32, #tpu.memory_space<vmem>>, vector<1x256xf32>
    %88 = vector.broadcast %87 : vector<1x256xf32> to vector<32x256xf32>
    %89 = arith.mulf %86, %88 : vector<32x256xf32>
    %c239_i32_49 = arith.constant 239 : i32
    %90 = tpu.dynamic_rotate %58 by %c239_i32_49 dim 1 : vector<32x256xf32>, i32 -> vector<32x256xf32>
    %c8_50 = arith.constant 8 : index
    %c0_51 = arith.constant 0 : index
    %91 = vector.load %arg1[%c8_50, %c0_51] : memref<9x256xf32, #tpu.memory_space<vmem>>, vector<1x256xf32>
    %92 = vector.broadcast %91 : vector<1x256xf32> to vector<32x256xf32>
    %93 = arith.mulf %90, %92 : vector<32x256xf32>
    %94 = tpu.concatenate %62, %66, %70, %74, %77, %81, %85, %89, %93 in 0 : vector<32x256xf32>, vector<32x256xf32>, vector<32x256xf32>, vector<32x256xf32>, vector<32x256xf32>, vector<32x256xf32>, vector<32x256xf32>, vector<32x256xf32>, vector<32x256xf32> -> vector<288x256xf32>
    %95 = arith.truncf %94 : vector<288x256xf32> to vector<288x256xbf16>
    %c0_52 = arith.constant 0 : index
    %c0_53 = arith.constant 0 : index
    %96 = vector.load %arg10[%c0_52, %c0_53] : memref<2x288xbf16, #tpu.memory_space<vmem>>, vector<2x288xbf16>
    %cst_54 = arith.constant dense<0.000000e+00> : vector<2x256xf32>
    %97 = tpu.matmul %96, %95, %cst_54 {dimension_numbers = #tpu.dot_dimension_numbers<[1], [0], [0], [1], [0, 0, 1, 1], [], []>} : vector<2x288xbf16>, vector<288x256xbf16>, vector<2x256xf32> -> vector<2x256xf32>
    %c0_55 = arith.constant 0 : index
    %c0_56 = arith.constant 0 : index
    %98 = vector.load %arg11[%c0_55, %c0_56] : memref<2x1xf32, #tpu.memory_space<vmem>>, vector<2x1xf32>
    %99 = vector.broadcast %98 : vector<2x1xf32> to vector<2x256xf32>
    %100 = arith.addf %97, %99 : vector<2x256xf32>
    %101 = vector.extract_strided_slice %100 {offsets = [0, 0], sizes = [1, 256], strides = [1, 1]} : vector<2x256xf32> to vector<1x256xf32>
    %102 = vector.extract_strided_slice %100 {offsets = [1, 0], sizes = [1, 256], strides = [1, 1]} : vector<2x256xf32> to vector<1x256xf32>
    %cst_57 = arith.constant -1.000000e+01 : f32
    %cst_58 = arith.constant 1.000000e+01 : f32
    %103 = vector.broadcast %cst_57 : f32 to vector<1x256xf32>
    %104 = arith.maximumf %103, %102 : vector<1x256xf32>
    %105 = vector.broadcast %cst_58 : f32 to vector<1x256xf32>
    %106 = arith.minimumf %105, %104 : vector<1x256xf32>
    %c0_59 = arith.constant 0 : index
    %c0_60 = arith.constant 0 : index
    %c0_61 = arith.constant 0 : index
    %107 = vector.load %arg3[%c0_59, %c0_60, %c0_61] : memref<1x1x256xf32, #tpu.memory_space<vmem>>, vector<1x1x256xf32>
    %108 = vector.shape_cast %107 : vector<1x1x256xf32> to vector<1x256xf32>
    %cst_62 = arith.constant 5.000000e-01 : f32
    %109 = vector.broadcast %cst_62 : f32 to vector<1x256xf32>
    %110 = arith.mulf %109, %106 : vector<1x256xf32>
    %111 = math.exp %110 : vector<1x256xf32>
    %112 = arith.mulf %108, %111 : vector<1x256xf32>
    %113 = arith.addf %112, %101 : vector<1x256xf32>
    %c0_63 = arith.constant 0 : index
    %c0_64 = arith.constant 0 : index
    %c0_65 = arith.constant 0 : index
    %114 = vector.load %arg12[%c0_63, %c0_64, %c0_65] : memref<1x1x256xf32, #tpu.memory_space<vmem>>, vector<1x1x256xf32>
    %115 = vector.shape_cast %114 : vector<1x1x256xf32> to vector<1x256xf32>
    %116 = vector.shape_cast %101 : vector<1x256xf32> to vector<1x1x256xf32>
    tpu.vector_store %arg12[%c0_63, %c0_64, %c0_65], %116 {strides = array<i32>} : memref<1x1x256xf32, #tpu.memory_space<vmem>>, vector<1x1x256xf32>,
    %c0_66 = arith.constant 0 : index
    %c0_67 = arith.constant 0 : index
    %c0_68 = arith.constant 0 : index
    %117 = vector.load %arg13[%c0_66, %c0_67, %c0_68] : memref<1x1x256xf32, #tpu.memory_space<vmem>>, vector<1x1x256xf32>
    %118 = vector.shape_cast %117 : vector<1x1x256xf32> to vector<1x256xf32>
    %119 = vector.shape_cast %106 : vector<1x256xf32> to vector<1x1x256xf32>
    tpu.vector_store %arg13[%c0_66, %c0_67, %c0_68], %119 {strides = array<i32>} : memref<1x1x256xf32, #tpu.memory_space<vmem>>, vector<1x1x256xf32>,
    %c0_69 = arith.constant 0 : index
    %c0_70 = arith.constant 0 : index
    %c0_71 = arith.constant 0 : index
    %120 = vector.load %arg14[%c0_69, %c0_70, %c0_71] : memref<1x1x256xf32, #tpu.memory_space<vmem>>, vector<1x1x256xf32>
    %121 = vector.shape_cast %120 : vector<1x1x256xf32> to vector<1x256xf32>
    %122 = vector.shape_cast %113 : vector<1x256xf32> to vector<1x1x256xf32>
    tpu.vector_store %arg14[%c0_69, %c0_70, %c0_71], %122 {strides = array<i32>} : memref<1x1x256xf32, #tpu.memory_space<vmem>>, vector<1x1x256xf32>,
    return
  }
  func.func @transform_0(%arg0: i32) -> (i32, i32) {
    %c0_i32 = arith.constant 0 : i32
    %c0_i32_0 = arith.constant 0 : i32
    %c0_i32_1 = arith.constant 0 : i32
    return %c0_i32, %c0_i32_0 : i32, i32
  }
  func.func @transform_1(%arg0: i32) -> (i32, i32, i32) {
    %c0_i32 = arith.constant 0 : i32
    %c0_i32_0 = arith.constant 0 : i32
    %c0_i32_1 = arith.constant 0 : i32
    return %arg0, %c0_i32, %c0_i32_0 : i32, i32, i32
  }
  func.func @transform_2(%arg0: i32) -> (i32, i32, i32) {
    %c0_i32 = arith.constant 0 : i32
    %c0_i32_0 = arith.constant 0 : i32
    %c0_i32_1 = arith.constant 0 : i32
    return %arg0, %c0_i32, %c0_i32_0 : i32, i32, i32
  }
  func.func @transform_3(%arg0: i32) -> (i32, i32) {
    %c0_i32 = arith.constant 0 : i32
    %c0_i32_0 = arith.constant 0 : i32
    %c0_i32_1 = arith.constant 0 : i32
    return %c0_i32, %c0_i32_0 : i32, i32
  }
  func.func @transform_4(%arg0: i32) -> (i32, i32) {
    %c0_i32 = arith.constant 0 : i32
    %c0_i32_0 = arith.constant 0 : i32
    %c0_i32_1 = arith.constant 0 : i32
    return %c0_i32, %c0_i32_0 : i32, i32
  }
  func.func @transform_5(%arg0: i32) -> (i32, i32) {
    %c0_i32 = arith.constant 0 : i32
    %c0_i32_0 = arith.constant 0 : i32
    %c0_i32_1 = arith.constant 0 : i32
    return %c0_i32, %c0_i32_0 : i32, i32
  }
  func.func @transform_6(%arg0: i32) -> (i32, i32) {
    %c0_i32 = arith.constant 0 : i32
    %c0_i32_0 = arith.constant 0 : i32
    %c0_i32_1 = arith.constant 0 : i32
    return %c0_i32, %c0_i32_0 : i32, i32
  }
  func.func @transform_7(%arg0: i32) -> (i32, i32) {
    %c0_i32 = arith.constant 0 : i32
    %c0_i32_0 = arith.constant 0 : i32
    %c0_i32_1 = arith.constant 0 : i32
    return %c0_i32, %c0_i32_0 : i32, i32
  }
  func.func @transform_8(%arg0: i32) -> (i32, i32) {
    %c0_i32 = arith.constant 0 : i32
    %c0_i32_0 = arith.constant 0 : i32
    %c0_i32_1 = arith.constant 0 : i32
    return %c0_i32, %c0_i32_0 : i32, i32
  }
  func.func @transform_9(%arg0: i32) -> (i32, i32) {
    %c0_i32 = arith.constant 0 : i32
    %c0_i32_0 = arith.constant 0 : i32
    %c0_i32_1 = arith.constant 0 : i32
    return %c0_i32, %c0_i32_0 : i32, i32
  }
  func.func @transform_10(%arg0: i32) -> (i32, i32) {
    %c0_i32 = arith.constant 0 : i32
    %c0_i32_0 = arith.constant 0 : i32
    %c0_i32_1 = arith.constant 0 : i32
    return %c0_i32, %c0_i32_0 : i32, i32
  }
  func.func @transform_11(%arg0: i32) -> (i32, i32, i32) {
    %c0_i32 = arith.constant 0 : i32
    %c0_i32_0 = arith.constant 0 : i32
    %c0_i32_1 = arith.constant 0 : i32
    return %arg0, %c0_i32, %c0_i32_0 : i32, i32, i32
  }
  func.func @transform_12(%arg0: i32) -> (i32, i32, i32) {
    %c0_i32 = arith.constant 0 : i32
    %c0_i32_0 = arith.constant 0 : i32
    %c0_i32_1 = arith.constant 0 : i32
    return %arg0, %c0_i32, %c0_i32_0 : i32, i32, i32
  }
  func.func @transform_13(%arg0: i32) -> (i32, i32, i32) {
    %c0_i32 = arith.constant 0 : i32
    %c0_i32_0 = arith.constant 0 : i32
    %c0_i32_1 = arith.constant 0 : i32
    return %arg0, %c0_i32, %c0_i32_0 : i32, i32, i32
  }
}

module attributes {stable_mosaic.version = 11 : i64} {
  func.func @_decoder_kernel(%arg0: i32, %arg1: memref<9x256xf32, #tpu.memory_space<vmem>>, %arg2: memref<1x18x256xbf16, #tpu.memory_space<vmem>>, %arg3: memref<32x18xbf16, #tpu.memory_space<vmem>>, %arg4: memref<32x1xf32, #tpu.memory_space<vmem>>, %arg5: memref<32x288xbf16, #tpu.memory_space<vmem>>, %arg6: memref<32x1xf32, #tpu.memory_space<vmem>>, %arg7: memref<32x16xbf16, #tpu.memory_space<vmem>>, %arg8: memref<32x1xf32, #tpu.memory_space<vmem>>, %arg9: memref<1x288xbf16, #tpu.memory_space<vmem>>, %arg10: memref<1x1xf32, #tpu.memory_space<vmem>>, %arg11: memref<1x1x256xf32, #tpu.memory_space<vmem>>) attributes {dimension_semantics = [#tpu.dimension_semantics<parallel>], iteration_bounds = array<i64: 2>, scalar_prefetch = 0 : i64, scratch_operands = 0 : i64, tpu.core_type = #tpu.core_type<tc>, window_params = [{pipeline_mode = #tpu.pipeline_mode<synchronous>, transform_indices = @transform_0, window_bounds = array<i64: 9, 256>}, {transform_indices = @transform_1, window_bounds = array<i64: 1, 18, 256>}, {pipeline_mode = #tpu.pipeline_mode<synchronous>, transform_indices = @transform_2, window_bounds = array<i64: 32, 18>}, {pipeline_mode = #tpu.pipeline_mode<synchronous>, transform_indices = @transform_3, window_bounds = array<i64: 32, 1>}, {pipeline_mode = #tpu.pipeline_mode<synchronous>, transform_indices = @transform_4, window_bounds = array<i64: 32, 288>}, {pipeline_mode = #tpu.pipeline_mode<synchronous>, transform_indices = @transform_5, window_bounds = array<i64: 32, 1>}, {pipeline_mode = #tpu.pipeline_mode<synchronous>, transform_indices = @transform_6, window_bounds = array<i64: 32, 16>}, {pipeline_mode = #tpu.pipeline_mode<synchronous>, transform_indices = @transform_7, window_bounds = array<i64: 32, 1>}, {pipeline_mode = #tpu.pipeline_mode<synchronous>, transform_indices = @transform_8, window_bounds = array<i64: 1, 288>}, {pipeline_mode = #tpu.pipeline_mode<synchronous>, transform_indices = @transform_9, window_bounds = array<i64: 1, 1>}, {transform_indices = @transform_10, window_bounds = array<i64: 1, 1, 256>}]} {
    %c0 = arith.constant 0 : index
    %c0_0 = arith.constant 0 : index
    %c0_1 = arith.constant 0 : index
    %0 = vector.load %arg2[%c0, %c0_0, %c0_1] : memref<1x18x256xbf16, #tpu.memory_space<vmem>>, vector<1x18x256xbf16>
    %1 = vector.shape_cast %0 : vector<1x18x256xbf16> to vector<18x256xbf16>
    %c0_2 = arith.constant 0 : index
    %c0_3 = arith.constant 0 : index
    %2 = vector.load %arg3[%c0_2, %c0_3] : memref<32x18xbf16, #tpu.memory_space<vmem>>, vector<32x18xbf16>
    %cst = arith.constant dense<0.000000e+00> : vector<32x256xf32>
    %3 = tpu.matmul %2, %1, %cst {dimension_numbers = #tpu.dot_dimension_numbers<[1], [0], [0], [1], [0, 0, 1, 1], [], []>} : vector<32x18xbf16>, vector<18x256xbf16>, vector<32x256xf32> -> vector<32x256xf32>
    %c0_4 = arith.constant 0 : index
    %c0_5 = arith.constant 0 : index
    %4 = vector.load %arg4[%c0_4, %c0_5] : memref<32x1xf32, #tpu.memory_space<vmem>>, vector<32x1xf32>
    %5 = vector.broadcast %4 : vector<32x1xf32> to vector<32x256xf32>
    %6 = arith.addf %3, %5 : vector<32x256xf32>
    %c17_i32 = arith.constant 17 : i32
    %7 = tpu.dynamic_rotate %6 by %c17_i32 dim 1 : vector<32x256xf32>, i32 -> vector<32x256xf32>
    %c0_6 = arith.constant 0 : index
    %c0_7 = arith.constant 0 : index
    %8 = vector.load %arg1[%c0_6, %c0_7] : memref<9x256xf32, #tpu.memory_space<vmem>>, vector<1x256xf32>
    %9 = vector.broadcast %8 : vector<1x256xf32> to vector<32x256xf32>
    %10 = arith.mulf %7, %9 : vector<32x256xf32>
    %c16_i32 = arith.constant 16 : i32
    %11 = tpu.dynamic_rotate %6 by %c16_i32 dim 1 : vector<32x256xf32>, i32 -> vector<32x256xf32>
    %c1 = arith.constant 1 : index
    %c0_8 = arith.constant 0 : index
    %12 = vector.load %arg1[%c1, %c0_8] : memref<9x256xf32, #tpu.memory_space<vmem>>, vector<1x256xf32>
    %13 = vector.broadcast %12 : vector<1x256xf32> to vector<32x256xf32>
    %14 = arith.mulf %11, %13 : vector<32x256xf32>
    %c15_i32 = arith.constant 15 : i32
    %15 = tpu.dynamic_rotate %6 by %c15_i32 dim 1 : vector<32x256xf32>, i32 -> vector<32x256xf32>
    %c2 = arith.constant 2 : index
    %c0_9 = arith.constant 0 : index
    %16 = vector.load %arg1[%c2, %c0_9] : memref<9x256xf32, #tpu.memory_space<vmem>>, vector<1x256xf32>
    %17 = vector.broadcast %16 : vector<1x256xf32> to vector<32x256xf32>
    %18 = arith.mulf %15, %17 : vector<32x256xf32>
    %c1_i32 = arith.constant 1 : i32
    %19 = tpu.dynamic_rotate %6 by %c1_i32 dim 1 : vector<32x256xf32>, i32 -> vector<32x256xf32>
    %c3 = arith.constant 3 : index
    %c0_10 = arith.constant 0 : index
    %20 = vector.load %arg1[%c3, %c0_10] : memref<9x256xf32, #tpu.memory_space<vmem>>, vector<1x256xf32>
    %21 = vector.broadcast %20 : vector<1x256xf32> to vector<32x256xf32>
    %22 = arith.mulf %19, %21 : vector<32x256xf32>
    %c4 = arith.constant 4 : index
    %c0_11 = arith.constant 0 : index
    %23 = vector.load %arg1[%c4, %c0_11] : memref<9x256xf32, #tpu.memory_space<vmem>>, vector<1x256xf32>
    %24 = vector.broadcast %23 : vector<1x256xf32> to vector<32x256xf32>
    %25 = arith.mulf %6, %24 : vector<32x256xf32>
    %c255_i32 = arith.constant 255 : i32
    %26 = tpu.dynamic_rotate %6 by %c255_i32 dim 1 : vector<32x256xf32>, i32 -> vector<32x256xf32>
    %c5 = arith.constant 5 : index
    %c0_12 = arith.constant 0 : index
    %27 = vector.load %arg1[%c5, %c0_12] : memref<9x256xf32, #tpu.memory_space<vmem>>, vector<1x256xf32>
    %28 = vector.broadcast %27 : vector<1x256xf32> to vector<32x256xf32>
    %29 = arith.mulf %26, %28 : vector<32x256xf32>
    %c241_i32 = arith.constant 241 : i32
    %30 = tpu.dynamic_rotate %6 by %c241_i32 dim 1 : vector<32x256xf32>, i32 -> vector<32x256xf32>
    %c6 = arith.constant 6 : index
    %c0_13 = arith.constant 0 : index
    %31 = vector.load %arg1[%c6, %c0_13] : memref<9x256xf32, #tpu.memory_space<vmem>>, vector<1x256xf32>
    %32 = vector.broadcast %31 : vector<1x256xf32> to vector<32x256xf32>
    %33 = arith.mulf %30, %32 : vector<32x256xf32>
    %c240_i32 = arith.constant 240 : i32
    %34 = tpu.dynamic_rotate %6 by %c240_i32 dim 1 : vector<32x256xf32>, i32 -> vector<32x256xf32>
    %c7 = arith.constant 7 : index
    %c0_14 = arith.constant 0 : index
    %35 = vector.load %arg1[%c7, %c0_14] : memref<9x256xf32, #tpu.memory_space<vmem>>, vector<1x256xf32>
    %36 = vector.broadcast %35 : vector<1x256xf32> to vector<32x256xf32>
    %37 = arith.mulf %34, %36 : vector<32x256xf32>
    %c239_i32 = arith.constant 239 : i32
    %38 = tpu.dynamic_rotate %6 by %c239_i32 dim 1 : vector<32x256xf32>, i32 -> vector<32x256xf32>
    %c8 = arith.constant 8 : index
    %c0_15 = arith.constant 0 : index
    %39 = vector.load %arg1[%c8, %c0_15] : memref<9x256xf32, #tpu.memory_space<vmem>>, vector<1x256xf32>
    %40 = vector.broadcast %39 : vector<1x256xf32> to vector<32x256xf32>
    %41 = arith.mulf %38, %40 : vector<32x256xf32>
    %42 = tpu.concatenate %10, %14, %18, %22, %25, %29, %33, %37, %41 in 0 : vector<32x256xf32>, vector<32x256xf32>, vector<32x256xf32>, vector<32x256xf32>, vector<32x256xf32>, vector<32x256xf32>, vector<32x256xf32>, vector<32x256xf32>, vector<32x256xf32> -> vector<288x256xf32>
    %43 = arith.truncf %42 : vector<288x256xf32> to vector<288x256xbf16>
    %c0_16 = arith.constant 0 : index
    %c0_17 = arith.constant 0 : index
    %44 = vector.load %arg5[%c0_16, %c0_17] : memref<32x288xbf16, #tpu.memory_space<vmem>>, vector<32x288xbf16>
    %cst_18 = arith.constant dense<0.000000e+00> : vector<32x256xf32>
    %45 = tpu.matmul %44, %43, %cst_18 {dimension_numbers = #tpu.dot_dimension_numbers<[1], [0], [0], [1], [0, 0, 1, 1], [], []>} : vector<32x288xbf16>, vector<288x256xbf16>, vector<32x256xf32> -> vector<32x256xf32>
    %c0_19 = arith.constant 0 : index
    %c0_20 = arith.constant 0 : index
    %46 = vector.load %arg6[%c0_19, %c0_20] : memref<32x1xf32, #tpu.memory_space<vmem>>, vector<32x1xf32>
    %47 = vector.broadcast %46 : vector<32x1xf32> to vector<32x256xf32>
    %48 = arith.addf %45, %47 : vector<32x256xf32>
    %49 = vector.extract_strided_slice %48 {offsets = [0, 0], sizes = [16, 256], strides = [1, 1]} : vector<32x256xf32> to vector<16x256xf32>
    %50 = vector.extract_strided_slice %48 {offsets = [16, 0], sizes = [16, 256], strides = [1, 1]} : vector<32x256xf32> to vector<16x256xf32>
    %51 = arith.mulf %49, %50 : vector<16x256xf32>
    %52 = arith.truncf %51 : vector<16x256xf32> to vector<16x256xbf16>
    %c0_21 = arith.constant 0 : index
    %c0_22 = arith.constant 0 : index
    %53 = vector.load %arg7[%c0_21, %c0_22] : memref<32x16xbf16, #tpu.memory_space<vmem>>, vector<32x16xbf16>
    %cst_23 = arith.constant dense<0.000000e+00> : vector<32x256xf32>
    %54 = tpu.matmul %53, %52, %cst_23 {dimension_numbers = #tpu.dot_dimension_numbers<[1], [0], [0], [1], [0, 0, 1, 1], [], []>} : vector<32x16xbf16>, vector<16x256xbf16>, vector<32x256xf32> -> vector<32x256xf32>
    %c0_24 = arith.constant 0 : index
    %c0_25 = arith.constant 0 : index
    %55 = vector.load %arg8[%c0_24, %c0_25] : memref<32x1xf32, #tpu.memory_space<vmem>>, vector<32x1xf32>
    %56 = vector.broadcast %55 : vector<32x1xf32> to vector<32x256xf32>
    %57 = arith.addf %54, %56 : vector<32x256xf32>
    %58 = arith.addf %6, %57 : vector<32x256xf32>
    %c17_i32_26 = arith.constant 17 : i32
    %59 = tpu.dynamic_rotate %58 by %c17_i32_26 dim 1 : vector<32x256xf32>, i32 -> vector<32x256xf32>
    %c0_27 = arith.constant 0 : index
    %c0_28 = arith.constant 0 : index
    %60 = vector.load %arg1[%c0_27, %c0_28] : memref<9x256xf32, #tpu.memory_space<vmem>>, vector<1x256xf32>
    %61 = vector.broadcast %60 : vector<1x256xf32> to vector<32x256xf32>
    %62 = arith.mulf %59, %61 : vector<32x256xf32>
    %c16_i32_29 = arith.constant 16 : i32
    %63 = tpu.dynamic_rotate %58 by %c16_i32_29 dim 1 : vector<32x256xf32>, i32 -> vector<32x256xf32>
    %c1_30 = arith.constant 1 : index
    %c0_31 = arith.constant 0 : index
    %64 = vector.load %arg1[%c1_30, %c0_31] : memref<9x256xf32, #tpu.memory_space<vmem>>, vector<1x256xf32>
    %65 = vector.broadcast %64 : vector<1x256xf32> to vector<32x256xf32>
    %66 = arith.mulf %63, %65 : vector<32x256xf32>
    %c15_i32_32 = arith.constant 15 : i32
    %67 = tpu.dynamic_rotate %58 by %c15_i32_32 dim 1 : vector<32x256xf32>, i32 -> vector<32x256xf32>
    %c2_33 = arith.constant 2 : index
    %c0_34 = arith.constant 0 : index
    %68 = vector.load %arg1[%c2_33, %c0_34] : memref<9x256xf32, #tpu.memory_space<vmem>>, vector<1x256xf32>
    %69 = vector.broadcast %68 : vector<1x256xf32> to vector<32x256xf32>
    %70 = arith.mulf %67, %69 : vector<32x256xf32>
    %c1_i32_35 = arith.constant 1 : i32
    %71 = tpu.dynamic_rotate %58 by %c1_i32_35 dim 1 : vector<32x256xf32>, i32 -> vector<32x256xf32>
    %c3_36 = arith.constant 3 : index
    %c0_37 = arith.constant 0 : index
    %72 = vector.load %arg1[%c3_36, %c0_37] : memref<9x256xf32, #tpu.memory_space<vmem>>, vector<1x256xf32>
    %73 = vector.broadcast %72 : vector<1x256xf32> to vector<32x256xf32>
    %74 = arith.mulf %71, %73 : vector<32x256xf32>
    %c4_38 = arith.constant 4 : index
    %c0_39 = arith.constant 0 : index
    %75 = vector.load %arg1[%c4_38, %c0_39] : memref<9x256xf32, #tpu.memory_space<vmem>>, vector<1x256xf32>
    %76 = vector.broadcast %75 : vector<1x256xf32> to vector<32x256xf32>
    %77 = arith.mulf %58, %76 : vector<32x256xf32>
    %c255_i32_40 = arith.constant 255 : i32
    %78 = tpu.dynamic_rotate %58 by %c255_i32_40 dim 1 : vector<32x256xf32>, i32 -> vector<32x256xf32>
    %c5_41 = arith.constant 5 : index
    %c0_42 = arith.constant 0 : index
    %79 = vector.load %arg1[%c5_41, %c0_42] : memref<9x256xf32, #tpu.memory_space<vmem>>, vector<1x256xf32>
    %80 = vector.broadcast %79 : vector<1x256xf32> to vector<32x256xf32>
    %81 = arith.mulf %78, %80 : vector<32x256xf32>
    %c241_i32_43 = arith.constant 241 : i32
    %82 = tpu.dynamic_rotate %58 by %c241_i32_43 dim 1 : vector<32x256xf32>, i32 -> vector<32x256xf32>
    %c6_44 = arith.constant 6 : index
    %c0_45 = arith.constant 0 : index
    %83 = vector.load %arg1[%c6_44, %c0_45] : memref<9x256xf32, #tpu.memory_space<vmem>>, vector<1x256xf32>
    %84 = vector.broadcast %83 : vector<1x256xf32> to vector<32x256xf32>
    %85 = arith.mulf %82, %84 : vector<32x256xf32>
    %c240_i32_46 = arith.constant 240 : i32
    %86 = tpu.dynamic_rotate %58 by %c240_i32_46 dim 1 : vector<32x256xf32>, i32 -> vector<32x256xf32>
    %c7_47 = arith.constant 7 : index
    %c0_48 = arith.constant 0 : index
    %87 = vector.load %arg1[%c7_47, %c0_48] : memref<9x256xf32, #tpu.memory_space<vmem>>, vector<1x256xf32>
    %88 = vector.broadcast %87 : vector<1x256xf32> to vector<32x256xf32>
    %89 = arith.mulf %86, %88 : vector<32x256xf32>
    %c239_i32_49 = arith.constant 239 : i32
    %90 = tpu.dynamic_rotate %58 by %c239_i32_49 dim 1 : vector<32x256xf32>, i32 -> vector<32x256xf32>
    %c8_50 = arith.constant 8 : index
    %c0_51 = arith.constant 0 : index
    %91 = vector.load %arg1[%c8_50, %c0_51] : memref<9x256xf32, #tpu.memory_space<vmem>>, vector<1x256xf32>
    %92 = vector.broadcast %91 : vector<1x256xf32> to vector<32x256xf32>
    %93 = arith.mulf %90, %92 : vector<32x256xf32>
    %94 = tpu.concatenate %62, %66, %70, %74, %77, %81, %85, %89, %93 in 0 : vector<32x256xf32>, vector<32x256xf32>, vector<32x256xf32>, vector<32x256xf32>, vector<32x256xf32>, vector<32x256xf32>, vector<32x256xf32>, vector<32x256xf32>, vector<32x256xf32> -> vector<288x256xf32>
    %95 = arith.truncf %94 : vector<288x256xf32> to vector<288x256xbf16>
    %c0_52 = arith.constant 0 : index
    %c0_53 = arith.constant 0 : index
    %96 = vector.load %arg9[%c0_52, %c0_53] : memref<1x288xbf16, #tpu.memory_space<vmem>>, vector<1x288xbf16>
    %cst_54 = arith.constant dense<0.000000e+00> : vector<1x256xf32>
    %97 = tpu.matmul %96, %95, %cst_54 {dimension_numbers = #tpu.dot_dimension_numbers<[1], [0], [0], [1], [0, 0, 1, 1], [], []>} : vector<1x288xbf16>, vector<288x256xbf16>, vector<1x256xf32> -> vector<1x256xf32>
    %c0_55 = arith.constant 0 : index
    %c0_56 = arith.constant 0 : index
    %98 = vector.load %arg10[%c0_55, %c0_56] : memref<1x1xf32, #tpu.memory_space<vmem>>, vector<1x1xf32>
    %99 = vector.broadcast %98 : vector<1x1xf32> to vector<1x256xf32>
    %100 = arith.addf %97, %99 : vector<1x256xf32>
    %c0_57 = arith.constant 0 : index
    %c0_58 = arith.constant 0 : index
    %c0_59 = arith.constant 0 : index
    %101 = vector.load %arg11[%c0_57, %c0_58, %c0_59] : memref<1x1x256xf32, #tpu.memory_space<vmem>>, vector<1x1x256xf32>
    %102 = vector.shape_cast %101 : vector<1x1x256xf32> to vector<1x256xf32>
    %103 = vector.shape_cast %100 : vector<1x256xf32> to vector<1x1x256xf32>
    tpu.vector_store %arg11[%c0_57, %c0_58, %c0_59], %103 {strides = array<i32>} : memref<1x1x256xf32, #tpu.memory_space<vmem>>, vector<1x1x256xf32>,
    return
  }
  func.func @transform_0(%arg0: i32) -> (i32, i32) {
    %c0_i32 = arith.constant 0 : i32
    %c0_i32_0 = arith.constant 0 : i32
    %c0_i32_1 = arith.constant 0 : i32
    return %c0_i32, %c0_i32_0 : i32, i32
  }
  func.func @transform_1(%arg0: i32) -> (i32, i32, i32) {
    %c0_i32 = arith.constant 0 : i32
    %c0_i32_0 = arith.constant 0 : i32
    %c0_i32_1 = arith.constant 0 : i32
    return %arg0, %c0_i32, %c0_i32_0 : i32, i32, i32
  }
  func.func @transform_2(%arg0: i32) -> (i32, i32) {
    %c0_i32 = arith.constant 0 : i32
    %c0_i32_0 = arith.constant 0 : i32
    %c0_i32_1 = arith.constant 0 : i32
    return %c0_i32, %c0_i32_0 : i32, i32
  }
  func.func @transform_3(%arg0: i32) -> (i32, i32) {
    %c0_i32 = arith.constant 0 : i32
    %c0_i32_0 = arith.constant 0 : i32
    %c0_i32_1 = arith.constant 0 : i32
    return %c0_i32, %c0_i32_0 : i32, i32
  }
  func.func @transform_4(%arg0: i32) -> (i32, i32) {
    %c0_i32 = arith.constant 0 : i32
    %c0_i32_0 = arith.constant 0 : i32
    %c0_i32_1 = arith.constant 0 : i32
    return %c0_i32, %c0_i32_0 : i32, i32
  }
  func.func @transform_5(%arg0: i32) -> (i32, i32) {
    %c0_i32 = arith.constant 0 : i32
    %c0_i32_0 = arith.constant 0 : i32
    %c0_i32_1 = arith.constant 0 : i32
    return %c0_i32, %c0_i32_0 : i32, i32
  }
  func.func @transform_6(%arg0: i32) -> (i32, i32) {
    %c0_i32 = arith.constant 0 : i32
    %c0_i32_0 = arith.constant 0 : i32
    %c0_i32_1 = arith.constant 0 : i32
    return %c0_i32, %c0_i32_0 : i32, i32
  }
  func.func @transform_7(%arg0: i32) -> (i32, i32) {
    %c0_i32 = arith.constant 0 : i32
    %c0_i32_0 = arith.constant 0 : i32
    %c0_i32_1 = arith.constant 0 : i32
    return %c0_i32, %c0_i32_0 : i32, i32
  }
  func.func @transform_8(%arg0: i32) -> (i32, i32) {
    %c0_i32 = arith.constant 0 : i32
    %c0_i32_0 = arith.constant 0 : i32
    %c0_i32_1 = arith.constant 0 : i32
    return %c0_i32, %c0_i32_0 : i32, i32
  }
  func.func @transform_9(%arg0: i32) -> (i32, i32) {
    %c0_i32 = arith.constant 0 : i32
    %c0_i32_0 = arith.constant 0 : i32
    %c0_i32_1 = arith.constant 0 : i32
    return %c0_i32, %c0_i32_0 : i32, i32
  }
  func.func @transform_10(%arg0: i32) -> (i32, i32, i32) {
    %c0_i32 = arith.constant 0 : i32
    %c0_i32_0 = arith.constant 0 : i32
    %c0_i32_1 = arith.constant 0 : i32
    return %arg0, %c0_i32, %c0_i32_0 : i32, i32, i32
  }
}

</mosaic_0001>

<llo_original>
// kernel: zernike_vae_forward.4
$region0: #{zernike_vae_forward.4}
  #allocation0 [shape = 'u32[]', space=smem, size = 0x4, offset = 0x4, fixed_abs, tag = 'smem constant byte address 0x4 - core index']
  #allocation1 [shape = 'u32[144,128]{1,0:T(1,128)}', space=vmem, size = 0x12000, scoped, tag = 'internal scratch']
  %s0 = inlined_call_operand.vmem [shape: f32[9,256], index: 0, kind: input, shape index: {}]
  %s1 = inlined_call_operand.vmem [shape: bf16[2,81,256], index: 1, kind: input, shape index: {}]
  %s2 = inlined_call_operand.vmem [shape: f32[2,1,256], index: 2, kind: input, shape index: {}]
  %s3 = inlined_call_operand.vmem [shape: bf16[32,81], index: 3, kind: input, shape index: {}]
  %s4 = inlined_call_operand.vmem [shape: f32[32,1], index: 4, kind: input, shape index: {}]
  %s5 = inlined_call_operand.vmem [shape: bf16[32,288], index: 5, kind: input, shape index: {}]
  %s6 = inlined_call_operand.vmem [shape: f32[32,1], index: 6, kind: input, shape index: {}]
  %s7 = inlined_call_operand.vmem [shape: bf16[32,16], index: 7, kind: input, shape index: {}]
  %s8 = inlined_call_operand.vmem [shape: f32[32,1], index: 8, kind: input, shape index: {}]
  %s9 = inlined_call_operand.vmem [shape: bf16[2,288], index: 9, kind: input, shape index: {}]
  %s10 = inlined_call_operand.vmem [shape: f32[2,1], index: 10, kind: input, shape index: {}]
  %s11 = inlined_call_operand.vmem [shape: f32[2,1,256], index: 11, kind: output, shape index: {0}]
  %s12 = inlined_call_operand.vmem [shape: f32[2,1,256], index: 12, kind: output, shape index: {1}]
  %s13 = inlined_call_operand.vmem [shape: f32[2,1,256], index: 13, kind: output, shape index: {2}]
  %14 = xla_tuple %s11, %s12, %s13
  %s15 = sld [smem:[#allocation0]]
  $region93: #{zernike_vae_forward.4} parent=0
    _
  %s17 = ssub.s32 1, %s15
  %s18 = scalar_select 0, %s17, %s15
  loop: start=0, step=1, limit=4
  $region2: #{zernike_vae_forward.4} parent=0 // loop_pre_header
    _
  $region3: #{zernike_vae_forward.4} parent=0 // loop_header
    %s20 = sphi 0, %s24
    %p21 = scmp.ge.s32.totalorder %s20, 4
    %s28 = sphi 0, %s28
    %s30 = sphi 0, %s28
    %s31 = sphi 0, %s30
    %s45 = sphi 0, %s31
    %s51 = sphi 0, %s53
    %s54 = sphi 0, %s51
    %s55 = sphi 0, %s54
    %s71 = sphi 0, %s55
    %s77 = sphi 0, %s79
    %s80 = sphi 0, %s77
    %s81 = sphi 0, %s80
    %s97 = sphi 0, %s81
    %s101 = sphi 0, %s101
    %s103 = sphi 0, %s101
    %s104 = sphi 0, %s103
    %s118 = sphi 0, %s104
    %s122 = sphi 0, %s122
    %s124 = sphi 0, %s122
    %s125 = sphi 0, %s124
    %s139 = sphi 0, %s125
    %s143 = sphi 0, %s143
    %s145 = sphi 0, %s143
    %s146 = sphi 0, %s145
    %s160 = sphi 0, %s146
    %s164 = sphi 0, %s164
    %s166 = sphi 0, %s164
    %s167 = sphi 0, %s166
    %s181 = sphi 0, %s167
    %s185 = sphi 0, %s185
    %s187 = sphi 0, %s185
    %s188 = sphi 0, %s187
    %s202 = sphi 0, %s188
    %s206 = sphi 0, %s206
    %s208 = sphi 0, %s206
    %s209 = sphi 0, %s208
    %s223 = sphi 0, %s209
    %s227 = sphi 0, %s227
    %s229 = sphi 0, %s227
    %s230 = sphi 0, %s229
    %s244 = sphi 0, %s230
    %s248 = sphi 0, %s248
    %s250 = sphi 0, %s248
    %s251 = sphi 0, %s250
    %s265 = sphi 0, %s251
    %s271 = sphi 0, %s273
    %s274 = sphi 0, %s271
    %s275 = sphi 0, %s274
    %s291 = sphi 0, %s275
    %s297 = sphi 0, %s299
    %s300 = sphi 0, %s297
    %s301 = sphi 0, %s300
    %s317 = sphi 0, %s301
    %s323 = sphi 0, %s325
    %s326 = sphi 0, %s323
    %s327 = sphi 0, %s326
    %s343 = sphi 0, %s327
  $region4: #{zernike_vae_forward.4} parent=0 // loop_header_branch
    %23 = sbr.rel (%p21) target = $region8
  $region5: #{zernike_vae_forward.4} parent=0 // loop_body
    %s25 = ssub.s32 %s20, 1
    %s26 = ssub.s32 %s20, 2
    %s27 = sadd.s32 %s20, 1
    %s29 = sadd.s32 %s28, 1
    %p32 = scmp.eq.s32.totalorder %s20, 1
    %p33 = scmp.ne.s32.totalorder %s28, %s30
    %p34 = scmp.eq.s32.totalorder %s20, 0
    %p35 = por %p33, %p34
    %p36 = scmp.ne.s32.totalorder %s28, %s30
    %p37 = scmp.eq.s32.totalorder %s25, 1
    %p38 = por %p36, %p37
    %p39 = scmp.ne.s32.totalorder %s30, %s31
    %p40 = scmp.eq.s32.totalorder %s25, 0
    %p41 = por %p39, %p40
    %p42 = scmp.ne.s32.totalorder %s30, %s31
    %p43 = scmp.eq.s32.totalorder %s26, 1
    %p44 = por %p42, %p43
    %p46 = scmp.ne.s32.totalorder %s31, %s45
    %p47 = scmp.eq.s32.totalorder %s26, 0
    %p48 = por %p46, %p47
    %s49 = ssub.s32 %s20, %s27
    %p50 = scmp.eq.s32.totalorder %s49, 0
    %s52 = sadd.s32 %s51, 1
    %s53 = scalar_select %p50, %s51, %s52
    %p56 = pneg %p50
    %p57 = scmp.eq.s32.totalorder %s20, 1
    %p58 = por %p56, %p57
    %p59 = scmp.ne.s32.totalorder %s51, %s54
    %p60 = scmp.eq.s32.totalorder %s20, 0
    %p61 = por %p59, %p60
    %p62 = scmp.ne.s32.totalorder %s51, %s54
    %p63 = scmp.eq.s32.totalorder %s25, 1
    %p64 = por %p62, %p63
    %p65 = scmp.ne.s32.totalorder %s54, %s55
    %p66 = scmp.eq.s32.totalorder %s25, 0
    %p67 = por %p65, %p66
    %p68 = scmp.ne.s32.totalorder %s54, %s55
    %p69 = scmp.eq.s32.totalorder %s26, 1
    %p70 = por %p68, %p69
    %p72 = scmp.ne.s32.totalorder %s55, %s71
    %p73 = scmp.eq.s32.totalorder %s26, 0
    %p74 = por %p72, %p73
    %s75 = ssub.s32 %s20, %s27
    %p76 = scmp.eq.s32.totalorder %s75, 0
    %s78 = sadd.s32 %s77, 1
    %s79 = scalar_select %p76, %s77, %s78
    %p82 = pneg %p76
    %p83 = scmp.eq.s32.totalorder %s20, 1
    %p84 = por %p82, %p83
    %p85 = scmp.ne.s32.totalorder %s77, %s80
    %p86 = scmp.eq.s32.totalorder %s20, 0
    %p87 = por %p85, %p86
    %p88 = scmp.ne.s32.totalorder %s77, %s80
    %p89 = scmp.eq.s32.totalorder %s25, 1
    %p90 = por %p88, %p89
    %p91 = scmp.ne.s32.totalorder %s80, %s81
    %p92 = scmp.eq.s32.totalorder %s25, 0
    %p93 = por %p91, %p92
    %p94 = scmp.ne.s32.totalorder %s80, %s81
    %p95 = scmp.eq.s32.totalorder %s26, 1
    %p96 = por %p94, %p95
    %p98 = scmp.ne.s32.totalorder %s81, %s97
    %p99 = scmp.eq.s32.totalorder %s26, 0
    %p100 = por %p98, %p99
    %s102 = sadd.s32 %s101, 1
    %p105 = scmp.eq.s32.totalorder %s20, 1
    %p106 = scmp.ne.s32.totalorder %s101, %s103
    %p107 = scmp.eq.s32.totalorder %s20, 0
    %p108 = por %p106, %p107
    %p109 = scmp.ne.s32.totalorder %s101, %s103
    %p110 = scmp.eq.s32.totalorder %s25, 1
    %p111 = por %p109, %p110
    %p112 = scmp.ne.s32.totalorder %s103, %s104
    %p113 = scmp.eq.s32.totalorder %s25, 0
    %p114 = por %p112, %p113
    %p115 = scmp.ne.s32.totalorder %s103, %s104
    %p116 = scmp.eq.s32.totalorder %s26, 1
    %p117 = por %p115, %p116
    %p119 = scmp.ne.s32.totalorder %s104, %s118
    %p120 = scmp.eq.s32.totalorder %s26, 0
    %p121 = por %p119, %p120
    %s123 = sadd.s32 %s122, 1
    %p126 = scmp.eq.s32.totalorder %s20, 1
    %p127 = scmp.ne.s32.totalorder %s122, %s124
    %p128 = scmp.eq.s32.totalorder %s20, 0
    %p129 = por %p127, %p128
    %p130 = scmp.ne.s32.totalorder %s122, %s124
    %p131 = scmp.eq.s32.totalorder %s25, 1
    %p132 = por %p130, %p131
    %p133 = scmp.ne.s32.totalorder %s124, %s125
    %p134 = scmp.eq.s32.totalorder %s25, 0
    %p135 = por %p133, %p134
    %p136 = scmp.ne.s32.totalorder %s124, %s125
    %p137 = scmp.eq.s32.totalorder %s26, 1
    %p138 = por %p136, %p137
    %p140 = scmp.ne.s32.totalorder %s125, %s139
    %p141 = scmp.eq.s32.totalorder %s26, 0
    %p142 = por %p140, %p141
    %s144 = sadd.s32 %s143, 1
    %p147 = scmp.eq.s32.totalorder %s20, 1
    %p148 = scmp.ne.s32.totalorder %s143, %s145
    %p149 = scmp.eq.s32.totalorder %s20, 0
    %p150 = por %p148, %p149
    %p151 = scmp.ne.s32.totalorder %s143, %s145
    %p152 = scmp.eq.s32.totalorder %s25, 1
    %p153 = por %p151, %p152
    %p154 = scmp.ne.s32.totalorder %s145, %s146
    %p155 = scmp.eq.s32.totalorder %s25, 0
    %p156 = por %p154, %p155
    %p157 = scmp.ne.s32.totalorder %s145, %s146
    %p158 = scmp.eq.s32.totalorder %s26, 1
    %p159 = por %p157, %p158
    %p161 = scmp.ne.s32.totalorder %s146, %s160
    %p162 = scmp.eq.s32.totalorder %s26, 0
    %p163 = por %p161, %p162
    %s165 = sadd.s32 %s164, 1
    %p168 = scmp.eq.s32.totalorder %s20, 1
    %p169 = scmp.ne.s32.totalorder %s164, %s166
    %p170 = scmp.eq.s32.totalorder %s20, 0
    %p171 = por %p169, %p170
    %p172 = scmp.ne.s32.totalorder %s164, %s166
    %p173 = scmp.eq.s32.totalorder %s25, 1
    %p174 = por %p172, %p173
    %p175 = scmp.ne.s32.totalorder %s166, %s167
    %p176 = scmp.eq.s32.totalorder %s25, 0
    %p177 = por %p175, %p176
    %p178 = scmp.ne.s32.totalorder %s166, %s167
    %p179 = scmp.eq.s32.totalorder %s26, 1
    %p180 = por %p178, %p179
    %p182 = scmp.ne.s32.totalorder %s167, %s181
    %p183 = scmp.eq.s32.totalorder %s26, 0
    %p184 = por %p182, %p183
    %s186 = sadd.s32 %s185, 1
    %p189 = scmp.eq.s32.totalorder %s20, 1
    %p190 = scmp.ne.s32.totalorder %s185, %s187
    %p191 = scmp.eq.s32.totalorder %s20, 0
    %p192 = por %p190, %p191
    %p193 = scmp.ne.s32.totalorder %s185, %s187
    %p194 = scmp.eq.s32.totalorder %s25, 1
    %p195 = por %p193, %p194
    %p196 = scmp.ne.s32.totalorder %s187, %s188
    %p197 = scmp.eq.s32.totalorder %s25, 0
    %p198 = por %p196, %p197
    %p199 = scmp.ne.s32.totalorder %s187, %s188
    %p200 = scmp.eq.s32.totalorder %s26, 1
    %p201 = por %p199, %p200
    %p203 = scmp.ne.s32.totalorder %s188, %s202
    %p204 = scmp.eq.s32.totalorder %s26, 0
    %p205 = por %p203, %p204
    %s207 = sadd.s32 %s206, 1
    %p210 = scmp.eq.s32.totalorder %s20, 1
    %p211 = scmp.ne.s32.totalorder %s206, %s208
    %p212 = scmp.eq.s32.totalorder %s20, 0
    %p213 = por %p211, %p212
    %p214 = scmp.ne.s32.totalorder %s206, %s208
    %p215 = scmp.eq.s32.totalorder %s25, 1
    %p216 = por %p214, %p215
    %p217 = scmp.ne.s32.totalorder %s208, %s209
    %p218 = scmp.eq.s32.totalorder %s25, 0
    %p219 = por %p217, %p218
    %p220 = scmp.ne.s32.totalorder %s208, %s209
    %p221 = scmp.eq.s32.totalorder %s26, 1
    %p222 = por %p220, %p221
    %p224 = scmp.ne.s32.totalorder %s209, %s223
    %p225 = scmp.eq.s32.totalorder %s26, 0
    %p226 = por %p224, %p225
    %s228 = sadd.s32 %s227, 1
    %p231 = scmp.eq.s32.totalorder %s20, 1
    %p232 = scmp.ne.s32.totalorder %s227, %s229
    %p233 = scmp.eq.s32.totalorder %s20, 0
    %p234 = por %p232, %p233
    %p235 = scmp.ne.s32.totalorder %s227, %s229
    %p236 = scmp.eq.s32.totalorder %s25, 1
    %p237 = por %p235, %p236
    %p238 = scmp.ne.s32.totalorder %s229, %s230
    %p239 = scmp.eq.s32.totalorder %s25, 0
    %p240 = por %p238, %p239
    %p241 = scmp.ne.s32.totalorder %s229, %s230
    %p242 = scmp.eq.s32.totalorder %s26, 1
    %p243 = por %p241, %p242
    %p245 = scmp.ne.s32.totalorder %s230, %s244
    %p246 = scmp.eq.s32.totalorder %s26, 0
    %p247 = por %p245, %p246
    %s249 = sadd.s32 %s248, 1
    %p252 = scmp.eq.s32.totalorder %s20, 1
    %p253 = scmp.ne.s32.totalorder %s248, %s250
    %p254 = scmp.eq.s32.totalorder %s20, 0
    %p255 = por %p253, %p254
    %p256 = scmp.ne.s32.totalorder %s248, %s250
    %p257 = scmp.eq.s32.totalorder %s25, 1
    %p258 = por %p256, %p257
    %p259 = scmp.ne.s32.totalorder %s250, %s251
    %p260 = scmp.eq.s32.totalorder %s25, 0
    %p261 = por %p259, %p260
    %p262 = scmp.ne.s32.totalorder %s250, %s251
    %p263 = scmp.eq.s32.totalorder %s26, 1
    %p264 = por %p262, %p263
    %p266 = scmp.ne.s32.totalorder %s251, %s265
    %p267 = scmp.eq.s32.totalorder %s26, 0
    %p268 = por %p266, %p267
    %s269 = ssub.s32 %s20, %s27
    %p270 = scmp.eq.s32.totalorder %s269, 0
    %s272 = sadd.s32 %s271, 1
    %s273 = scalar_select %p270, %s271, %s272
    %p276 = pneg %p270
    %p277 = scmp.eq.s32.totalorder %s20, 1
    %p278 = por %p276, %p277
    %p279 = scmp.ne.s32.totalorder %s271, %s274
    %p280 = scmp.eq.s32.totalorder %s20, 0
    %p281 = por %p279, %p280
    %p282 = scmp.ne.s32.totalorder %s271, %s274
    %p283 = scmp.eq.s32.totalorder %s25, 1
    %p284 = por %p282, %p283
    %p285 = scmp.ne.s32.totalorder %s274, %s275
    %p286 = scmp.eq.s32.totalorder %s25, 0
    %p287 = por %p285, %p286
    %p288 = scmp.ne.s32.totalorder %s274, %s275
    %p289 = scmp.eq.s32.totalorder %s26, 1
    %p290 = por %p288, %p289
    %p292 = scmp.ne.s32.totalorder %s275, %s291
    %p293 = scmp.eq.s32.totalorder %s26, 0
    %p294 = por %p292, %p293
    %s295 = ssub.s32 %s20, %s27
    %p296 = scmp.eq.s32.totalorder %s295, 0
    %s298 = sadd.s32 %s297, 1
    %s299 = scalar_select %p296, %s297, %s298
    %p302 = pneg %p296
    %p303 = scmp.eq.s32.totalorder %s20, 1
    %p304 = por %p302, %p303
    %p305 = scmp.ne.s32.totalorder %s297, %s300
    %p306 = scmp.eq.s32.totalorder %s20, 0
    %p307 = por %p305, %p306
    %p308 = scmp.ne.s32.totalorder %s297, %s300
    %p309 = scmp.eq.s32.totalorder %s25, 1
    %p310 = por %p308, %p309
    %p311 = scmp.ne.s32.totalorder %s300, %s301
    %p312 = scmp.eq.s32.totalorder %s25, 0
    %p313 = por %p311, %p312
    %p314 = scmp.ne.s32.totalorder %s300, %s301
    %p315 = scmp.eq.s32.totalorder %s26, 1
    %p316 = por %p314, %p315
    %p318 = scmp.ne.s32.totalorder %s301, %s317
    %p319 = scmp.eq.s32.totalorder %s26, 0
    %p320 = por %p318, %p319
    %s321 = ssub.s32 %s20, %s27
    %p322 = scmp.eq.s32.totalorder %s321, 0
    %s324 = sadd.s32 %s323, 1
    %s325 = scalar_select %p322, %s323, %s324
    %p328 = pneg %p322
    %p329 = scmp.eq.s32.totalorder %s20, 1
    %p330 = por %p328, %p329
    %p331 = scmp.ne.s32.totalorder %s323, %s326
    %p332 = scmp.eq.s32.totalorder %s20, 0
    %p333 = por %p331, %p332
    %p334 = scmp.ne.s32.totalorder %s323, %s326
    %p335 = scmp.eq.s32.totalorder %s25, 1
    %p336 = por %p334, %p335
    %p337 = scmp.ne.s32.totalorder %s326, %s327
    %p338 = scmp.eq.s32.totalorder %s25, 0
    %p339 = por %p337, %p338
    %p340 = scmp.ne.s32.totalorder %s326, %s327
    %p341 = scmp.eq.s32.totalorder %s26, 1
    %p342 = por %p340, %p341
    %p344 = scmp.ne.s32.totalorder %s327, %s343
    %p345 = scmp.eq.s32.totalorder %s26, 0
    %p346 = por %p344, %p345
    %p347 = scmp.le.s32.totalorder 1, %s20
    %p348 = scmp.lt.s32.totalorder %s20, 3
    %p349 = pnand %p347, %p348
    %p350 = pneg %p349
    // Predicated region
    $region9: #{zernike_vae_forward.4} parent=5 // pred_check
      _
    $region10: #{zernike_vae_forward.4} parent=5 // pred_check_branch
      %352 = sbr.rel (%p349) target = $region12
    $region11: #{zernike_vae_forward.4} parent=5 // pred_region
      %s353 = ssub.s32 %s20, 1
      // Predicated region
      $region13: #{zernike_vae_forward.4} parent=11 // pred_check
        %p354 = pneg %p41
      $region14: #{zernike_vae_forward.4} parent=11 // pred_check_branch
        %356 = sbr.rel (%p354) target = $region16
      $region15: #{zernike_vae_forward.4} parent=11 // pred_region
        _
      $region16: #{zernike_vae_forward.4} parent=11 // pred_fallthru
        _
      // Predicated region
      $region17: #{zernike_vae_forward.4} parent=11 // pred_check
        %p357 = pneg %p114
      $region18: #{zernike_vae_forward.4} parent=11 // pred_check_branch
        %359 = sbr.rel (%p357) target = $region20
      $region19: #{zernike_vae_forward.4} parent=11 // pred_region
        _
      $region20: #{zernike_vae_forward.4} parent=11 // pred_fallthru
        _
      // Predicated region
      $region21: #{zernike_vae_forward.4} parent=11 // pred_check
        %p360 = pneg %p135
      $region22: #{zernike_vae_forward.4} parent=11 // pred_check_branch
        %362 = sbr.rel (%p360) target = $region24
      $region23: #{zernike_vae_forward.4} parent=11 // pred_region
        _
      $region24: #{zernike_vae_forward.4} parent=11 // pred_fallthru
        _
      // Predicated region
      $region25: #{zernike_vae_forward.4} parent=11 // pred_check
        %p363 = pneg %p156
      $region26: #{zernike_vae_forward.4} parent=11 // pred_check_branch
        %365 = sbr.rel (%p363) target = $region28
      $region27: #{zernike_vae_forward.4} parent=11 // pred_region
        _
      $region28: #{zernike_vae_forward.4} parent=11 // pred_fallthru
        _
      // Predicated region
      $region29: #{zernike_vae_forward.4} parent=11 // pred_check
        %p366 = pneg %p177
      $region30: #{zernike_vae_forward.4} parent=11 // pred_check_branch
        %368 = sbr.rel (%p366) target = $region32
      $region31: #{zernike_vae_forward.4} parent=11 // pred_region
        _
      $region32: #{zernike_vae_forward.4} parent=11 // pred_fallthru
        _
      // Predicated region
      $region33: #{zernike_vae_forward.4} parent=11 // pred_check
        %p369 = pneg %p198
      $region34: #{zernike_vae_forward.4} parent=11 // pred_check_branch
        %371 = sbr.rel (%p369) target = $region36
      $region35: #{zernike_vae_forward.4} parent=11 // pred_region
        _
      $region36: #{zernike_vae_forward.4} parent=11 // pred_fallthru
        _
      // Predicated region
      $region37: #{zernike_vae_forward.4} parent=11 // pred_check
        %p372 = pneg %p219
      $region38: #{zernike_vae_forward.4} parent=11 // pred_check_branch
        %374 = sbr.rel (%p372) target = $region40
      $region39: #{zernike_vae_forward.4} parent=11 // pred_region
        _
      $region40: #{zernike_vae_forward.4} parent=11 // pred_fallthru
        _
      // Predicated region
      $region41: #{zernike_vae_forward.4} parent=11 // pred_check
        %p375 = pneg %p240
      $region42: #{zernike_vae_forward.4} parent=11 // pred_check_branch
        %377 = sbr.rel (%p375) target = $region44
      $region43: #{zernike_vae_forward.4} parent=11 // pred_region
        _
      $region44: #{zernike_vae_forward.4} parent=11 // pred_fallthru
        _
      // Predicated region
      $region45: #{zernike_vae_forward.4} parent=11 // pred_check
        %p378 = pneg %p261
      $region46: #{zernike_vae_forward.4} parent=11 // pred_check_branch
        %380 = sbr.rel (%p378) target = $region48
      $region47: #{zernike_vae_forward.4} parent=11 // pred_region
        _
      $region48: #{zernike_vae_forward.4} parent=11 // pred_fallthru
        _
    $region12: #{zernike_vae_forward.4} parent=5 // pred_fallthru
      _
    %p381 = scmp.lt.s32.totalorder %s20, 2
    // Predicated region
    $region49: #{zernike_vae_forward.4} parent=5 // pred_check
      %p382 = pneg %p381
    $region50: #{zernike_vae_forward.4} parent=5 // pred_check_branch
      %384 = sbr.rel (%p382) target = $region52
    $region51: #{zernike_vae_forward.4} parent=5 // pred_region
      // Predicated region
      $region53: #{zernike_vae_forward.4} parent=51 // pred_check
        %p385 = pneg %p61
      $region54: #{zernike_vae_forward.4} parent=51 // pred_check_branch
        %387 = sbr.rel (%p385) target = $region56
      $region55: #{zernike_vae_forward.4} parent=51 // pred_region
        %p388 = scmp.lt.s32.totalorder %s20, 1
        %s389 = scalar_select %p388, %s20, 1
        %s390 = smul.addr %s389, 22
        %s391 = smul.addr %s390, 4
        %s392 = scalar_lea.vmem %s1, %s391
      $region56: #{zernike_vae_forward.4} parent=51 // pred_fallthru
        _
      // Predicated region
      $region57: #{zernike_vae_forward.4} parent=51 // pred_check
        %p393 = pneg %p87
      $region58: #{zernike_vae_forward.4} parent=51 // pred_check_branch
        %395 = sbr.rel (%p393) target = $region60
      $region59: #{zernike_vae_forward.4} parent=51 // pred_region
        %p396 = scmp.lt.s32.totalorder %s20, 1
        %s397 = scalar_select %p396, %s20, 1
        %s398 = smul.addr %s397, 2
        %s399 = scalar_lea.vmem %s2, %s398
      $region60: #{zernike_vae_forward.4} parent=51 // pred_fallthru
        _
    $region52: #{zernike_vae_forward.4} parent=5 // pred_fallthru
      _
    %p400 = scmp.le.s32.totalorder 1, %s20
    %p401 = scmp.lt.s32.totalorder %s20, 3
    %p402 = pnand %p400, %p401
    %p403 = pneg %p402
    // Predicated region
    $region61: #{zernike_vae_forward.4} parent=5 // pred_check
      _
    $region62: #{zernike_vae_forward.4} parent=5 // pred_check_branch
      %405 = sbr.rel (%p402) target = $region64
    $region63: #{zernike_vae_forward.4} parent=5 // pred_region
      %s406 = ssub.s32 %s20, 1
      %p407 = pneg %p41
      %p408 = pneg %p38
      %p409 = scmp.lt.s32.totalorder %s25, 1
      %s410 = scalar_select %p409, %s25, 1
      %s411 = smul.addr %s410, 22
      %s412 = smul.addr %s411, 4
      %s413 = scalar_lea.vmem %s1, %s412
      %p414 = pneg %p67
      %p415 = pneg %p64
      %p416 = scmp.lt.s32.totalorder %s25, 1
      %s417 = scalar_select %p416, %s25, 1
      %s418 = smul.addr %s417, 2
      %s419 = scalar_lea.vmem %s2, %s418
      %p420 = pneg %p93
      %p421 = pneg %p90
      %p422 = pneg %p114
      %p423 = pneg %p111
      %p424 = pneg %p135
      %p425 = pneg %p132
      %p426 = pneg %p156
      %p427 = pneg %p153
      %p428 = pneg %p177
      %p429 = pneg %p174
      %p430 = pneg %p198
      %p431 = pneg %p195
      %p432 = pneg %p219
      %p433 = pneg %p216
      %p434 = pneg %p240
      %p435 = pneg %p237
      %p436 = pneg %p261
      %p437 = pneg %p258
      %p438 = pneg %p287
      %p439 = pneg %p284
      %p440 = scmp.lt.s32.totalorder %s25, 1
      %s441 = scalar_select %p440, %s25, 1
      %s442 = smul.addr %s441, 2
      %s443 = scalar_lea.vmem %s11, %s442
      %p444 = pneg %p313
      %p445 = pneg %p310
      %p446 = scmp.lt.s32.totalorder %s25, 1
      %s447 = scalar_select %p446, %s25, 1
      %s448 = smul.addr %s447, 2
      %s449 = scalar_lea.vmem %s12, %s448
      %p450 = pneg %p339
      %p451 = pneg %p336
      %p452 = scmp.lt.s32.totalorder %s25, 1
      %s453 = scalar_select %p452, %s25, 1
      %s454 = smul.addr %s453, 2
      %s455 = scalar_lea.vmem %s13, %s454
      %p456 = scmp.lt.s32.totalorder %s25, 1
      %s457 = scalar_select %p456, %s25, 1
      %s458 = smul.addr %s457, 22
      %s459 = smul.addr %s458, 4
      %s460 = scalar_lea.vmem %s1, %s459
      %p461 = scmp.lt.s32.totalorder %s25, 1
      %s462 = scalar_select %p461, %s25, 1
      %s463 = smul.addr %s462, 2
      %s464 = scalar_lea.vmem %s2, %s463
      %p465 = scmp.lt.s32.totalorder %s25, 1
      %s466 = scalar_select %p465, %s25, 1
      %s467 = smul.addr %s466, 2
      %s468 = scalar_lea.vmem %s11, %s467
      %p469 = scmp.lt.s32.totalorder %s25, 1
      %s470 = scalar_select %p469, %s25, 1
      %s471 = smul.addr %s470, 2
      %s472 = scalar_lea.vmem %s12, %s471
      %p473 = scmp.lt.s32.totalorder %s25, 1
      %s474 = scalar_select %p473, %s25, 1
      %s475 = smul.addr %s474, 2
      %s476 = scalar_lea.vmem %s13, %s475
      %v478 = vld [vmem:[%s460] sm:$0xff]
      %v479 = vld [vmem:[%s460 + $0x8] sm:$0xff]
      %v480 = vld [vmem:[%s460 + $0x10] sm:$0xff]
      %v481 = vld [vmem:[%s460 + $0x18] sm:$0xff]
      %v482 = vld [vmem:[%s460 + $0x20] sm:$0xff]
      %v483 = vld [vmem:[%s460 + $0x28] sm:$0xff]
      %v484 = vld [vmem:[%s460 + $0x30] sm:$0xff]
      %v485 = vld [vmem:[%s460 + $0x38] sm:$0xff]
      %v486 = vld [vmem:[%s460 + $0x40] sm:$0xff]
      %v487 = vld [vmem:[%s460 + $0x48] sm:$0xff]
      %v488 = vld [vmem:[%s460 + $0x50] sm:$0x11]
      %v489 = vld [vmem:[%s3] sm:$0xf]
      %v490 = vld [vmem:[%s3 + $0x4] sm:$0xf]
      %v491 = vld [vmem:[%s3 + $0x8] sm:$0xf]
      %v492 = vld [vmem:[%s3 + $0xc] sm:$0xf]
      %v493 = vld [vmem:[%s4] sm:$0xff]
      %v494 = vld [vmem:[%s4 + $0x8] sm:$0xff]
      %v495 = vld [vmem:[%s4 + $0x10] sm:$0xff]
      %v496 = vld [vmem:[%s4 + $0x18] sm:$0xff]
      %498 = vset.pattern.permute.xlu0 0
      %499 = vperm.xlu0 %498, %v493
      %v500 = vpop.permute.xlu0 %499
      %503 = vset.pattern.permute.xlu0 0
      %504 = vperm.xlu0 %503, %v494
      %v505 = vpop.permute.xlu0 %504
      %508 = vset.pattern.permute.xlu0 0
      %509 = vperm.xlu0 %508, %v495
      %v510 = vpop.permute.xlu0 %509
      %513 = vset.pattern.permute.xlu0 0
      %514 = vperm.xlu0 %513, %v496
      %v515 = vpop.permute.xlu0 %514
      %v521 = vunpack.c.l.b16 %v489
      %v522 = vunpack.c.l.b16 %v490
      %v523 = vunpack.c.l.b16 %v491
      %v524 = vunpack.c.l.b16 %v492
      %v525 = vpack.c.b16 %v522, %v521
      %v526 = vpack.c.b16 %v524, %v523
      %v538 = vunpack.c.l.b16 %v478
      %v539 = vunpack.c.h.b16 %v478
      %v540 = vunpack.c.l.b16 %v479
      %v541 = vunpack.c.h.b16 %v479
      %v542 = vunpack.c.l.b16 %v480
      %v543 = vunpack.c.h.b16 %v480
      %v544 = vunpack.c.l.b16 %v481
      %v545 = vunpack.c.h.b16 %v481
      %v546 = vunpack.c.l.b16 %v482
      %v547 = vunpack.c.h.b16 %v482
      %v548 = vunpack.c.l.b16 %v483
      %v549 = vunpack.c.h.b16 %v483
      %v550 = vunpack.c.l.b16 %v484
      %v551 = vunpack.c.h.b16 %v484
      %v552 = vunpack.c.l.b16 %v485
      %v553 = vunpack.c.h.b16 %v485
      %v554 = vunpack.c.l.b16 %v486
      %v555 = vunpack.c.h.b16 %v486
      %v556 = vunpack.c.l.b16 %v487
      %v557 = vunpack.c.h.b16 %v487
      %v558 = vunpack.c.l.b16 %v488
      %v559 = vunpack.c.h.b16 %v488
      %v560 = vpack.c.b16 %v540, %v538
      %v561 = vpack.c.b16 %v541, %v539
      %v562 = vpack.c.b16 %v544, %v542
      %v563 = vpack.c.b16 %v545, %v543
      %v564 = vpack.c.b16 %v548, %v546
      %v565 = vpack.c.b16 %v549, %v547
      %v566 = vpack.c.b16 %v552, %v550
      %v567 = vpack.c.b16 %v553, %v551
      %v568 = vpack.c.b16 %v556, %v554
      %v569 = vpack.c.b16 %v557, %v555
      %v570 = vpack.c.b16 %v558, %v558
      %v571 = vpack.c.b16 %v559, %v559
      %vm582 = vcmask 662528
      %v584 = vsel %vm582, %v525, 0
      %v587 = vsel %vm582, %v526, 0
      %vm589 = vcmask 1040384
      %v590 = vsel 0, 4294967295, 65535
      %v591 = vsel %vm589, %v590, 0
      %v593 = vand.u32 %v570, %v591
      %v596 = vand.u32 %v571, %v591
      %598 = vmatprep.subr.bf16.mxu0 %v561
      %599 = vmatpush1.bf16.msra.mxu0 %v560
      %600 = vmatprep.subr.bf16.mxu0 %v563
      %601 = vmatpush1.bf16.msra.mxu0 %v562
      %602 = vmatprep.subr.bf16.mxu0 %v565
      %603 = vmatpush1.bf16.msra.mxu0 %v564
      %604 = vmatprep.subr.bf16.mxu0 %v567
      %605 = vmatpush1.bf16.msra.mxu0 %v566
      %606 = vmatprep.subr.bf16.mxu0 %v569
      %607 = vmatpush1.bf16.msra.mxu0 %v568
      %608 = vmatprep.subr.bf16.mxu0 %v596
      %609 = vmatpush1.bf16.msra.mxu0 %v593
      %610 = vmatprep.subr.bf16.mxu0 0
      %611 = vmatpush1.bf16.msra.mxu0 0
      %612 = vmatprep.subr.bf16.mxu0 0
      %613 = vmatpush1.bf16.msra.mxu0 0
      %614 = vmatprep.subr.bf16.mxu0 0
      %615 = vmatpush1.bf16.msra.mxu0 0
      %616 = vmatprep.subr.bf16.mxu0 0
      %617 = vmatpush1.bf16.msra.mxu0 0
      %618 = vmatprep.subr.bf16.mxu0 0
      %619 = vmatpush1.bf16.msra.mxu0 0
      %620 = vmatprep.subr.bf16.mxu0 0
      %621 = vmatpush1.bf16.msra.mxu0 0
      %622 = vmatprep.subr.bf16.mxu0 0
      %623 = vmatpush1.bf16.msra.mxu0 0
      %624 = vmatprep.subr.bf16.mxu0 0
      %625 = vmatpush1.bf16.msra.mxu0 0
      %626 = vmatprep.subr.bf16.mxu0 0
      %627 = vmatpush1.bf16.msra.mxu0 0
      %628 = vmatprep.subr.bf16.mxu0 0
      %629 = vmatpush1.bf16.msra.mxu0 0
      %630 = vmatprep.mubr.bf16.mxu0 0
      %631 = vmatmul.mubr.bf16.gmra.mrb[0].mxu0 %v584
      %v632 = vpop.f32.mrb[0].mxu0
      %v633 = vadd.f32 %v500, %v632
      %v634 = vpop.f32.mrb[0].mxu0
      %v635 = vadd.f32 %v500, %v634
      %v636 = vpop.f32.mrb[0].mxu0
      %v637 = vadd.f32 %v505, %v636
      %v638 = vpop.f32.mrb[0].mxu0
      %v639 = vadd.f32 %v505, %v638
      %640 = vmatprep.mubr.bf16.mxu0 0
      %641 = vmatmul.mubr.bf16.gmra.mrb[0].mxu0 %v587
      %v642 = vpop.f32.mrb[0].mxu0
      %v643 = vadd.f32 %v510, %v642
      %v644 = vpop.f32.mrb[0].mxu0
      %v645 = vadd.f32 %v510, %v644
      %v646 = vpop.f32.mrb[0].mxu0
      %v647 = vadd.f32 %v515, %v646
      %v648 = vpop.f32.mrb[0].mxu0
      %v649 = vadd.f32 %v515, %v648
      %650 = vdwg.mxu0
      %651 = vrot.lane.b32.xlu0 %v633, 17
      %v652 = vpop.permute.xlu0 %651
      %653 = vrot.lane.b32.xlu0 %v637, 17
      %v654 = vpop.permute.xlu0 %653
      %655 = vrot.lane.b32.xlu0 %v643, 17
      %v656 = vpop.permute.xlu0 %655
      %657 = vrot.lane.b32.xlu0 %v647, 17
      %v658 = vpop.permute.xlu0 %657
      %659 = vrot.lane.b32.xlu0 %v635, 17
      %v660 = vpop.permute.xlu0 %659
      %661 = vrot.lane.b32.xlu0 %v639, 17
      %v662 = vpop.permute.xlu0 %661
      %663 = vrot.lane.b32.xlu0 %v645, 17
      %v664 = vpop.permute.xlu0 %663
      %665 = vrot.lane.b32.xlu0 %v649, 17
      %v666 = vpop.permute.xlu0 %665
      %v667 = vlaneseq
      %v668 = vand.u32 %v667, 127
      %vm669 = vcmp.lt.s32.totalorder %v668, 17
      %v670 = vsel %vm669, %v652, %v660
      %v671 = vsel %vm669, %v654, %v662
      %v672 = vsel %vm669, %v656, %v664
      %v673 = vsel %vm669, %v658, %v666
      %v674 = vsel %vm669, %v660, %v652
      %v675 = vsel %vm669, %v662, %v654
      %v676 = vsel %vm669, %v664, %v656
      %v677 = vsel %vm669, %v666, %v658
      %v678 = vld [vmem:[%s0] ss:$8 sm:$0x3]
      %v680 = vlaneseq
      %v681 = vshrl.u32 %v680, 7
      %v682 = vsub.s32 0, %v681
      %v683 = vrot.slane %v678, %v682
      %v684 = vlaneseq
      %v685 = vshrl.u32 %v684, 7
      %v686 = vsub.s32 1, %v685
      %v687 = vrot.slane %v678, %v686
      %v690 = vmul.f32 %v674, %v683
      %v691 = vmul.f32 %v670, %v687
      %v692 = vmul.f32 %v675, %v683
      %v693 = vmul.f32 %v671, %v687
      %v694 = vmul.f32 %v676, %v683
      %v695 = vmul.f32 %v672, %v687
      %v696 = vmul.f32 %v677, %v683
      %v697 = vmul.f32 %v673, %v687
      %698 = vrot.lane.b32.xlu0 %v633, 16
      %v699 = vpop.permute.xlu0 %698
      %700 = vrot.lane.b32.xlu0 %v637, 16
      %v701 = vpop.permute.xlu0 %700
      %702 = vrot.lane.b32.xlu0 %v643, 16
      %v703 = vpop.permute.xlu0 %702
      %704 = vrot.lane.b32.xlu0 %v647, 16
      %v705 = vpop.permute.xlu0 %704
      %706 = vrot.lane.b32.xlu0 %v635, 16
      %v707 = vpop.permute.xlu0 %706
      %708 = vrot.lane.b32.xlu0 %v639, 16
      %v709 = vpop.permute.xlu0 %708
      %710 = vrot.lane.b32.xlu0 %v645, 16
      %v711 = vpop.permute.xlu0 %710
      %712 = vrot.lane.b32.xlu0 %v649, 16
      %v713 = vpop.permute.xlu0 %712
      %vm714 = vcmp.lt.s32.totalorder %v668, 16
      %v715 = vsel %vm714, %v699, %v707
      %v716 = vsel %vm714, %v701, %v709
      %v717 = vsel %vm714, %v703, %v711
      %v718 = vsel %vm714, %v705, %v713
      %v719 = vsel %vm714, %v707, %v699
      %v720 = vsel %vm714, %v709, %v701
      %v721 = vsel %vm714, %v711, %v703
      %v722 = vsel %vm714, %v713, %v705
      %s723 = scalar_lea.vmem %s0, 1
      %v724 = vld [vmem:[%s723] ss:$8 sm:$0x3]
      %v726 = vlaneseq
      %v727 = vshrl.u32 %v726, 7
      %v728 = vsub.s32 0, %v727
      %v729 = vrot.slane %v724, %v728
      %v730 = vlaneseq
      %v731 = vshrl.u32 %v730, 7
      %v732 = vsub.s32 1, %v731
      %v733 = vrot.slane %v724, %v732
      %v736 = vmul.f32 %v719, %v729
      %v737 = vmul.f32 %v715, %v733
      %v738 = vmul.f32 %v720, %v729
      %v739 = vmul.f32 %v716, %v733
      %v740 = vmul.f32 %v721, %v729
      %v741 = vmul.f32 %v717, %v733
      %v742 = vmul.f32 %v722, %v729
      %v743 = vmul.f32 %v718, %v733
      %744 = vrot.lane.b32.xlu0 %v633, 15
      %v745 = vpop.permute.xlu0 %744
      %746 = vrot.lane.b32.xlu0 %v637, 15
      %v747 = vpop.permute.xlu0 %746
      %748 = vrot.lane.b32.xlu0 %v643, 15
      %v749 = vpop.permute.xlu0 %748
      %750 = vrot.lane.b32.xlu0 %v647, 15
      %v751 = vpop.permute.xlu0 %750
      %752 = vrot.lane.b32.xlu0 %v635, 15
      %v753 = vpop.permute.xlu0 %752
      %754 = vrot.lane.b32.xlu0 %v639, 15
      %v755 = vpop.permute.xlu0 %754
      %756 = vrot.lane.b32.xlu0 %v645, 15
      %v757 = vpop.permute.xlu0 %756
      %758 = vrot.lane.b32.xlu0 %v649, 15
      %v759 = vpop.permute.xlu0 %758
      %vm760 = vcmp.lt.s32.totalorder %v668, 15
      %v761 = vsel %vm760, %v745, %v753
      %v762 = vsel %vm760, %v747, %v755
      %v763 = vsel %vm760, %v749, %v757
      %v764 = vsel %vm760, %v751, %v759
      %v765 = vsel %vm760, %v753, %v745
      %v766 = vsel %vm760, %v755, %v747
      %v767 = vsel %vm760, %v757, %v749
      %v768 = vsel %vm760, %v759, %v751
      %s769 = scalar_lea.vmem %s0, 2
      %v770 = vld [vmem:[%s769] ss:$8 sm:$0x3]
      %v772 = vlaneseq
      %v773 = vshrl.u32 %v772, 7
      %v774 = vsub.s32 0, %v773
      %v775 = vrot.slane %v770, %v774
      %v776 = vlaneseq
      %v777 = vshrl.u32 %v776, 7
      %v778 = vsub.s32 1, %v777
      %v779 = vrot.slane %v770, %v778
      %v782 = vmul.f32 %v765, %v775
      %v783 = vmul.f32 %v761, %v779
      %v784 = vmul.f32 %v766, %v775
      %v785 = vmul.f32 %v762, %v779
      %v786 = vmul.f32 %v767, %v775
      %v787 = vmul.f32 %v763, %v779
      %v788 = vmul.f32 %v768, %v775
      %v789 = vmul.f32 %v764, %v779
      %790 = vrot.lane.b32.xlu0 %v633, 1
      %v791 = vpop.permute.xlu0 %790
      %792 = vrot.lane.b32.xlu0 %v637, 1
      %v793 = vpop.permute.xlu0 %792
      %794 = vrot.lane.b32.xlu0 %v643, 1
      %v795 = vpop.permute.xlu0 %794
      %796 = vrot.lane.b32.xlu0 %v647, 1
      %v797 = vpop.permute.xlu0 %796
      %798 = vrot.lane.b32.xlu0 %v635, 1
      %v799 = vpop.permute.xlu0 %798
      %800 = vrot.lane.b32.xlu0 %v639, 1
      %v801 = vpop.permute.xlu0 %800
      %802 = vrot.lane.b32.xlu0 %v645, 1
      %v803 = vpop.permute.xlu0 %802
      %804 = vrot.lane.b32.xlu0 %v649, 1
      %v805 = vpop.permute.xlu0 %804
      %vm806 = vcmp.lt.s32.totalorder %v668, 1
      %v807 = vsel %vm806, %v791, %v799
      %v808 = vsel %vm806, %v793, %v801
      %v809 = vsel %vm806, %v795, %v803
      %v810 = vsel %vm806, %v797, %v805
      %v811 = vsel %vm806, %v799, %v791
      %v812 = vsel %vm806, %v801, %v793
      %v813 = vsel %vm806, %v803, %v795
      %v814 = vsel %vm806, %v805, %v797
      %s815 = scalar_lea.vmem %s0, 3
      %v816 = vld [vmem:[%s815] ss:$8 sm:$0x3]
      %v818 = vlaneseq
      %v819 = vshrl.u32 %v818, 7
      %v820 = vsub.s32 0, %v819
      %v821 = vrot.slane %v816, %v820
      %v822 = vlaneseq
      %v823 = vshrl.u32 %v822, 7
      %v824 = vsub.s32 1, %v823
      %v825 = vrot.slane %v816, %v824
      %v828 = vmul.f32 %v811, %v821
      %v829 = vmul.f32 %v807, %v825
      %v830 = vmul.f32 %v812, %v821
      %v831 = vmul.f32 %v808, %v825
      %v832 = vmul.f32 %v813, %v821
      %v833 = vmul.f32 %v809, %v825
      %v834 = vmul.f32 %v814, %v821
      %v835 = vmul.f32 %v810, %v825
      %s836 = scalar_lea.vmem %s0, 4
      %v837 = vld [vmem:[%s836] ss:$8 sm:$0x3]
      %v839 = vlaneseq
      %v840 = vshrl.u32 %v839, 7
      %v841 = vsub.s32 0, %v840
      %v842 = vrot.slane %v837, %v841
      %v843 = vlaneseq
      %v844 = vshrl.u32 %v843, 7
      %v845 = vsub.s32 1, %v844
      %v846 = vrot.slane %v837, %v845
      %v849 = vmul.f32 %v633, %v842
      %v850 = vmul.f32 %v635, %v846
      %v851 = vmul.f32 %v637, %v842
      %v852 = vmul.f32 %v639, %v846
      %v853 = vmul.f32 %v643, %v842
      %v854 = vmul.f32 %v645, %v846
      %v855 = vmul.f32 %v647, %v842
      %v856 = vmul.f32 %v649, %v846
      %857 = vrot.lane.b32.xlu0 %v633, 127
      %v858 = vpop.permute.xlu0 %857
      %859 = vrot.lane.b32.xlu0 %v637, 127
      %v860 = vpop.permute.xlu0 %859
      %861 = vrot.lane.b32.xlu0 %v643, 127
      %v862 = vpop.permute.xlu0 %861
      %863 = vrot.lane.b32.xlu0 %v647, 127
      %v864 = vpop.permute.xlu0 %863
      %865 = vrot.lane.b32.xlu0 %v635, 127
      %v866 = vpop.permute.xlu0 %865
      %867 = vrot.lane.b32.xlu0 %v639, 127
      %v868 = vpop.permute.xlu0 %867
      %869 = vrot.lane.b32.xlu0 %v645, 127
      %v870 = vpop.permute.xlu0 %869
      %871 = vrot.lane.b32.xlu0 %v649, 127
      %v872 = vpop.permute.xlu0 %871
      %vm873 = vcmp.lt.s32.totalorder %v668, 127
      %v874 = vsel %vm873, %v858, %v866
      %v875 = vsel %vm873, %v860, %v868
      %v876 = vsel %vm873, %v862, %v870
      %v877 = vsel %vm873, %v864, %v872
      %v878 = vsel %vm873, %v866, %v858
      %v879 = vsel %vm873, %v868, %v860
      %v880 = vsel %vm873, %v870, %v862
      %v881 = vsel %vm873, %v872, %v864
      %s882 = scalar_lea.vmem %s0, 5
      %v883 = vld [vmem:[%s882] ss:$8 sm:$0x3]
      %v885 = vlaneseq
      %v886 = vshrl.u32 %v885, 7
      %v887 = vsub.s32 0, %v886
      %v888 = vrot.slane %v883, %v887
      %v889 = vlaneseq
      %v890 = vshrl.u32 %v889, 7
      %v891 = vsub.s32 1, %v890
      %v892 = vrot.slane %v883, %v891
      %v895 = vmul.f32 %v874, %v888
      %v896 = vmul.f32 %v878, %v892
      %v897 = vmul.f32 %v875, %v888
      %v898 = vmul.f32 %v879, %v892
      %v899 = vmul.f32 %v876, %v888
      %v900 = vmul.f32 %v880, %v892
      %v901 = vmul.f32 %v877, %v888
      %v902 = vmul.f32 %v881, %v892
      %903 = vrot.lane.b32.xlu0 %v633, 113
      %v904 = vpop.permute.xlu0 %903
      %905 = vrot.lane.b32.xlu0 %v637, 113
      %v906 = vpop.permute.xlu0 %905
      %907 = vrot.lane.b32.xlu0 %v643, 113
      %v908 = vpop.permute.xlu0 %907
      %909 = vrot.lane.b32.xlu0 %v647, 113
      %v910 = vpop.permute.xlu0 %909
      %911 = vrot.lane.b32.xlu0 %v635, 113
      %v912 = vpop.permute.xlu0 %911
      %913 = vrot.lane.b32.xlu0 %v639, 113
      %v914 = vpop.permute.xlu0 %913
      %915 = vrot.lane.b32.xlu0 %v645, 113
      %v916 = vpop.permute.xlu0 %915
      %917 = vrot.lane.b32.xlu0 %v649, 113
      %v918 = vpop.permute.xlu0 %917
      %vm919 = vcmp.lt.s32.totalorder %v668, 113
      %v920 = vsel %vm919, %v904, %v912
      %v921 = vsel %vm919, %v906, %v914
      %v922 = vsel %vm919, %v908, %v916
      %v923 = vsel %vm919, %v910, %v918
      %v924 = vsel %vm919, %v912, %v904
      %v925 = vsel %vm919, %v914, %v906
      %v926 = vsel %vm919, %v916, %v908
      %v927 = vsel %vm919, %v918, %v910
      %s928 = scalar_lea.vmem %s0, 6
      %v929 = vld [vmem:[%s928] ss:$8 sm:$0x3]
      %v931 = vlaneseq
      %v932 = vshrl.u32 %v931, 7
      %v933 = vsub.s32 0, %v932
      %v934 = vrot.slane %v929, %v933
      %v935 = vlaneseq
      %v936 = vshrl.u32 %v935, 7
      %v937 = vsub.s32 1, %v936
      %v938 = vrot.slane %v929, %v937
      %v941 = vmul.f32 %v920, %v934
      %v942 = vmul.f32 %v924, %v938
      %v943 = vmul.f32 %v921, %v934
      %v944 = vmul.f32 %v925, %v938
      %v945 = vmul.f32 %v922, %v934
      %v946 = vmul.f32 %v926, %v938
      %v947 = vmul.f32 %v923, %v934
      %v948 = vmul.f32 %v927, %v938
      %949 = vrot.lane.b32.xlu0 %v633, 112
      %v950 = vpop.permute.xlu0 %949
      %951 = vrot.lane.b32.xlu0 %v637, 112
      %v952 = vpop.permute.xlu0 %951
      %953 = vrot.lane.b32.xlu0 %v643, 112
      %v954 = vpop.permute.xlu0 %953
      %955 = vrot.lane.b32.xlu0 %v647, 112
      %v956 = vpop.permute.xlu0 %955
      %957 = vrot.lane.b32.xlu0 %v635, 112
      %v958 = vpop.permute.xlu0 %957
      %959 = vrot.lane.b32.xlu0 %v639, 112
      %v960 = vpop.permute.xlu0 %959
      %961 = vrot.lane.b32.xlu0 %v645, 112
      %v962 = vpop.permute.xlu0 %961
      %963 = vrot.lane.b32.xlu0 %v649, 112
      %v964 = vpop.permute.xlu0 %963
      %vm965 = vcmp.lt.s32.totalorder %v668, 112
      %v966 = vsel %vm965, %v950, %v958
      %v967 = vsel %vm965, %v952, %v960
      %v968 = vsel %vm965, %v954, %v962
      %v969 = vsel %vm965, %v956, %v964
      %v970 = vsel %vm965, %v958, %v950
      %v971 = vsel %vm965, %v960, %v952
      %v972 = vsel %vm965, %v962, %v954
      %v973 = vsel %vm965, %v964, %v956
      %s974 = scalar_lea.vmem %s0, 7
      %v975 = vld [vmem:[%s974] ss:$8 sm:$0x3]
      %v977 = vlaneseq
      %v978 = vshrl.u32 %v977, 7
      %v979 = vsub.s32 0, %v978
      %v980 = vrot.slane %v975, %v979
      %v981 = vlaneseq
      %v982 = vshrl.u32 %v981, 7
      %v983 = vsub.s32 1, %v982
      %v984 = vrot.slane %v975, %v983
      %v987 = vmul.f32 %v966, %v980
      %v988 = vmul.f32 %v970, %v984
      %v989 = vmul.f32 %v967, %v980
      %v990 = vmul.f32 %v971, %v984
      %v991 = vmul.f32 %v968, %v980
      %v992 = vmul.f32 %v972, %v984
      %v993 = vmul.f32 %v969, %v980
      %v994 = vmul.f32 %v973, %v984
      %995 = vrot.lane.b32.xlu0 %v633, 111
      %v996 = vpop.permute.xlu0 %995
      %997 = vrot.lane.b32.xlu0 %v637, 111
      %v998 = vpop.permute.xlu0 %997
      %999 = vrot.lane.b32.xlu0 %v643, 111
      %v1000 = vpop.permute.xlu0 %999
      %1001 = vrot.lane.b32.xlu0 %v647, 111
      %v1002 = vpop.permute.xlu0 %1001
      %1003 = vrot.lane.b32.xlu0 %v635, 111
      %v1004 = vpop.permute.xlu0 %1003
      %1005 = vrot.lane.b32.xlu0 %v639, 111
      %v1006 = vpop.permute.xlu0 %1005
      %1007 = vrot.lane.b32.xlu0 %v645, 111
      %v1008 = vpop.permute.xlu0 %1007
      %1009 = vrot.lane.b32.xlu0 %v649, 111
      %v1010 = vpop.permute.xlu0 %1009
      %vm1011 = vcmp.lt.s32.totalorder %v668, 111
      %v1012 = vsel %vm1011, %v996, %v1004
      %v1013 = vsel %vm1011, %v998, %v1006
      %v1014 = vsel %vm1011, %v1000, %v1008
      %v1015 = vsel %vm1011, %v1002, %v1010
      %v1016 = vsel %vm1011, %v1004, %v996
      %v1017 = vsel %vm1011, %v1006, %v998
      %v1018 = vsel %vm1011, %v1008, %v1000
      %v1019 = vsel %vm1011, %v1010, %v1002
      %s1020 = scalar_lea.vmem %s0, 16
      %v1021 = vld [vmem:[%s1020] ss:$8 sm:$0x3]
      %v1023 = vlaneseq
      %v1024 = vshrl.u32 %v1023, 7
      %v1025 = vsub.s32 0, %v1024
      %v1026 = vrot.slane %v1021, %v1025
      %v1027 = vlaneseq
      %v1028 = vshrl.u32 %v1027, 7
      %v1029 = vsub.s32 1, %v1028
      %v1030 = vrot.slane %v1021, %v1029
      %v1033 = vmul.f32 %v1012, %v1026
      %v1034 = vmul.f32 %v1016, %v1030
      %v1035 = vmul.f32 %v1013, %v1026
      %v1036 = vmul.f32 %v1017, %v1030
      %v1037 = vmul.f32 %v1014, %v1026
      %v1038 = vmul.f32 %v1018, %v1030
      %v1039 = vmul.f32 %v1015, %v1026
      %v1040 = vmul.f32 %v1019, %v1030
      %v1041 = vpack.c.bf16 %v692, %v690
      %v1042 = vpack.c.bf16 %v693, %v691
      %v1043 = vpack.c.bf16 %v696, %v694
      %v1044 = vpack.c.bf16 %v697, %v695
      %v1045 = vpack.c.bf16 %v738, %v736
      %v1046 = vpack.c.bf16 %v739, %v737
      %v1047 = vpack.c.bf16 %v742, %v740
      %v1048 = vpack.c.bf16 %v743, %v741
      %v1049 = vpack.c.bf16 %v784, %v782
      %v1050 = vpack.c.bf16 %v785, %v783
      %v1051 = vpack.c.bf16 %v788, %v786
      %v1052 = vpack.c.bf16 %v789, %v787
      %v1053 = vpack.c.bf16 %v830, %v828
      %v1054 = vpack.c.bf16 %v831, %v829
      %v1055 = vpack.c.bf16 %v834, %v832
      %v1056 = vpack.c.bf16 %v835, %v833
      %v1057 = vpack.c.bf16 %v851, %v849
      %v1058 = vpack.c.bf16 %v852, %v850
      %v1059 = vpack.c.bf16 %v855, %v853
      %v1060 = vpack.c.bf16 %v856, %v854
      %v1061 = vpack.c.bf16 %v897, %v895
      %v1062 = vpack.c.bf16 %v898, %v896
      %v1063 = vpack.c.bf16 %v901, %v899
      %v1064 = vpack.c.bf16 %v902, %v900
      %v1065 = vpack.c.bf16 %v943, %v941
      %v1066 = vpack.c.bf16 %v944, %v942
      %v1067 = vpack.c.bf16 %v947, %v945
      %v1068 = vpack.c.bf16 %v948, %v946
      %v1069 = vpack.c.bf16 %v989, %v987
      %v1070 = vpack.c.bf16 %v990, %v988
      %v1071 = vpack.c.bf16 %v993, %v991
      %v1072 = vpack.c.bf16 %v994, %v992
      %v1073 = vpack.c.bf16 %v1035, %v1033
      %v1074 = vpack.c.bf16 %v1036, %v1034
      %v1075 = vpack.c.bf16 %v1039, %v1037
      %v1076 = vpack.c.bf16 %v1040, %v1038
      %v1077 = vld [vmem:[%s5] sm:$0xff]
      %v1078 = vld [vmem:[%s5 + $0x8] sm:$0xf]
      %v1079 = vld [vmem:[%s5 + $0xc] sm:$0xff]
      %v1080 = vld [vmem:[%s5 + $0x14] sm:$0xf]
      %v1081 = vld [vmem:[%s5 + $0x18] sm:$0xff]
      %v1082 = vld [vmem:[%s5 + $0x20] sm:$0xf]
      %v1083 = vld [vmem:[%s5 + $0x24] sm:$0xff]
      %v1084 = vld [vmem:[%s5 + $0x2c] sm:$0xf]
      %v1085 = vld [vmem:[%s6] sm:$0xff]
      %v1086 = vld [vmem:[%s6 + $0x8] sm:$0xff]
      %v1087 = vld [vmem:[%s6 + $0x10] sm:$0xff]
      %v1088 = vld [vmem:[%s6 + $0x18] sm:$0xff]
      %1090 = vset.pattern.permute.xlu0 0
      %1091 = vperm.xlu0 %1090, %v1085
      %v1092 = vpop.permute.xlu0 %1091
      %1095 = vset.pattern.permute.xlu0 0
      %1096 = vperm.xlu0 %1095, %v1086
      %v1097 = vpop.permute.xlu0 %1096
      %1100 = vset.pattern.permute.xlu0 0
      %1101 = vperm.xlu0 %1100, %v1087
      %v1102 = vpop.permute.xlu0 %1101
      %1105 = vset.pattern.permute.xlu0 0
      %1106 = vperm.xlu0 %1105, %v1088
      %v1107 = vpop.permute.xlu0 %1106
      %v1117 = vunpack.c.l.b16 %v1077
      %v1118 = vunpack.c.h.b16 %v1077
      %v1119 = vunpack.c.l.b16 %v1078
      %v1120 = vunpack.c.l.b16 %v1079
      %v1121 = vunpack.c.h.b16 %v1079
      %v1122 = vunpack.c.l.b16 %v1080
      %v1123 = vunpack.c.l.b16 %v1081
      %v1124 = vunpack.c.h.b16 %v1081
      %v1125 = vunpack.c.l.b16 %v1082
      %v1126 = vunpack.c.l.b16 %v1083
      %v1127 = vunpack.c.h.b16 %v1083
      %v1128 = vunpack.c.l.b16 %v1084
      %v1129 = vpack.c.b16 %v1120, %v1117
      %v1130 = vpack.c.b16 %v1121, %v1118
      %v1131 = vpack.c.b16 %v1122, %v1119
      %v1132 = vpack.c.b16 %v1126, %v1123
      %v1133 = vpack.c.b16 %v1127, %v1124
      %v1134 = vpack.c.b16 %v1128, %v1125
      %vm1139 = vcmask 261120
      %v1141 = vsel %vm1139, %v1131, 0
      %v1144 = vsel %vm1139, %v1134, 0
      %1146 = vmatprep.subr.bf16.mxu0 %v1042
      %1147 = vmatpush1.bf16.msra.mxu0 %v1041
      %1148 = vmatprep.subr.bf16.mxu0 %v1044
      %1149 = vmatpush1.bf16.msra.mxu0 %v1043
      %1150 = vmatprep.subr.bf16.mxu0 %v1046
      %1151 = vmatpush1.bf16.msra.mxu0 %v1045
      %1152 = vmatprep.subr.bf16.mxu0 %v1048
      %1153 = vmatpush1.bf16.msra.mxu0 %v1047
      %1154 = vmatprep.subr.bf16.mxu0 %v1050
      %1155 = vmatpush1.bf16.msra.mxu0 %v1049
      %1156 = vmatprep.subr.bf16.mxu0 %v1052
      %1157 = vmatpush1.bf16.msra.mxu0 %v1051
      %1158 = vmatprep.subr.bf16.mxu0 %v1054
      %1159 = vmatpush1.bf16.msra.mxu0 %v1053
      %1160 = vmatprep.subr.bf16.mxu0 %v1056
      %1161 = vmatpush1.bf16.msra.mxu0 %v1055
      %1162 = vmatprep.subr.bf16.mxu0 %v1058
      %1163 = vmatpush1.bf16.msra.mxu0 %v1057
      %1164 = vmatprep.subr.bf16.mxu0 %v1060
      %1165 = vmatpush1.bf16.msra.mxu0 %v1059
      %1166 = vmatprep.subr.bf16.mxu0 %v1062
      %1167 = vmatpush1.bf16.msra.mxu0 %v1061
      %1168 = vmatprep.subr.bf16.mxu0 %v1064
      %1169 = vmatpush1.bf16.msra.mxu0 %v1063
      %1170 = vmatprep.subr.bf16.mxu0 %v1066
      %1171 = vmatpush1.bf16.msra.mxu0 %v1065
      %1172 = vmatprep.subr.bf16.mxu0 %v1068
      %1173 = vmatpush1.bf16.msra.mxu0 %v1067
      %1174 = vmatprep.subr.bf16.mxu0 %v1070
      %1175 = vmatpush1.bf16.msra.mxu0 %v1069
      %1176 = vmatprep.subr.bf16.mxu0 %v1072
      %1177 = vmatpush1.bf16.msra.mxu0 %v1071
      %1178 = vmatprep.mubr.bf16.mxu0 %v1130
      %1179 = vmatmul.mubr.bf16.gmra.mrb[0].mxu0 %v1129
      %v1180 = vpop.f32.mrb[0].mxu0
      %v1181 = vadd.f32 %v1092, %v1180
      %v1182 = vpop.f32.mrb[0].mxu0
      %v1183 = vadd.f32 %v1092, %v1182
      %v1184 = vpop.f32.mrb[0].mxu0
      %v1185 = vadd.f32 %v1097, %v1184
      %v1186 = vpop.f32.mrb[0].mxu0
      %v1187 = vadd.f32 %v1097, %v1186
      %1188 = vmatprep.mubr.bf16.mxu0 %v1133
      %1189 = vmatmul.mubr.bf16.gmra.mrb[0].mxu0 %v1132
      %v1190 = vpop.f32.mrb[0].mxu0
      %v1191 = vadd.f32 %v1102, %v1190
      %v1192 = vpop.f32.mrb[0].mxu0
      %v1193 = vadd.f32 %v1102, %v1192
      %v1194 = vpop.f32.mrb[0].mxu0
      %v1195 = vadd.f32 %v1107, %v1194
      %v1196 = vpop.f32.mrb[0].mxu0
      %v1197 = vadd.f32 %v1107, %v1196
      %1198 = vdwg.mxu0
      %1199 = vmatprep.subr.bf16.mxu0 %v1074
      %1200 = vmatpush1.bf16.msra.mxu0 %v1073
      %1201 = vmatprep.subr.bf16.mxu0 %v1076
      %1202 = vmatpush1.bf16.msra.mxu0 %v1075
      %1203 = vmatprep.subr.bf16.mxu0 0
      %1204 = vmatpush1.bf16.msra.mxu0 0
      %1205 = vmatprep.subr.bf16.mxu0 0
      %1206 = vmatpush1.bf16.msra.mxu0 0
      %1207 = vmatprep.subr.bf16.mxu0 0
      %1208 = vmatpush1.bf16.msra.mxu0 0
      %1209 = vmatprep.subr.bf16.mxu0 0
      %1210 = vmatpush1.bf16.msra.mxu0 0
      %1211 = vmatprep.subr.bf16.mxu0 0
      %1212 = vmatpush1.bf16.msra.mxu0 0
      %1213 = vmatprep.subr.bf16.mxu0 0
      %1214 = vmatpush1.bf16.msra.mxu0 0
      %1215 = vmatprep.subr.bf16.mxu0 0
      %1216 = vmatpush1.bf16.msra.mxu0 0
      %1217 = vmatprep.subr.bf16.mxu0 0
      %1218 = vmatpush1.bf16.msra.mxu0 0
      %1219 = vmatprep.subr.bf16.mxu0 0
      %1220 = vmatpush1.bf16.msra.mxu0 0
      %1221 = vmatprep.subr.bf16.mxu0 0
      %1222 = vmatpush1.bf16.msra.mxu0 0
      %1223 = vmatprep.subr.bf16.mxu0 0
      %1224 = vmatpush1.bf16.msra.mxu0 0
      %1225 = vmatprep.subr.bf16.mxu0 0
      %1226 = vmatpush1.bf16.msra.mxu0 0
      %1227 = vmatprep.subr.bf16.mxu0 0
      %1228 = vmatpush1.bf16.msra.mxu0 0
      %1229 = vmatprep.subr.bf16.mxu0 0
      %1230 = vmatpush1.bf16.msra.mxu0 0
      %1231 = vmatprep.mubr.bf16.mxu0 0
      %1232 = vmatmul.mubr.bf16.gmra.mrb[0].mxu0 %v1141
      %v1233 = vpop.f32.mrb[0].mxu0
      %v1234 = vadd.f32 %v1181, %v1233
      %v1235 = vpop.f32.mrb[0].mxu0
      %v1236 = vadd.f32 %v1183, %v1235
      %v1237 = vpop.f32.mrb[0].mxu0
      %v1238 = vadd.f32 %v1185, %v1237
      %v1239 = vpop.f32.mrb[0].mxu0
      %v1240 = vadd.f32 %v1187, %v1239
      %1241 = vmatprep.mubr.bf16.mxu0 0
      %1242 = vmatmul.mubr.bf16.gmra.mrb[0].mxu0 %v1144
      %v1243 = vpop.f32.mrb[0].mxu0
      %v1244 = vadd.f32 %v1191, %v1243
      %v1245 = vpop.f32.mrb[0].mxu0
      %v1246 = vadd.f32 %v1193, %v1245
      %v1247 = vpop.f32.mrb[0].mxu0
      %v1248 = vadd.f32 %v1195, %v1247
      %v1249 = vpop.f32.mrb[0].mxu0
      %v1250 = vadd.f32 %v1197, %v1249
      %1251 = vdwg.mxu0
      %v1252 = vmul.f32 %v1234, %v1244
      %v1253 = vmul.f32 %v1236, %v1246
      %v1254 = vmul.f32 %v1238, %v1248
      %v1255 = vmul.f32 %v1240, %v1250
      %v1256 = vpack.c.bf16 %v1254, %v1252
      %v1257 = vpack.c.bf16 %v1255, %v1253
      %v1258 = vld [vmem:[%s7] sm:$0xf]
      %v1259 = vld [vmem:[%s7 + $0x4] sm:$0xf]
      %v1260 = vld [vmem:[%s7 + $0x8] sm:$0xf]
      %v1261 = vld [vmem:[%s7 + $0xc] sm:$0xf]
      %v1262 = vld [vmem:[%s8] sm:$0xff]
      %v1263 = vld [vmem:[%s8 + $0x8] sm:$0xff]
      %v1264 = vld [vmem:[%s8 + $0x10] sm:$0xff]
      %v1265 = vld [vmem:[%s8 + $0x18] sm:$0xff]
      %1267 = vset.pattern.permute.xlu0 0
      %1268 = vperm.xlu0 %1267, %v1262
      %v1269 = vpop.permute.xlu0 %1268
      %1272 = vset.pattern.permute.xlu0 0
      %1273 = vperm.xlu0 %1272, %v1263
      %v1274 = vpop.permute.xlu0 %1273
      %1277 = vset.pattern.permute.xlu0 0
      %1278 = vperm.xlu0 %1277, %v1264
      %v1279 = vpop.permute.xlu0 %1278
      %1282 = vset.pattern.permute.xlu0 0
      %1283 = vperm.xlu0 %1282, %v1265
      %v1284 = vpop.permute.xlu0 %1283
      %v1290 = vunpack.c.l.b16 %v1258
      %v1291 = vunpack.c.l.b16 %v1259
      %v1292 = vunpack.c.l.b16 %v1260
      %v1293 = vunpack.c.l.b16 %v1261
      %v1294 = vpack.c.b16 %v1291, %v1290
      %v1295 = vpack.c.b16 %v1293, %v1292
      %vm1296 = vcmask 130048
      %v1298 = vsel %vm1296, %v1294, 0
      %v1301 = vsel %vm1296, %v1295, 0
      %1303 = vmatprep.subr.bf16.mxu0 %v1257
      %1304 = vmatpush1.bf16.msra.mxu0 %v1256
      %1305 = vmatprep.subr.bf16.mxu0 0
      %1306 = vmatpush1.bf16.msra.mxu0 0
      %1307 = vmatprep.subr.bf16.mxu0 0
      %1308 = vmatpush1.bf16.msra.mxu0 0
      %1309 = vmatprep.subr.bf16.mxu0 0
      %1310 = vmatpush1.bf16.msra.mxu0 0
      %1311 = vmatprep.subr.bf16.mxu0 0
      %1312 = vmatpush1.bf16.msra.mxu0 0
      %1313 = vmatprep.subr.bf16.mxu0 0
      %1314 = vmatpush1.bf16.msra.mxu0 0
      %1315 = vmatprep.subr.bf16.mxu0 0
      %1316 = vmatpush1.bf16.msra.mxu0 0
      %1317 = vmatprep.subr.bf16.mxu0 0
      %1318 = vmatpush1.bf16.msra.mxu0 0
      %1319 = vmatprep.subr.bf16.mxu0 0
      %1320 = vmatpush1.bf16.msra.mxu0 0
      %1321 = vmatprep.subr.bf16.mxu0 0
      %1322 = vmatpush1.bf16.msra.mxu0 0
      %1323 = vmatprep.subr.bf16.mxu0 0
      %1324 = vmatpush1.bf16.msra.mxu0 0
      %1325 = vmatprep.subr.bf16.mxu0 0
      %1326 = vmatpush1.bf16.msra.mxu0 0
      %1327 = vmatprep.subr.bf16.mxu0 0
      %1328 = vmatpush1.bf16.msra.mxu0 0
      %1329 = vmatprep.subr.bf16.mxu0 0
      %1330 = vmatpush1.bf16.msra.mxu0 0
      %1331 = vmatprep.subr.bf16.mxu0 0
      %1332 = vmatpush1.bf16.msra.mxu0 0
      %1333 = vmatprep.subr.bf16.mxu0 0
      %1334 = vmatpush1.bf16.msra.mxu0 0
      %1335 = vmatprep.mubr.bf16.mxu0 0
      %1336 = vmatmul.mubr.bf16.gmra.mrb[0].mxu0 %v1298
      %v1337 = vpop.f32.mrb[0].mxu0
      %v1338 = vadd.f32 %v1269, %v1337
      %v1339 = vpop.f32.mrb[0].mxu0
      %v1340 = vadd.f32 %v1269, %v1339
      %v1341 = vpop.f32.mrb[0].mxu0
      %v1342 = vadd.f32 %v1274, %v1341
      %v1343 = vpop.f32.mrb[0].mxu0
      %v1344 = vadd.f32 %v1274, %v1343
      %1345 = vmatprep.mubr.bf16.mxu0 0
      %1346 = vmatmul.mubr.bf16.gmra.mrb[0].mxu0 %v1301
      %v1347 = vpop.f32.mrb[0].mxu0
      %v1348 = vadd.f32 %v1279, %v1347
      %v1349 = vpop.f32.mrb[0].mxu0
      %v1350 = vadd.f32 %v1279, %v1349
      %v1351 = vpop.f32.mrb[0].mxu0
      %v1352 = vadd.f32 %v1284, %v1351
      %v1353 = vpop.f32.mrb[0].mxu0
      %v1354 = vadd.f32 %v1284, %v1353
      %1355 = vdwg.mxu0
      %v1356 = vadd.f32 %v633, %v1338
      %v1357 = vadd.f32 %v635, %v1340
      %v1358 = vadd.f32 %v637, %v1342
      %v1359 = vadd.f32 %v639, %v1344
      %v1360 = vadd.f32 %v643, %v1348
      %v1361 = vadd.f32 %v645, %v1350
      %v1362 = vadd.f32 %v647, %v1352
      %v1363 = vadd.f32 %v649, %v1354
      %1364 = vrot.lane.b32.xlu0 %v1356, 17
      %v1365 = vpop.permute.xlu0 %1364
      %1366 = vrot.lane.b32.xlu0 %v1358, 17
      %v1367 = vpop.permute.xlu0 %1366
      %1368 = vrot.lane.b32.xlu0 %v1360, 17
      %v1369 = vpop.permute.xlu0 %1368
      %1370 = vrot.lane.b32.xlu0 %v1362, 17
      %v1371 = vpop.permute.xlu0 %1370
      %1372 = vrot.lane.b32.xlu0 %v1357, 17
      %v1373 = vpop.permute.xlu0 %1372
      %1374 = vrot.lane.b32.xlu0 %v1359, 17
      %v1375 = vpop.permute.xlu0 %1374
      %1376 = vrot.lane.b32.xlu0 %v1361, 17
      %v1377 = vpop.permute.xlu0 %1376
      %1378 = vrot.lane.b32.xlu0 %v1363, 17
      %v1379 = vpop.permute.xlu0 %1378
      %v1380 = vsel %vm669, %v1365, %v1373
      %v1381 = vsel %vm669, %v1367, %v1375
      %v1382 = vsel %vm669, %v1369, %v1377
      %v1383 = vsel %vm669, %v1371, %v1379
      %v1384 = vsel %vm669, %v1373, %v1365
      %v1385 = vsel %vm669, %v1375, %v1367
      %v1386 = vsel %vm669, %v1377, %v1369
      %v1387 = vsel %vm669, %v1379, %v1371
      %v1388 = vmul.f32 %v1384, %v683
      %v1389 = vmul.f32 %v1380, %v687
      %v1390 = vmul.f32 %v1385, %v683
      %v1391 = vmul.f32 %v1381, %v687
      %v1392 = vmul.f32 %v1386, %v683
      %v1393 = vmul.f32 %v1382, %v687
      %v1394 = vmul.f32 %v1387, %v683
      %v1395 = vmul.f32 %v1383, %v687
      %1396 = vrot.lane.b32.xlu0 %v1356, 16
      %v1397 = vpop.permute.xlu0 %1396
      %1398 = vrot.lane.b32.xlu0 %v1358, 16
      %v1399 = vpop.permute.xlu0 %1398
      %1400 = vrot.lane.b32.xlu0 %v1360, 16
      %v1401 = vpop.permute.xlu0 %1400
      %1402 = vrot.lane.b32.xlu0 %v1362, 16
      %v1403 = vpop.permute.xlu0 %1402
      %1404 = vrot.lane.b32.xlu0 %v1357, 16
      %v1405 = vpop.permute.xlu0 %1404
      %1406 = vrot.lane.b32.xlu0 %v1359, 16
      %v1407 = vpop.permute.xlu0 %1406
      %1408 = vrot.lane.b32.xlu0 %v1361, 16
      %v1409 = vpop.permute.xlu0 %1408
      %1410 = vrot.lane.b32.xlu0 %v1363, 16
      %v1411 = vpop.permute.xlu0 %1410
      %v1412 = vsel %vm714, %v1397, %v1405
      %v1413 = vsel %vm714, %v1399, %v1407
      %v1414 = vsel %vm714, %v1401, %v1409
      %v1415 = vsel %vm714, %v1403, %v1411
      %v1416 = vsel %vm714, %v1405, %v1397
      %v1417 = vsel %vm714, %v1407, %v1399
      %v1418 = vsel %vm714, %v1409, %v1401
      %v1419 = vsel %vm714, %v1411, %v1403
      %v1420 = vmul.f32 %v1416, %v729
      %v1421 = vmul.f32 %v1412, %v733
      %v1422 = vmul.f32 %v1417, %v729
      %v1423 = vmul.f32 %v1413, %v733
      %v1424 = vmul.f32 %v1418, %v729
      %v1425 = vmul.f32 %v1414, %v733
      %v1426 = vmul.f32 %v1419, %v729
      %v1427 = vmul.f32 %v1415, %v733
      %1428 = vrot.lane.b32.xlu0 %v1356, 15
      %v1429 = vpop.permute.xlu0 %1428
      %1430 = vrot.lane.b32.xlu0 %v1358, 15
      %v1431 = vpop.permute.xlu0 %1430
      %1432 = vrot.lane.b32.xlu0 %v1360, 15
      %v1433 = vpop.permute.xlu0 %1432
      %1434 = vrot.lane.b32.xlu0 %v1362, 15
      %v1435 = vpop.permute.xlu0 %1434
      %1436 = vrot.lane.b32.xlu0 %v1357, 15
      %v1437 = vpop.permute.xlu0 %1436
      %1438 = vrot.lane.b32.xlu0 %v1359, 15
      %v1439 = vpop.permute.xlu0 %1438
      %1440 = vrot.lane.b32.xlu0 %v1361, 15
      %v1441 = vpop.permute.xlu0 %1440
      %1442 = vrot.lane.b32.xlu0 %v1363, 15
      %v1443 = vpop.permute.xlu0 %1442
      %v1444 = vsel %vm760, %v1429, %v1437
      %v1445 = vsel %vm760, %v1431, %v1439
      %v1446 = vsel %vm760, %v1433, %v1441
      %v1447 = vsel %vm760, %v1435, %v1443
      %v1448 = vsel %vm760, %v1437, %v1429
      %v1449 = vsel %vm760, %v1439, %v1431
      %v1450 = vsel %vm760, %v1441, %v1433
      %v1451 = vsel %vm760, %v1443, %v1435
      %v1452 = vmul.f32 %v1448, %v775
      %v1453 = vmul.f32 %v1444, %v779
      %v1454 = vmul.f32 %v1449, %v775
      %v1455 = vmul.f32 %v1445, %v779
      %v1456 = vmul.f32 %v1450, %v775
      %v1457 = vmul.f32 %v1446, %v779
      %v1458 = vmul.f32 %v1451, %v775
      %v1459 = vmul.f32 %v1447, %v779
      %1460 = vrot.lane.b32.xlu0 %v1356, 1
      %v1461 = vpop.permute.xlu0 %1460
      %1462 = vrot.lane.b32.xlu0 %v1358, 1
      %v1463 = vpop.permute.xlu0 %1462
      %1464 = vrot.lane.b32.xlu0 %v1360, 1
      %v1465 = vpop.permute.xlu0 %1464
      %1466 = vrot.lane.b32.xlu0 %v1362, 1
      %v1467 = vpop.permute.xlu0 %1466
      %1468 = vrot.lane.b32.xlu0 %v1357, 1
      %v1469 = vpop.permute.xlu0 %1468
      %1470 = vrot.lane.b32.xlu0 %v1359, 1
      %v1471 = vpop.permute.xlu0 %1470
      %1472 = vrot.lane.b32.xlu0 %v1361, 1
      %v1473 = vpop.permute.xlu0 %1472
      %1474 = vrot.lane.b32.xlu0 %v1363, 1
      %v1475 = vpop.permute.xlu0 %1474
      %v1476 = vsel %vm806, %v1461, %v1469
      %v1477 = vsel %vm806, %v1463, %v1471
      %v1478 = vsel %vm806, %v1465, %v1473
      %v1479 = vsel %vm806, %v1467, %v1475
      %v1480 = vsel %vm806, %v1469, %v1461
      %v1481 = vsel %vm806, %v1471, %v1463
      %v1482 = vsel %vm806, %v1473, %v1465
      %v1483 = vsel %vm806, %v1475, %v1467
      %v1484 = vmul.f32 %v1480, %v821
      %v1485 = vmul.f32 %v1476, %v825
      %v1486 = vmul.f32 %v1481, %v821
      %v1487 = vmul.f32 %v1477, %v825
      %v1488 = vmul.f32 %v1482, %v821
      %v1489 = vmul.f32 %v1478, %v825
      %v1490 = vmul.f32 %v1483, %v821
      %v1491 = vmul.f32 %v1479, %v825
      %v1492 = vmul.f32 %v1356, %v842
      %v1493 = vmul.f32 %v1357, %v846
      %v1494 = vmul.f32 %v1358, %v842
      %v1495 = vmul.f32 %v1359, %v846
      %v1496 = vmul.f32 %v1360, %v842
      %v1497 = vmul.f32 %v1361, %v846
      %v1498 = vmul.f32 %v1362, %v842
      %v1499 = vmul.f32 %v1363, %v846
      %1500 = vrot.lane.b32.xlu0 %v1356, 127
      %v1501 = vpop.permute.xlu0 %1500
      %1502 = vrot.lane.b32.xlu0 %v1358, 127
      %v1503 = vpop.permute.xlu0 %1502
      %1504 = vrot.lane.b32.xlu0 %v1360, 127
      %v1505 = vpop.permute.xlu0 %1504
      %1506 = vrot.lane.b32.xlu0 %v1362, 127
      %v1507 = vpop.permute.xlu0 %1506
      %1508 = vrot.lane.b32.xlu0 %v1357, 127
      %v1509 = vpop.permute.xlu0 %1508
      %1510 = vrot.lane.b32.xlu0 %v1359, 127
      %v1511 = vpop.permute.xlu0 %1510
      %1512 = vrot.lane.b32.xlu0 %v1361, 127
      %v1513 = vpop.permute.xlu0 %1512
      %1514 = vrot.lane.b32.xlu0 %v1363, 127
      %v1515 = vpop.permute.xlu0 %1514
      %v1516 = vsel %vm873, %v1501, %v1509
      %v1517 = vsel %vm873, %v1503, %v1511
      %v1518 = vsel %vm873, %v1505, %v1513
      %v1519 = vsel %vm873, %v1507, %v1515
      %v1520 = vsel %vm873, %v1509, %v1501
      %v1521 = vsel %vm873, %v1511, %v1503
      %v1522 = vsel %vm873, %v1513, %v1505
      %v1523 = vsel %vm873, %v1515, %v1507
      %v1524 = vmul.f32 %v1516, %v888
      %v1525 = vmul.f32 %v1520, %v892
      %v1526 = vmul.f32 %v1517, %v888
      %v1527 = vmul.f32 %v1521, %v892
      %v1528 = vmul.f32 %v1518, %v888
      %v1529 = vmul.f32 %v1522, %v892
      %v1530 = vmul.f32 %v1519, %v888
      %v1531 = vmul.f32 %v1523, %v892
      %1532 = vrot.lane.b32.xlu0 %v1356, 113
      %v1533 = vpop.permute.xlu0 %1532
      %1534 = vrot.lane.b32.xlu0 %v1358, 113
      %v1535 = vpop.permute.xlu0 %1534
      %1536 = vrot.lane.b32.xlu0 %v1360, 113
      %v1537 = vpop.permute.xlu0 %1536
      %1538 = vrot.lane.b32.xlu0 %v1362, 113
      %v1539 = vpop.permute.xlu0 %1538
      %1540 = vrot.lane.b32.xlu0 %v1357, 113
      %v1541 = vpop.permute.xlu0 %1540
      %1542 = vrot.lane.b32.xlu0 %v1359, 113
      %v1543 = vpop.permute.xlu0 %1542
      %1544 = vrot.lane.b32.xlu0 %v1361, 113
      %v1545 = vpop.permute.xlu0 %1544
      %1546 = vrot.lane.b32.xlu0 %v1363, 113
      %v1547 = vpop.permute.xlu0 %1546
      %v1548 = vsel %vm919, %v1533, %v1541
      %v1549 = vsel %vm919, %v1535, %v1543
      %v1550 = vsel %vm919, %v1537, %v1545
      %v1551 = vsel %vm919, %v1539, %v1547
      %v1552 = vsel %vm919, %v1541, %v1533
      %v1553 = vsel %vm919, %v1543, %v1535
      %v1554 = vsel %vm919, %v1545, %v1537
      %v1555 = vsel %vm919, %v1547, %v1539
      %v1556 = vmul.f32 %v1548, %v934
      %v1557 = vmul.f32 %v1552, %v938
      %v1558 = vmul.f32 %v1549, %v934
      %v1559 = vmul.f32 %v1553, %v938
      %v1560 = vmul.f32 %v1550, %v934
      %v1561 = vmul.f32 %v1554, %v938
      %v1562 = vmul.f32 %v1551, %v934
      %v1563 = vmul.f32 %v1555, %v938
      %1564 = vrot.lane.b32.xlu0 %v1356, 112
      %v1565 = vpop.permute.xlu0 %1564
      %1566 = vrot.lane.b32.xlu0 %v1358, 112
      %v1567 = vpop.permute.xlu0 %1566
      %1568 = vrot.lane.b32.xlu0 %v1360, 112
      %v1569 = vpop.permute.xlu0 %1568
      %1570 = vrot.lane.b32.xlu0 %v1362, 112
      %v1571 = vpop.permute.xlu0 %1570
      %1572 = vrot.lane.b32.xlu0 %v1357, 112
      %v1573 = vpop.permute.xlu0 %1572
      %1574 = vrot.lane.b32.xlu0 %v1359, 112
      %v1575 = vpop.permute.xlu0 %1574
      %1576 = vrot.lane.b32.xlu0 %v1361, 112
      %v1577 = vpop.permute.xlu0 %1576
      %1578 = vrot.lane.b32.xlu0 %v1363, 112
      %v1579 = vpop.permute.xlu0 %1578
      %v1580 = vsel %vm965, %v1565, %v1573
      %v1581 = vsel %vm965, %v1567, %v1575
      %v1582 = vsel %vm965, %v1569, %v1577
      %v1583 = vsel %vm965, %v1571, %v1579
      %v1584 = vsel %vm965, %v1573, %v1565
      %v1585 = vsel %vm965, %v1575, %v1567
      %v1586 = vsel %vm965, %v1577, %v1569
      %v1587 = vsel %vm965, %v1579, %v1571
      %v1588 = vmul.f32 %v1580, %v980
      %v1589 = vmul.f32 %v1584, %v984
      %v1590 = vmul.f32 %v1581, %v980
      %v1591 = vmul.f32 %v1585, %v984
      %v1592 = vmul.f32 %v1582, %v980
      %v1593 = vmul.f32 %v1586, %v984
      %v1594 = vmul.f32 %v1583, %v980
      %v1595 = vmul.f32 %v1587, %v984
      %1596 = vrot.lane.b32.xlu0 %v1356, 111
      %v1597 = vpop.permute.xlu0 %1596
      %1598 = vrot.lane.b32.xlu0 %v1358, 111
      %v1599 = vpop.permute.xlu0 %1598
      %1600 = vrot.lane.b32.xlu0 %v1360, 111
      %v1601 = vpop.permute.xlu0 %1600
      %1602 = vrot.lane.b32.xlu0 %v1362, 111
      %v1603 = vpop.permute.xlu0 %1602
      %1604 = vrot.lane.b32.xlu0 %v1357, 111
      %v1605 = vpop.permute.xlu0 %1604
      %1606 = vrot.lane.b32.xlu0 %v1359, 111
      %v1607 = vpop.permute.xlu0 %1606
      %1608 = vrot.lane.b32.xlu0 %v1361, 111
      %v1609 = vpop.permute.xlu0 %1608
      %1610 = vrot.lane.b32.xlu0 %v1363, 111
      %v1611 = vpop.permute.xlu0 %1610
      %v1612 = vsel %vm1011, %v1597, %v1605
      %v1613 = vsel %vm1011, %v1599, %v1607
      %v1614 = vsel %vm1011, %v1601, %v1609
      %v1615 = vsel %vm1011, %v1603, %v1611
      %v1616 = vsel %vm1011, %v1605, %v1597
      %v1617 = vsel %vm1011, %v1607, %v1599
      %v1618 = vsel %vm1011, %v1609, %v1601
      %v1619 = vsel %vm1011, %v1611, %v1603
      %v1620 = vmul.f32 %v1612, %v1026
      %v1621 = vmul.f32 %v1616, %v1030
      %v1622 = vmul.f32 %v1613, %v1026
      %v1623 = vmul.f32 %v1617, %v1030
      %v1624 = vmul.f32 %v1614, %v1026
      %v1625 = vmul.f32 %v1618, %v1030
      %v1626 = vmul.f32 %v1615, %v1026
      %v1627 = vmul.f32 %v1619, %v1030
      %v1628 = vpack.c.bf16 %v1390, %v1388
      %v1629 = vpack.c.bf16 %v1391, %v1389
      %v1630 = vpack.c.bf16 %v1394, %v1392
      %v1631 = vpack.c.bf16 %v1395, %v1393
      %v1632 = vpack.c.bf16 %v1422, %v1420
      %v1633 = vpack.c.bf16 %v1423, %v1421
      %v1634 = vpack.c.bf16 %v1426, %v1424
      %v1635 = vpack.c.bf16 %v1427, %v1425
      %v1636 = vpack.c.bf16 %v1454, %v1452
      %v1637 = vpack.c.bf16 %v1455, %v1453
      %v1638 = vpack.c.bf16 %v1458, %v1456
      %v1639 = vpack.c.bf16 %v1459, %v1457
      %v1640 = vpack.c.bf16 %v1486, %v1484
      %v1641 = vpack.c.bf16 %v1487, %v1485
      %v1642 = vpack.c.bf16 %v1490, %v1488
      %v1643 = vpack.c.bf16 %v1491, %v1489
      %v1644 = vpack.c.bf16 %v1494, %v1492
      %v1645 = vpack.c.bf16 %v1495, %v1493
      %v1646 = vpack.c.bf16 %v1498, %v1496
      %v1647 = vpack.c.bf16 %v1499, %v1497
      %v1648 = vpack.c.bf16 %v1526, %v1524
      %v1649 = vpack.c.bf16 %v1527, %v1525
      %v1650 = vpack.c.bf16 %v1530, %v1528
      %v1651 = vpack.c.bf16 %v1531, %v1529
      %v1652 = vpack.c.bf16 %v1558, %v1556
      %v1653 = vpack.c.bf16 %v1559, %v1557
      %v1654 = vpack.c.bf16 %v1562, %v1560
      %v1655 = vpack.c.bf16 %v1563, %v1561
      %v1656 = vpack.c.bf16 %v1590, %v1588
      %v1657 = vpack.c.bf16 %v1591, %v1589
      %v1658 = vpack.c.bf16 %v1594, %v1592
      %v1659 = vpack.c.bf16 %v1595, %v1593
      %v1660 = vpack.c.bf16 %v1622, %v1620
      %v1661 = vpack.c.bf16 %v1623, %v1621
      %v1662 = vpack.c.bf16 %v1626, %v1624
      %v1663 = vpack.c.bf16 %v1627, %v1625
      %v1664 = vld [vmem:[%s9] sm:$0x7]
      %v1665 = vld [vmem:[%s10] sm:$0x3]
      %1667 = vset.pattern.permute.xlu0 0
      %1668 = vperm.xlu0 %1667, %v1665
      %v1669 = vpop.permute.xlu0 %1668
      %v1673 = vunpack.c.l.s4 1966171168
      %v1674 = vunpack.c.0.s8 %v1673
      %v1675 = vlaneseq
      %v1676 = vshrl.u32 %v1675, 7
      %v1677 = vsub.s32 %v1674, %v1676
      %v1678 = vrot.slane %v1664, %v1677
      %v1679 = vcombine.high %v1678, %v1678
      %v1681 = vunpack.c.l.s4 1966171168
      %v1682 = vunpack.c.0.s8 %v1681
      %v1683 = vlaneseq
      %v1684 = vshrl.u32 %v1683, 7
      %v1685 = vsub.s32 %v1682, %v1684
      %v1686 = vrot.slane %v1678, %v1685
      %v1688 = vunpack.c.l.s4 1966171168
      %v1689 = vunpack.c.0.s8 %v1688
      %v1690 = vlaneseq
      %v1691 = vshrl.u32 %v1690, 7
      %v1692 = vsub.s32 %v1689, %v1691
      %v1693 = vrot.slane %v1679, %v1692
      %v1694 = vcombine.high %v1686, %v1686
      %v1698 = vsel %vm1139, %v1694, 0
      %1700 = vmatprep.subr.bf16.mxu0 %v1629
      %1701 = vmatpush1.bf16.msra.mxu0 %v1628
      %1702 = vmatprep.subr.bf16.mxu0 %v1631
      %1703 = vmatpush1.bf16.msra.mxu0 %v1630
      %1704 = vmatprep.subr.bf16.mxu0 %v1633
      %1705 = vmatpush1.bf16.msra.mxu0 %v1632
      %1706 = vmatprep.subr.bf16.mxu0 %v1635
      %1707 = vmatpush1.bf16.msra.mxu0 %v1634
      %1708 = vmatprep.subr.bf16.mxu0 %v1637
      %1709 = vmatpush1.bf16.msra.mxu0 %v1636
      %1710 = vmatprep.subr.bf16.mxu0 %v1639
      %1711 = vmatpush1.bf16.msra.mxu0 %v1638
      %1712 = vmatprep.subr.bf16.mxu0 %v1641
      %1713 = vmatpush1.bf16.msra.mxu0 %v1640
      %1714 = vmatprep.subr.bf16.mxu0 %v1643
      %1715 = vmatpush1.bf16.msra.mxu0 %v1642
      %1716 = vmatprep.subr.bf16.mxu0 %v1645
      %1717 = vmatpush1.bf16.msra.mxu0 %v1644
      %1718 = vmatprep.subr.bf16.mxu0 %v1647
      %1719 = vmatpush1.bf16.msra.mxu0 %v1646
      %1720 = vmatprep.subr.bf16.mxu0 %v1649
      %1721 = vmatpush1.bf16.msra.mxu0 %v1648
      %1722 = vmatprep.subr.bf16.mxu0 %v1651
      %1723 = vmatpush1.bf16.msra.mxu0 %v1650
      %1724 = vmatprep.subr.bf16.mxu0 %v1653
      %1725 = vmatpush1.bf16.msra.mxu0 %v1652
      %1726 = vmatprep.subr.bf16.mxu0 %v1655
      %1727 = vmatpush1.bf16.msra.mxu0 %v1654
      %1728 = vmatprep.subr.bf16.mxu0 %v1657
      %1729 = vmatpush1.bf16.msra.mxu0 %v1656
      %1730 = vmatprep.subr.bf16.mxu0 %v1659
      %1731 = vmatpush1.bf16.msra.mxu0 %v1658
      %1732 = vmatprep.mubr.bf16.mxu0 %v1693
      %1733 = vmatmul.mubr.bf16.gmra.mrb[0].mxu0 %v1686
      %v1734 = vpop.f32.mrb[0].mxu0
      %v1735 = vadd.f32 %v1669, %v1734
      %v1736 = vpop.f32.mrb[0].mxu0
      %v1737 = vadd.f32 %v1669, %v1736
      %v1738 = vpop.f32.mrb[0].mxu0
      %v1739 = vpop.f32.mrb[0].mxu0
      %1740 = vdwg.mxu0
      %1741 = vmatprep.subr.bf16.mxu0 %v1661
      %1742 = vmatpush1.bf16.msra.mxu0 %v1660
      %1743 = vmatprep.subr.bf16.mxu0 %v1663
      %1744 = vmatpush1.bf16.msra.mxu0 %v1662
      %1745 = vmatprep.subr.bf16.mxu0 0
      %1746 = vmatpush1.bf16.msra.mxu0 0
      %1747 = vmatprep.subr.bf16.mxu0 0
      %1748 = vmatpush1.bf16.msra.mxu0 0
      %1749 = vmatprep.subr.bf16.mxu0 0
      %1750 = vmatpush1.bf16.msra.mxu0 0
      %1751 = vmatprep.subr.bf16.mxu0 0
      %1752 = vmatpush1.bf16.msra.mxu0 0
      %1753 = vmatprep.subr.bf16.mxu0 0
      %1754 = vmatpush1.bf16.msra.mxu0 0
      %1755 = vmatprep.subr.bf16.mxu0 0
      %1756 = vmatpush1.bf16.msra.mxu0 0
      %1757 = vmatprep.subr.bf16.mxu0 0
      %1758 = vmatpush1.bf16.msra.mxu0 0
      %1759 = vmatprep.subr.bf16.mxu0 0
      %1760 = vmatpush1.bf16.msra.mxu0 0
      %1761 = vmatprep.subr.bf16.mxu0 0
      %1762 = vmatpush1.bf16.msra.mxu0 0
      %1763 = vmatprep.subr.bf16.mxu0 0
      %1764 = vmatpush1.bf16.msra.mxu0 0
      %1765 = vmatprep.subr.bf16.mxu0 0
      %1766 = vmatpush1.bf16.msra.mxu0 0
      %1767 = vmatprep.subr.bf16.mxu0 0
      %1768 = vmatpush1.bf16.msra.mxu0 0
      %1769 = vmatprep.subr.bf16.mxu0 0
      %1770 = vmatpush1.bf16.msra.mxu0 0
      %1771 = vmatprep.subr.bf16.mxu0 0
      %1772 = vmatpush1.bf16.msra.mxu0 0
      %1773 = vmatprep.mubr.bf16.mxu0 0
      %1774 = vmatmul.mubr.bf16.gmra.mrb[0].mxu0 %v1698
      %v1775 = vpop.f32.mrb[0].mxu0
      %v1776 = vadd.f32 %v1735, %v1775
      %v1777 = vpop.f32.mrb[0].mxu0
      %v1778 = vadd.f32 %v1737, %v1777
      %v1779 = vpop.f32.mrb[0].mxu0
      %v1780 = vpop.f32.mrb[0].mxu0
      %1781 = vdwg.mxu0
      %v1782 = vmax.f32 %v1776, -10.0
      %v1783 = vmax.f32 %v1778, -10.0
      %v1784 = vmin.f32 %v1782, 10.0
      %v1785 = vmin.f32 %v1783, 10.0
      %v1786 = vld [vmem:[%s464] sm:$0x3]
      %v1787 = vmul.f32 %v1784, 0.5
      %v1788 = vmul.f32 %v1785, 0.5
      %v1789 = vmul.f32 %v1787, 1.442695
      %v1790 = vpow.pop %v1789
      %v1791 = vmul.f32 %v1788, 1.442695
      %v1792 = vpow.pop %v1791
      %v1795 = vcombine.low %v1790, %v1792
      %v1797 = vunpack.c.l.s4 1966171168
      %v1798 = vunpack.c.0.s8 %v1797
      %v1799 = vlaneseq
      %v1800 = vshrl.u32 %v1799, 7
      %v1801 = vsub.s32 %v1798, %v1800
      %v1802 = vrot.slane %v1795, %v1801
      %v1803 = vcombine.high %v1802, %v1802
      %v1805 = vunpack.c.l.s4 1966171168
      %v1806 = vunpack.c.0.s8 %v1805
      %v1807 = vlaneseq
      %v1808 = vshrl.u32 %v1807, 7
      %v1809 = vsub.s32 %v1806, %v1808
      %v1810 = vrot.slane %v1803, %v1809
      %v1812 = vmul.f32 %v1786, %v1810
      %v1815 = vcombine.low %v1776, %v1778
      %v1817 = vunpack.c.l.s4 1966171168
      %v1818 = vunpack.c.0.s8 %v1817
      %v1819 = vlaneseq
      %v1820 = vshrl.u32 %v1819, 7
      %v1821 = vsub.s32 %v1818, %v1820
      %v1822 = vrot.slane %v1815, %v1821
      %v1824 = vunpack.c.l.s4 1966171168
      %v1825 = vunpack.c.0.s8 %v1824
      %v1826 = vlaneseq
      %v1827 = vshrl.u32 %v1826, 7
      %v1828 = vsub.s32 %v1825, %v1827
      %v1829 = vrot.slane %v1822, %v1828
      %v1831 = vadd.f32 %v1812, %v1829
      %v1832 = vlaneseq
      %vm1833 = vcmp.ge.s32.totalorder %v1832, 0
      %vm1834 = vcmp.lt.s32.totalorder %v1832, 256
      %vm1835 = vmand %vm1833, %vm1834
      %1836 = vst.msk [vmem:[%s468] sm:$0x3] %vm1835, %v1829
      %v1839 = vcombine.low %v1784, %v1785
      %v1841 = vunpack.c.l.s4 1966171168
      %v1842 = vunpack.c.0.s8 %v1841
      %v1843 = vlaneseq
      %v1844 = vshrl.u32 %v1843, 7
      %v1845 = vsub.s32 %v1842, %v1844
      %v1846 = vrot.slane %v1839, %v1845
      %v1847 = vcombine.high %v1846, %v1846
      %v1849 = vunpack.c.l.s4 1966171168
      %v1850 = vunpack.c.0.s8 %v1849
      %v1851 = vlaneseq
      %v1852 = vshrl.u32 %v1851, 7
      %v1853 = vsub.s32 %v1850, %v1852
      %v1854 = vrot.slane %v1847, %v1853
      %1856 = vst.msk [vmem:[%s472] sm:$0x3] %vm1835, %v1854
      %1857 = vst.msk [vmem:[%s476] sm:$0x3] %vm1835, %v1831
      %p1858 = scmp.lt.s32.totalorder %s25, 1
      %s1859 = scalar_select %p1858, %s25, 1
      %s1860 = smul.addr %s1859, 2
      %s1861 = scalar_lea.vmem %s11, %s1860
      %p1862 = scmp.lt.s32.totalorder %s25, 1
      %s1863 = scalar_select %p1862, %s25, 1
      %s1864 = smul.addr %s1863, 2
      %s1865 = scalar_lea.vmem %s12, %s1864
      %p1866 = scmp.lt.s32.totalorder %s25, 1
      %s1867 = scalar_select %p1866, %s25, 1
      %s1868 = smul.addr %s1867, 2
      %s1869 = scalar_lea.vmem %s13, %s1868
      // Predicated region
      $region65: #{zernike_vae_forward.4} parent=63 // pred_check
        %p1870 = pneg %p284
      $region66: #{zernike_vae_forward.4} parent=63 // pred_check_branch
        %1872 = sbr.rel (%p1870) target = $region68
      $region67: #{zernike_vae_forward.4} parent=63 // pred_region
        _
      $region68: #{zernike_vae_forward.4} parent=63 // pred_fallthru
        _
      // Predicated region
      $region69: #{zernike_vae_forward.4} parent=63 // pred_check
        %p1873 = pneg %p310
      $region70: #{zernike_vae_forward.4} parent=63 // pred_check_branch
        %1875 = sbr.rel (%p1873) target = $region72
      $region71: #{zernike_vae_forward.4} parent=63 // pred_region
        _
      $region72: #{zernike_vae_forward.4} parent=63 // pred_fallthru
        _
      // Predicated region
      $region73: #{zernike_vae_forward.4} parent=63 // pred_check
        %p1876 = pneg %p336
      $region74: #{zernike_vae_forward.4} parent=63 // pred_check_branch
        %1878 = sbr.rel (%p1876) target = $region76
      $region75: #{zernike_vae_forward.4} parent=63 // pred_region
        _
      $region76: #{zernike_vae_forward.4} parent=63 // pred_fallthru
        _
    $region64: #{zernike_vae_forward.4} parent=5 // pred_fallthru
      _
    %p1879 = scmp.le.s32.totalorder 2, %s20
    // Predicated region
    $region77: #{zernike_vae_forward.4} parent=5 // pred_check
      %p1880 = pneg %p1879
    $region78: #{zernike_vae_forward.4} parent=5 // pred_check_branch
      %1882 = sbr.rel (%p1880) target = $region80
    $region79: #{zernike_vae_forward.4} parent=5 // pred_region
      %s1883 = ssub.s32 %s20, 2
      // Predicated region
      $region81: #{zernike_vae_forward.4} parent=79 // pred_check
        %p1884 = pneg %p290
      $region82: #{zernike_vae_forward.4} parent=79 // pred_check_branch
        %1886 = sbr.rel (%p1884) target = $region84
      $region83: #{zernike_vae_forward.4} parent=79 // pred_region
        %p1887 = scmp.lt.s32.totalorder %s26, 1
        %s1888 = scalar_select %p1887, %s26, 1
        %s1889 = smul.addr %s1888, 2
        %s1890 = scalar_lea.vmem %s11, %s1889
      $region84: #{zernike_vae_forward.4} parent=79 // pred_fallthru
        _
      // Predicated region
      $region85: #{zernike_vae_forward.4} parent=79 // pred_check
        %p1891 = pneg %p316
      $region86: #{zernike_vae_forward.4} parent=79 // pred_check_branch
        %1893 = sbr.rel (%p1891) target = $region88
      $region87: #{zernike_vae_forward.4} parent=79 // pred_region
        %p1894 = scmp.lt.s32.totalorder %s26, 1
        %s1895 = scalar_select %p1894, %s26, 1
        %s1896 = smul.addr %s1895, 2
        %s1897 = scalar_lea.vmem %s12, %s1896
      $region88: #{zernike_vae_forward.4} parent=79 // pred_fallthru
        _
      // Predicated region
      $region89: #{zernike_vae_forward.4} parent=79 // pred_check
        %p1898 = pneg %p342
      $region90: #{zernike_vae_forward.4} parent=79 // pred_check_branch
        %1900 = sbr.rel (%p1898) target = $region92
      $region91: #{zernike_vae_forward.4} parent=79 // pred_region
        %p1901 = scmp.lt.s32.totalorder %s26, 1
        %s1902 = scalar_select %p1901, %s26, 1
        %s1903 = smul.addr %s1902, 2
        %s1904 = scalar_lea.vmem %s13, %s1903
      $region92: #{zernike_vae_forward.4} parent=79 // pred_fallthru
        _
    $region80: #{zernike_vae_forward.4} parent=5 // pred_fallthru
      _
  $region6: #{zernike_vae_forward.4} parent=0 // loop_footer
    %s24 = sadd.s32 1, %s20
  $region7: #{zernike_vae_forward.4} parent=0 // loop_footer_branch
    %19 = sbr.rel target = $region3
  $region8: #{zernike_vae_forward.4} parent=0 // loop_exit
    _

// kernel: zernike_vae_forward.5
$region0: #{zernike_vae_forward.5}
  #allocation0 [shape = 'u32[]', space=smem, size = 0x4, offset = 0x4, fixed_abs, tag = 'smem constant byte address 0x4 - core index']
  #allocation1 [shape = 'u32[144,128]{1,0:T(1,128)}', space=vmem, size = 0x12000, scoped, tag = 'internal scratch']
  #allocation2 [shape = 'f32[1,1]{1,0:T(1,128)S(1)}', space=vmem, size = 0x200, scoped, tag = 'scoped memory for zernike_vae_forward.5']
  %s0 = inlined_call_operand.vmem [shape: f32[9,256], index: 0, kind: input, shape index: {}]
  %s1 = inlined_call_operand.vmem [shape: bf16[2,18,256], index: 1, kind: input, shape index: {}]
  %s2 = inlined_call_operand.vmem [shape: bf16[32,18], index: 2, kind: input, shape index: {}]
  %s3 = inlined_call_operand.vmem [shape: f32[32,1], index: 3, kind: input, shape index: {}]
  %s4 = inlined_call_operand.vmem [shape: bf16[32,288], index: 4, kind: input, shape index: {}]
  %s5 = inlined_call_operand.vmem [shape: f32[32,1], index: 5, kind: input, shape index: {}]
  %s6 = inlined_call_operand.vmem [shape: bf16[32,16], index: 6, kind: input, shape index: {}]
  %s7 = inlined_call_operand.vmem [shape: f32[32,1], index: 7, kind: input, shape index: {}]
  %s8 = inlined_call_operand.vmem [shape: bf16[1,288], index: 8, kind: input, shape index: {}]
  %s9 = inlined_call_operand.<no memory space> [shape: f32[1,1], index: 9, kind: input, shape index: {}]
  %s10 = inlined_call_operand.vmem [shape: f32[2,1,256], index: 10, kind: output, shape index: {}]
  %s11 = sld [smem:[#allocation0]]
  $region73: #{zernike_vae_forward.5} parent=0
    _
  %s13 = ssub.s32 1, %s11
  %s14 = scalar_select 0, %s13, %s11
  %v15 = vstv %s9
  %16 = vst [vmem:[#allocation2] sm:$0x1] %v15
  loop: start=0, step=1, limit=4
  $region2: #{zernike_vae_forward.5} parent=0 // loop_pre_header
    _
  $region3: #{zernike_vae_forward.5} parent=0 // loop_header
    %s18 = sphi 0, %s22
    %p19 = scmp.ge.s32.totalorder %s18, 4
    %s26 = sphi 0, %s26
    %s28 = sphi 0, %s26
    %s29 = sphi 0, %s28
    %s43 = sphi 0, %s29
    %s49 = sphi 0, %s51
    %s52 = sphi 0, %s49
    %s53 = sphi 0, %s52
    %s69 = sphi 0, %s53
    %s73 = sphi 0, %s73
    %s75 = sphi 0, %s73
    %s76 = sphi 0, %s75
    %s90 = sphi 0, %s76
    %s94 = sphi 0, %s94
    %s96 = sphi 0, %s94
    %s97 = sphi 0, %s96
    %s111 = sphi 0, %s97
    %s115 = sphi 0, %s115
    %s117 = sphi 0, %s115
    %s118 = sphi 0, %s117
    %s132 = sphi 0, %s118
    %s136 = sphi 0, %s136
    %s138 = sphi 0, %s136
    %s139 = sphi 0, %s138
    %s153 = sphi 0, %s139
    %s157 = sphi 0, %s157
    %s159 = sphi 0, %s157
    %s160 = sphi 0, %s159
    %s174 = sphi 0, %s160
    %s178 = sphi 0, %s178
    %s180 = sphi 0, %s178
    %s181 = sphi 0, %s180
    %s195 = sphi 0, %s181
    %s199 = sphi 0, %s199
    %s201 = sphi 0, %s199
    %s202 = sphi 0, %s201
    %s216 = sphi 0, %s202
    %s220 = sphi 0, %s220
    %s222 = sphi 0, %s220
    %s223 = sphi 0, %s222
    %s237 = sphi 0, %s223
    %s243 = sphi 0, %s245
    %s246 = sphi 0, %s243
    %s247 = sphi 0, %s246
    %s263 = sphi 0, %s247
  $region4: #{zernike_vae_forward.5} parent=0 // loop_header_branch
    %21 = sbr.rel (%p19) target = $region8
  $region5: #{zernike_vae_forward.5} parent=0 // loop_body
    %s23 = ssub.s32 %s18, 1
    %s24 = ssub.s32 %s18, 2
    %s25 = sadd.s32 %s18, 1
    %s27 = sadd.s32 %s26, 1
    %p30 = scmp.eq.s32.totalorder %s18, 1
    %p31 = scmp.ne.s32.totalorder %s26, %s28
    %p32 = scmp.eq.s32.totalorder %s18, 0
    %p33 = por %p31, %p32
    %p34 = scmp.ne.s32.totalorder %s26, %s28
    %p35 = scmp.eq.s32.totalorder %s23, 1
    %p36 = por %p34, %p35
    %p37 = scmp.ne.s32.totalorder %s28, %s29
    %p38 = scmp.eq.s32.totalorder %s23, 0
    %p39 = por %p37, %p38
    %p40 = scmp.ne.s32.totalorder %s28, %s29
    %p41 = scmp.eq.s32.totalorder %s24, 1
    %p42 = por %p40, %p41
    %p44 = scmp.ne.s32.totalorder %s29, %s43
    %p45 = scmp.eq.s32.totalorder %s24, 0
    %p46 = por %p44, %p45
    %s47 = ssub.s32 %s18, %s25
    %p48 = scmp.eq.s32.totalorder %s47, 0
    %s50 = sadd.s32 %s49, 1
    %s51 = scalar_select %p48, %s49, %s50
    %p54 = pneg %p48
    %p55 = scmp.eq.s32.totalorder %s18, 1
    %p56 = por %p54, %p55
    %p57 = scmp.ne.s32.totalorder %s49, %s52
    %p58 = scmp.eq.s32.totalorder %s18, 0
    %p59 = por %p57, %p58
    %p60 = scmp.ne.s32.totalorder %s49, %s52
    %p61 = scmp.eq.s32.totalorder %s23, 1
    %p62 = por %p60, %p61
    %p63 = scmp.ne.s32.totalorder %s52, %s53
    %p64 = scmp.eq.s32.totalorder %s23, 0
    %p65 = por %p63, %p64
    %p66 = scmp.ne.s32.totalorder %s52, %s53
    %p67 = scmp.eq.s32.totalorder %s24, 1
    %p68 = por %p66, %p67
    %p70 = scmp.ne.s32.totalorder %s53, %s69
    %p71 = scmp.eq.s32.totalorder %s24, 0
    %p72 = por %p70, %p71
    %s74 = sadd.s32 %s73, 1
    %p77 = scmp.eq.s32.totalorder %s18, 1
    %p78 = scmp.ne.s32.totalorder %s73, %s75
    %p79 = scmp.eq.s32.totalorder %s18, 0
    %p80 = por %p78, %p79
    %p81 = scmp.ne.s32.totalorder %s73, %s75
    %p82 = scmp.eq.s32.totalorder %s23, 1
    %p83 = por %p81, %p82
    %p84 = scmp.ne.s32.totalorder %s75, %s76
    %p85 = scmp.eq.s32.totalorder %s23, 0
    %p86 = por %p84, %p85
    %p87 = scmp.ne.s32.totalorder %s75, %s76
    %p88 = scmp.eq.s32.totalorder %s24, 1
    %p89 = por %p87, %p88
    %p91 = scmp.ne.s32.totalorder %s76, %s90
    %p92 = scmp.eq.s32.totalorder %s24, 0
    %p93 = por %p91, %p92
    %s95 = sadd.s32 %s94, 1
    %p98 = scmp.eq.s32.totalorder %s18, 1
    %p99 = scmp.ne.s32.totalorder %s94, %s96
    %p100 = scmp.eq.s32.totalorder %s18, 0
    %p101 = por %p99, %p100
    %p102 = scmp.ne.s32.totalorder %s94, %s96
    %p103 = scmp.eq.s32.totalorder %s23, 1
    %p104 = por %p102, %p103
    %p105 = scmp.ne.s32.totalorder %s96, %s97
    %p106 = scmp.eq.s32.totalorder %s23, 0
    %p107 = por %p105, %p106
    %p108 = scmp.ne.s32.totalorder %s96, %s97
    %p109 = scmp.eq.s32.totalorder %s24, 1
    %p110 = por %p108, %p109
    %p112 = scmp.ne.s32.totalorder %s97, %s111
    %p113 = scmp.eq.s32.totalorder %s24, 0
    %p114 = por %p112, %p113
    %s116 = sadd.s32 %s115, 1
    %p119 = scmp.eq.s32.totalorder %s18, 1
    %p120 = scmp.ne.s32.totalorder %s115, %s117
    %p121 = scmp.eq.s32.totalorder %s18, 0
    %p122 = por %p120, %p121
    %p123 = scmp.ne.s32.totalorder %s115, %s117
    %p124 = scmp.eq.s32.totalorder %s23, 1
    %p125 = por %p123, %p124
    %p126 = scmp.ne.s32.totalorder %s117, %s118
    %p127 = scmp.eq.s32.totalorder %s23, 0
    %p128 = por %p126, %p127
    %p129 = scmp.ne.s32.totalorder %s117, %s118
    %p130 = scmp.eq.s32.totalorder %s24, 1
    %p131 = por %p129, %p130
    %p133 = scmp.ne.s32.totalorder %s118, %s132
    %p134 = scmp.eq.s32.totalorder %s24, 0
    %p135 = por %p133, %p134
    %s137 = sadd.s32 %s136, 1
    %p140 = scmp.eq.s32.totalorder %s18, 1
    %p141 = scmp.ne.s32.totalorder %s136, %s138
    %p142 = scmp.eq.s32.totalorder %s18, 0
    %p143 = por %p141, %p142
    %p144 = scmp.ne.s32.totalorder %s136, %s138
    %p145 = scmp.eq.s32.totalorder %s23, 1
    %p146 = por %p144, %p145
    %p147 = scmp.ne.s32.totalorder %s138, %s139
    %p148 = scmp.eq.s32.totalorder %s23, 0
    %p149 = por %p147, %p148
    %p150 = scmp.ne.s32.totalorder %s138, %s139
    %p151 = scmp.eq.s32.totalorder %s24, 1
    %p152 = por %p150, %p151
    %p154 = scmp.ne.s32.totalorder %s139, %s153
    %p155 = scmp.eq.s32.totalorder %s24, 0
    %p156 = por %p154, %p155
    %s158 = sadd.s32 %s157, 1
    %p161 = scmp.eq.s32.totalorder %s18, 1
    %p162 = scmp.ne.s32.totalorder %s157, %s159
    %p163 = scmp.eq.s32.totalorder %s18, 0
    %p164 = por %p162, %p163
    %p165 = scmp.ne.s32.totalorder %s157, %s159
    %p166 = scmp.eq.s32.totalorder %s23, 1
    %p167 = por %p165, %p166
    %p168 = scmp.ne.s32.totalorder %s159, %s160
    %p169 = scmp.eq.s32.totalorder %s23, 0
    %p170 = por %p168, %p169
    %p171 = scmp.ne.s32.totalorder %s159, %s160
    %p172 = scmp.eq.s32.totalorder %s24, 1
    %p173 = por %p171, %p172
    %p175 = scmp.ne.s32.totalorder %s160, %s174
    %p176 = scmp.eq.s32.totalorder %s24, 0
    %p177 = por %p175, %p176
    %s179 = sadd.s32 %s178, 1
    %p182 = scmp.eq.s32.totalorder %s18, 1
    %p183 = scmp.ne.s32.totalorder %s178, %s180
    %p184 = scmp.eq.s32.totalorder %s18, 0
    %p185 = por %p183, %p184
    %p186 = scmp.ne.s32.totalorder %s178, %s180
    %p187 = scmp.eq.s32.totalorder %s23, 1
    %p188 = por %p186, %p187
    %p189 = scmp.ne.s32.totalorder %s180, %s181
    %p190 = scmp.eq.s32.totalorder %s23, 0
    %p191 = por %p189, %p190
    %p192 = scmp.ne.s32.totalorder %s180, %s181
    %p193 = scmp.eq.s32.totalorder %s24, 1
    %p194 = por %p192, %p193
    %p196 = scmp.ne.s32.totalorder %s181, %s195
    %p197 = scmp.eq.s32.totalorder %s24, 0
    %p198 = por %p196, %p197
    %s200 = sadd.s32 %s199, 1
    %p203 = scmp.eq.s32.totalorder %s18, 1
    %p204 = scmp.ne.s32.totalorder %s199, %s201
    %p205 = scmp.eq.s32.totalorder %s18, 0
    %p206 = por %p204, %p205
    %p207 = scmp.ne.s32.totalorder %s199, %s201
    %p208 = scmp.eq.s32.totalorder %s23, 1
    %p209 = por %p207, %p208
    %p210 = scmp.ne.s32.totalorder %s201, %s202
    %p211 = scmp.eq.s32.totalorder %s23, 0
    %p212 = por %p210, %p211
    %p213 = scmp.ne.s32.totalorder %s201, %s202
    %p214 = scmp.eq.s32.totalorder %s24, 1
    %p215 = por %p213, %p214
    %p217 = scmp.ne.s32.totalorder %s202, %s216
    %p218 = scmp.eq.s32.totalorder %s24, 0
    %p219 = por %p217, %p218
    %s221 = sadd.s32 %s220, 1
    %p224 = scmp.eq.s32.totalorder %s18, 1
    %p225 = scmp.ne.s32.totalorder %s220, %s222
    %p226 = scmp.eq.s32.totalorder %s18, 0
    %p227 = por %p225, %p226
    %p228 = scmp.ne.s32.totalorder %s220, %s222
    %p229 = scmp.eq.s32.totalorder %s23, 1
    %p230 = por %p228, %p229
    %p231 = scmp.ne.s32.totalorder %s222, %s223
    %p232 = scmp.eq.s32.totalorder %s23, 0
    %p233 = por %p231, %p232
    %p234 = scmp.ne.s32.totalorder %s222, %s223
    %p235 = scmp.eq.s32.totalorder %s24, 1
    %p236 = por %p234, %p235
    %p238 = scmp.ne.s32.totalorder %s223, %s237
    %p239 = scmp.eq.s32.totalorder %s24, 0
    %p240 = por %p238, %p239
    %s241 = ssub.s32 %s18, %s25
    %p242 = scmp.eq.s32.totalorder %s241, 0
    %s244 = sadd.s32 %s243, 1
    %s245 = scalar_select %p242, %s243, %s244
    %p248 = pneg %p242
    %p249 = scmp.eq.s32.totalorder %s18, 1
    %p250 = por %p248, %p249
    %p251 = scmp.ne.s32.totalorder %s243, %s246
    %p252 = scmp.eq.s32.totalorder %s18, 0
    %p253 = por %p251, %p252
    %p254 = scmp.ne.s32.totalorder %s243, %s246
    %p255 = scmp.eq.s32.totalorder %s23, 1
    %p256 = por %p254, %p255
    %p257 = scmp.ne.s32.totalorder %s246, %s247
    %p258 = scmp.eq.s32.totalorder %s23, 0
    %p259 = por %p257, %p258
    %p260 = scmp.ne.s32.totalorder %s246, %s247
    %p261 = scmp.eq.s32.totalorder %s24, 1
    %p262 = por %p260, %p261
    %p264 = scmp.ne.s32.totalorder %s247, %s263
    %p265 = scmp.eq.s32.totalorder %s24, 0
    %p266 = por %p264, %p265
    %p267 = scmp.le.s32.totalorder 1, %s18
    %p268 = scmp.lt.s32.totalorder %s18, 3
    %p269 = pnand %p267, %p268
    %p270 = pneg %p269
    // Predicated region
    $region9: #{zernike_vae_forward.5} parent=5 // pred_check
      _
    $region10: #{zernike_vae_forward.5} parent=5 // pred_check_branch
      %272 = sbr.rel (%p269) target = $region12
    $region11: #{zernike_vae_forward.5} parent=5 // pred_region
      %s273 = ssub.s32 %s18, 1
      // Predicated region
      $region13: #{zernike_vae_forward.5} parent=11 // pred_check
        %p274 = pneg %p39
      $region14: #{zernike_vae_forward.5} parent=11 // pred_check_branch
        %276 = sbr.rel (%p274) target = $region16
      $region15: #{zernike_vae_forward.5} parent=11 // pred_region
        _
      $region16: #{zernike_vae_forward.5} parent=11 // pred_fallthru
        _
      // Predicated region
      $region17: #{zernike_vae_forward.5} parent=11 // pred_check
        %p277 = pneg %p86
      $region18: #{zernike_vae_forward.5} parent=11 // pred_check_branch
        %279 = sbr.rel (%p277) target = $region20
      $region19: #{zernike_vae_forward.5} parent=11 // pred_region
        _
      $region20: #{zernike_vae_forward.5} parent=11 // pred_fallthru
        _
      // Predicated region
      $region21: #{zernike_vae_forward.5} parent=11 // pred_check
        %p280 = pneg %p107
      $region22: #{zernike_vae_forward.5} parent=11 // pred_check_branch
        %282 = sbr.rel (%p280) target = $region24
      $region23: #{zernike_vae_forward.5} parent=11 // pred_region
        _
      $region24: #{zernike_vae_forward.5} parent=11 // pred_fallthru
        _
      // Predicated region
      $region25: #{zernike_vae_forward.5} parent=11 // pred_check
        %p283 = pneg %p128
      $region26: #{zernike_vae_forward.5} parent=11 // pred_check_branch
        %285 = sbr.rel (%p283) target = $region28
      $region27: #{zernike_vae_forward.5} parent=11 // pred_region
        _
      $region28: #{zernike_vae_forward.5} parent=11 // pred_fallthru
        _
      // Predicated region
      $region29: #{zernike_vae_forward.5} parent=11 // pred_check
        %p286 = pneg %p149
      $region30: #{zernike_vae_forward.5} parent=11 // pred_check_branch
        %288 = sbr.rel (%p286) target = $region32
      $region31: #{zernike_vae_forward.5} parent=11 // pred_region
        _
      $region32: #{zernike_vae_forward.5} parent=11 // pred_fallthru
        _
      // Predicated region
      $region33: #{zernike_vae_forward.5} parent=11 // pred_check
        %p289 = pneg %p170
      $region34: #{zernike_vae_forward.5} parent=11 // pred_check_branch
        %291 = sbr.rel (%p289) target = $region36
      $region35: #{zernike_vae_forward.5} parent=11 // pred_region
        _
      $region36: #{zernike_vae_forward.5} parent=11 // pred_fallthru
        _
      // Predicated region
      $region37: #{zernike_vae_forward.5} parent=11 // pred_check
        %p292 = pneg %p191
      $region38: #{zernike_vae_forward.5} parent=11 // pred_check_branch
        %294 = sbr.rel (%p292) target = $region40
      $region39: #{zernike_vae_forward.5} parent=11 // pred_region
        _
      $region40: #{zernike_vae_forward.5} parent=11 // pred_fallthru
        _
      // Predicated region
      $region41: #{zernike_vae_forward.5} parent=11 // pred_check
        %p295 = pneg %p212
      $region42: #{zernike_vae_forward.5} parent=11 // pred_check_branch
        %297 = sbr.rel (%p295) target = $region44
      $region43: #{zernike_vae_forward.5} parent=11 // pred_region
        _
      $region44: #{zernike_vae_forward.5} parent=11 // pred_fallthru
        _
      // Predicated region
      $region45: #{zernike_vae_forward.5} parent=11 // pred_check
        %p298 = pneg %p233
      $region46: #{zernike_vae_forward.5} parent=11 // pred_check_branch
        %300 = sbr.rel (%p298) target = $region48
      $region47: #{zernike_vae_forward.5} parent=11 // pred_region
        _
      $region48: #{zernike_vae_forward.5} parent=11 // pred_fallthru
        _
    $region12: #{zernike_vae_forward.5} parent=5 // pred_fallthru
      _
    %p301 = scmp.lt.s32.totalorder %s18, 2
    // Predicated region
    $region49: #{zernike_vae_forward.5} parent=5 // pred_check
      %p302 = pneg %p301
    $region50: #{zernike_vae_forward.5} parent=5 // pred_check_branch
      %304 = sbr.rel (%p302) target = $region52
    $region51: #{zernike_vae_forward.5} parent=5 // pred_region
      // Predicated region
      $region53: #{zernike_vae_forward.5} parent=51 // pred_check
        %p305 = pneg %p59
      $region54: #{zernike_vae_forward.5} parent=51 // pred_check_branch
        %307 = sbr.rel (%p305) target = $region56
      $region55: #{zernike_vae_forward.5} parent=51 // pred_region
        %p308 = scmp.lt.s32.totalorder %s18, 1
        %s309 = scalar_select %p308, %s18, 1
        %s310 = smul.addr %s309, 6
        %s311 = smul.addr %s310, 4
        %s312 = scalar_lea.vmem %s1, %s311
      $region56: #{zernike_vae_forward.5} parent=51 // pred_fallthru
        _
    $region52: #{zernike_vae_forward.5} parent=5 // pred_fallthru
      _
    %p313 = scmp.le.s32.totalorder 1, %s18
    %p314 = scmp.lt.s32.totalorder %s18, 3
    %p315 = pnand %p313, %p314
    %p316 = pneg %p315
    // Predicated region
    $region57: #{zernike_vae_forward.5} parent=5 // pred_check
      _
    $region58: #{zernike_vae_forward.5} parent=5 // pred_check_branch
      %318 = sbr.rel (%p315) target = $region60
    $region59: #{zernike_vae_forward.5} parent=5 // pred_region
      %s319 = ssub.s32 %s18, 1
      %p320 = pneg %p39
      %p321 = pneg %p36
      %p322 = scmp.lt.s32.totalorder %s23, 1
      %s323 = scalar_select %p322, %s23, 1
      %s324 = smul.addr %s323, 6
      %s325 = smul.addr %s324, 4
      %s326 = scalar_lea.vmem %s1, %s325
      %p327 = pneg %p65
      %p328 = pneg %p62
      %p329 = pneg %p86
      %p330 = pneg %p83
      %p331 = pneg %p107
      %p332 = pneg %p104
      %p333 = pneg %p128
      %p334 = pneg %p125
      %p335 = pneg %p149
      %p336 = pneg %p146
      %p337 = pneg %p170
      %p338 = pneg %p167
      %p339 = pneg %p191
      %p340 = pneg %p188
      %p341 = pneg %p212
      %p342 = pneg %p209
      %p343 = pneg %p233
      %p344 = pneg %p230
      %p345 = pneg %p259
      %p346 = pneg %p256
      %p347 = scmp.lt.s32.totalorder %s23, 1
      %s348 = scalar_select %p347, %s23, 1
      %s349 = smul.addr %s348, 2
      %s350 = scalar_lea.vmem %s10, %s349
      %p351 = scmp.lt.s32.totalorder %s23, 1
      %s352 = scalar_select %p351, %s23, 1
      %s353 = smul.addr %s352, 6
      %s354 = smul.addr %s353, 4
      %s355 = scalar_lea.vmem %s1, %s354
      %p356 = scmp.lt.s32.totalorder %s23, 1
      %s357 = scalar_select %p356, %s23, 1
      %s358 = smul.addr %s357, 2
      %s359 = scalar_lea.vmem %s10, %s358
      %v361 = vld [vmem:[%s355] sm:$0xff]
      %v362 = vld [vmem:[%s355 + $0x8] sm:$0xff]
      %v363 = vld [vmem:[%s355 + $0x10] sm:$0x11]
      %v364 = vld [vmem:[%s2] sm:$0xf]
      %v365 = vld [vmem:[%s2 + $0x4] sm:$0xf]
      %v366 = vld [vmem:[%s2 + $0x8] sm:$0xf]
      %v367 = vld [vmem:[%s2 + $0xc] sm:$0xf]
      %v368 = vld [vmem:[%s3] sm:$0xff]
      %v369 = vld [vmem:[%s3 + $0x8] sm:$0xff]
      %v370 = vld [vmem:[%s3 + $0x10] sm:$0xff]
      %v371 = vld [vmem:[%s3 + $0x18] sm:$0xff]
      %373 = vset.pattern.permute.xlu0 0
      %374 = vperm.xlu0 %373, %v368
      %v375 = vpop.permute.xlu0 %374
      %378 = vset.pattern.permute.xlu0 0
      %379 = vperm.xlu0 %378, %v369
      %v380 = vpop.permute.xlu0 %379
      %383 = vset.pattern.permute.xlu0 0
      %384 = vperm.xlu0 %383, %v370
      %v385 = vpop.permute.xlu0 %384
      %388 = vset.pattern.permute.xlu0 0
      %389 = vperm.xlu0 %388, %v371
      %v390 = vpop.permute.xlu0 %389
      %v396 = vunpack.c.l.b16 %v364
      %v397 = vunpack.c.l.b16 %v365
      %v398 = vunpack.c.l.b16 %v366
      %v399 = vunpack.c.l.b16 %v367
      %v400 = vpack.c.b16 %v397, %v396
      %v401 = vpack.c.b16 %v399, %v398
      %v405 = vunpack.c.l.b16 %v361
      %v406 = vunpack.c.h.b16 %v361
      %v407 = vunpack.c.l.b16 %v362
      %v408 = vunpack.c.h.b16 %v362
      %v409 = vunpack.c.l.b16 %v363
      %v410 = vunpack.c.h.b16 %v363
      %v411 = vpack.c.b16 %v407, %v405
      %v412 = vpack.c.b16 %v408, %v406
      %v413 = vpack.c.b16 %v409, %v409
      %v414 = vpack.c.b16 %v410, %v410
      %vm417 = vcmask 146432
      %v419 = vsel %vm417, %v400, 0
      %v422 = vsel %vm417, %v401, 0
      %vm424 = vcmask 1040384
      %v426 = vsel %vm424, %v413, 0
      %v429 = vsel %vm424, %v414, 0
      %431 = vmatprep.subr.bf16.mxu0 %v412
      %432 = vmatpush1.bf16.msra.mxu0 %v411
      %433 = vmatprep.subr.bf16.mxu0 %v429
      %434 = vmatpush1.bf16.msra.mxu0 %v426
      %435 = vmatprep.subr.bf16.mxu0 0
      %436 = vmatpush1.bf16.msra.mxu0 0
      %437 = vmatprep.subr.bf16.mxu0 0
      %438 = vmatpush1.bf16.msra.mxu0 0
      %439 = vmatprep.subr.bf16.mxu0 0
      %440 = vmatpush1.bf16.msra.mxu0 0
      %441 = vmatprep.subr.bf16.mxu0 0
      %442 = vmatpush1.bf16.msra.mxu0 0
      %443 = vmatprep.subr.bf16.mxu0 0
      %444 = vmatpush1.bf16.msra.mxu0 0
      %445 = vmatprep.subr.bf16.mxu0 0
      %446 = vmatpush1.bf16.msra.mxu0 0
      %447 = vmatprep.subr.bf16.mxu0 0
      %448 = vmatpush1.bf16.msra.mxu0 0
      %449 = vmatprep.subr.bf16.mxu0 0
      %450 = vmatpush1.bf16.msra.mxu0 0
      %451 = vmatprep.subr.bf16.mxu0 0
      %452 = vmatpush1.bf16.msra.mxu0 0
      %453 = vmatprep.subr.bf16.mxu0 0
      %454 = vmatpush1.bf16.msra.mxu0 0
      %455 = vmatprep.subr.bf16.mxu0 0
      %456 = vmatpush1.bf16.msra.mxu0 0
      %457 = vmatprep.subr.bf16.mxu0 0
      %458 = vmatpush1.bf16.msra.mxu0 0
      %459 = vmatprep.subr.bf16.mxu0 0
      %460 = vmatpush1.bf16.msra.mxu0 0
      %461 = vmatprep.subr.bf16.mxu0 0
      %462 = vmatpush1.bf16.msra.mxu0 0
      %463 = vmatprep.mubr.bf16.mxu0 0
      %464 = vmatmul.mubr.bf16.gmra.mrb[0].mxu0 %v419
      %v465 = vpop.f32.mrb[0].mxu0
      %v466 = vadd.f32 %v375, %v465
      %v467 = vpop.f32.mrb[0].mxu0
      %v468 = vadd.f32 %v375, %v467
      %v469 = vpop.f32.mrb[0].mxu0
      %v470 = vadd.f32 %v380, %v469
      %v471 = vpop.f32.mrb[0].mxu0
      %v472 = vadd.f32 %v380, %v471
      %473 = vmatprep.mubr.bf16.mxu0 0
      %474 = vmatmul.mubr.bf16.gmra.mrb[0].mxu0 %v422
      %v475 = vpop.f32.mrb[0].mxu0
      %v476 = vadd.f32 %v385, %v475
      %v477 = vpop.f32.mrb[0].mxu0
      %v478 = vadd.f32 %v385, %v477
      %v479 = vpop.f32.mrb[0].mxu0
      %v480 = vadd.f32 %v390, %v479
      %v481 = vpop.f32.mrb[0].mxu0
      %v482 = vadd.f32 %v390, %v481
      %483 = vdwg.mxu0
      %484 = vrot.lane.b32.xlu0 %v466, 17
      %v485 = vpop.permute.xlu0 %484
      %486 = vrot.lane.b32.xlu0 %v470, 17
      %v487 = vpop.permute.xlu0 %486
      %488 = vrot.lane.b32.xlu0 %v476, 17
      %v489 = vpop.permute.xlu0 %488
      %490 = vrot.lane.b32.xlu0 %v480, 17
      %v491 = vpop.permute.xlu0 %490
      %492 = vrot.lane.b32.xlu0 %v468, 17
      %v493 = vpop.permute.xlu0 %492
      %494 = vrot.lane.b32.xlu0 %v472, 17
      %v495 = vpop.permute.xlu0 %494
      %496 = vrot.lane.b32.xlu0 %v478, 17
      %v497 = vpop.permute.xlu0 %496
      %498 = vrot.lane.b32.xlu0 %v482, 17
      %v499 = vpop.permute.xlu0 %498
      %v500 = vlaneseq
      %v501 = vand.u32 %v500, 127
      %vm502 = vcmp.lt.s32.totalorder %v501, 17
      %v503 = vsel %vm502, %v485, %v493
      %v504 = vsel %vm502, %v487, %v495
      %v505 = vsel %vm502, %v489, %v497
      %v506 = vsel %vm502, %v491, %v499
      %v507 = vsel %vm502, %v493, %v485
      %v508 = vsel %vm502, %v495, %v487
      %v509 = vsel %vm502, %v497, %v489
      %v510 = vsel %vm502, %v499, %v491
      %v511 = vld [vmem:[%s0] ss:$8 sm:$0x3]
      %v513 = vlaneseq
      %v514 = vshrl.u32 %v513, 7
      %v515 = vsub.s32 0, %v514
      %v516 = vrot.slane %v511, %v515
      %v517 = vlaneseq
      %v518 = vshrl.u32 %v517, 7
      %v519 = vsub.s32 1, %v518
      %v520 = vrot.slane %v511, %v519
      %v523 = vmul.f32 %v507, %v516
      %v524 = vmul.f32 %v503, %v520
      %v525 = vmul.f32 %v508, %v516
      %v526 = vmul.f32 %v504, %v520
      %v527 = vmul.f32 %v509, %v516
      %v528 = vmul.f32 %v505, %v520
      %v529 = vmul.f32 %v510, %v516
      %v530 = vmul.f32 %v506, %v520
      %531 = vrot.lane.b32.xlu0 %v466, 16
      %v532 = vpop.permute.xlu0 %531
      %533 = vrot.lane.b32.xlu0 %v470, 16
      %v534 = vpop.permute.xlu0 %533
      %535 = vrot.lane.b32.xlu0 %v476, 16
      %v536 = vpop.permute.xlu0 %535
      %537 = vrot.lane.b32.xlu0 %v480, 16
      %v538 = vpop.permute.xlu0 %537
      %539 = vrot.lane.b32.xlu0 %v468, 16
      %v540 = vpop.permute.xlu0 %539
      %541 = vrot.lane.b32.xlu0 %v472, 16
      %v542 = vpop.permute.xlu0 %541
      %543 = vrot.lane.b32.xlu0 %v478, 16
      %v544 = vpop.permute.xlu0 %543
      %545 = vrot.lane.b32.xlu0 %v482, 16
      %v546 = vpop.permute.xlu0 %545
      %vm547 = vcmp.lt.s32.totalorder %v501, 16
      %v548 = vsel %vm547, %v532, %v540
      %v549 = vsel %vm547, %v534, %v542
      %v550 = vsel %vm547, %v536, %v544
      %v551 = vsel %vm547, %v538, %v546
      %v552 = vsel %vm547, %v540, %v532
      %v553 = vsel %vm547, %v542, %v534
      %v554 = vsel %vm547, %v544, %v536
      %v555 = vsel %vm547, %v546, %v538
      %s556 = scalar_lea.vmem %s0, 1
      %v557 = vld [vmem:[%s556] ss:$8 sm:$0x3]
      %v559 = vlaneseq
      %v560 = vshrl.u32 %v559, 7
      %v561 = vsub.s32 0, %v560
      %v562 = vrot.slane %v557, %v561
      %v563 = vlaneseq
      %v564 = vshrl.u32 %v563, 7
      %v565 = vsub.s32 1, %v564
      %v566 = vrot.slane %v557, %v565
      %v569 = vmul.f32 %v552, %v562
      %v570 = vmul.f32 %v548, %v566
      %v571 = vmul.f32 %v553, %v562
      %v572 = vmul.f32 %v549, %v566
      %v573 = vmul.f32 %v554, %v562
      %v574 = vmul.f32 %v550, %v566
      %v575 = vmul.f32 %v555, %v562
      %v576 = vmul.f32 %v551, %v566
      %577 = vrot.lane.b32.xlu0 %v466, 15
      %v578 = vpop.permute.xlu0 %577
      %579 = vrot.lane.b32.xlu0 %v470, 15
      %v580 = vpop.permute.xlu0 %579
      %581 = vrot.lane.b32.xlu0 %v476, 15
      %v582 = vpop.permute.xlu0 %581
      %583 = vrot.lane.b32.xlu0 %v480, 15
      %v584 = vpop.permute.xlu0 %583
      %585 = vrot.lane.b32.xlu0 %v468, 15
      %v586 = vpop.permute.xlu0 %585
      %587 = vrot.lane.b32.xlu0 %v472, 15
      %v588 = vpop.permute.xlu0 %587
      %589 = vrot.lane.b32.xlu0 %v478, 15
      %v590 = vpop.permute.xlu0 %589
      %591 = vrot.lane.b32.xlu0 %v482, 15
      %v592 = vpop.permute.xlu0 %591
      %vm593 = vcmp.lt.s32.totalorder %v501, 15
      %v594 = vsel %vm593, %v578, %v586
      %v595 = vsel %vm593, %v580, %v588
      %v596 = vsel %vm593, %v582, %v590
      %v597 = vsel %vm593, %v584, %v592
      %v598 = vsel %vm593, %v586, %v578
      %v599 = vsel %vm593, %v588, %v580
      %v600 = vsel %vm593, %v590, %v582
      %v601 = vsel %vm593, %v592, %v584
      %s602 = scalar_lea.vmem %s0, 2
      %v603 = vld [vmem:[%s602] ss:$8 sm:$0x3]
      %v605 = vlaneseq
      %v606 = vshrl.u32 %v605, 7
      %v607 = vsub.s32 0, %v606
      %v608 = vrot.slane %v603, %v607
      %v609 = vlaneseq
      %v610 = vshrl.u32 %v609, 7
      %v611 = vsub.s32 1, %v610
      %v612 = vrot.slane %v603, %v611
      %v615 = vmul.f32 %v598, %v608
      %v616 = vmul.f32 %v594, %v612
      %v617 = vmul.f32 %v599, %v608
      %v618 = vmul.f32 %v595, %v612
      %v619 = vmul.f32 %v600, %v608
      %v620 = vmul.f32 %v596, %v612
      %v621 = vmul.f32 %v601, %v608
      %v622 = vmul.f32 %v597, %v612
      %623 = vrot.lane.b32.xlu0 %v466, 1
      %v624 = vpop.permute.xlu0 %623
      %625 = vrot.lane.b32.xlu0 %v470, 1
      %v626 = vpop.permute.xlu0 %625
      %627 = vrot.lane.b32.xlu0 %v476, 1
      %v628 = vpop.permute.xlu0 %627
      %629 = vrot.lane.b32.xlu0 %v480, 1
      %v630 = vpop.permute.xlu0 %629
      %631 = vrot.lane.b32.xlu0 %v468, 1
      %v632 = vpop.permute.xlu0 %631
      %633 = vrot.lane.b32.xlu0 %v472, 1
      %v634 = vpop.permute.xlu0 %633
      %635 = vrot.lane.b32.xlu0 %v478, 1
      %v636 = vpop.permute.xlu0 %635
      %637 = vrot.lane.b32.xlu0 %v482, 1
      %v638 = vpop.permute.xlu0 %637
      %vm639 = vcmp.lt.s32.totalorder %v501, 1
      %v640 = vsel %vm639, %v624, %v632
      %v641 = vsel %vm639, %v626, %v634
      %v642 = vsel %vm639, %v628, %v636
      %v643 = vsel %vm639, %v630, %v638
      %v644 = vsel %vm639, %v632, %v624
      %v645 = vsel %vm639, %v634, %v626
      %v646 = vsel %vm639, %v636, %v628
      %v647 = vsel %vm639, %v638, %v630
      %s648 = scalar_lea.vmem %s0, 3
      %v649 = vld [vmem:[%s648] ss:$8 sm:$0x3]
      %v651 = vlaneseq
      %v652 = vshrl.u32 %v651, 7
      %v653 = vsub.s32 0, %v652
      %v654 = vrot.slane %v649, %v653
      %v655 = vlaneseq
      %v656 = vshrl.u32 %v655, 7
      %v657 = vsub.s32 1, %v656
      %v658 = vrot.slane %v649, %v657
      %v661 = vmul.f32 %v644, %v654
      %v662 = vmul.f32 %v640, %v658
      %v663 = vmul.f32 %v645, %v654
      %v664 = vmul.f32 %v641, %v658
      %v665 = vmul.f32 %v646, %v654
      %v666 = vmul.f32 %v642, %v658
      %v667 = vmul.f32 %v647, %v654
      %v668 = vmul.f32 %v643, %v658
      %s669 = scalar_lea.vmem %s0, 4
      %v670 = vld [vmem:[%s669] ss:$8 sm:$0x3]
      %v672 = vlaneseq
      %v673 = vshrl.u32 %v672, 7
      %v674 = vsub.s32 0, %v673
      %v675 = vrot.slane %v670, %v674
      %v676 = vlaneseq
      %v677 = vshrl.u32 %v676, 7
      %v678 = vsub.s32 1, %v677
      %v679 = vrot.slane %v670, %v678
      %v682 = vmul.f32 %v466, %v675
      %v683 = vmul.f32 %v468, %v679
      %v684 = vmul.f32 %v470, %v675
      %v685 = vmul.f32 %v472, %v679
      %v686 = vmul.f32 %v476, %v675
      %v687 = vmul.f32 %v478, %v679
      %v688 = vmul.f32 %v480, %v675
      %v689 = vmul.f32 %v482, %v679
      %690 = vrot.lane.b32.xlu0 %v466, 127
      %v691 = vpop.permute.xlu0 %690
      %692 = vrot.lane.b32.xlu0 %v470, 127
      %v693 = vpop.permute.xlu0 %692
      %694 = vrot.lane.b32.xlu0 %v476, 127
      %v695 = vpop.permute.xlu0 %694
      %696 = vrot.lane.b32.xlu0 %v480, 127
      %v697 = vpop.permute.xlu0 %696
      %698 = vrot.lane.b32.xlu0 %v468, 127
      %v699 = vpop.permute.xlu0 %698
      %700 = vrot.lane.b32.xlu0 %v472, 127
      %v701 = vpop.permute.xlu0 %700
      %702 = vrot.lane.b32.xlu0 %v478, 127
      %v703 = vpop.permute.xlu0 %702
      %704 = vrot.lane.b32.xlu0 %v482, 127
      %v705 = vpop.permute.xlu0 %704
      %vm706 = vcmp.lt.s32.totalorder %v501, 127
      %v707 = vsel %vm706, %v691, %v699
      %v708 = vsel %vm706, %v693, %v701
      %v709 = vsel %vm706, %v695, %v703
      %v710 = vsel %vm706, %v697, %v705
      %v711 = vsel %vm706, %v699, %v691
      %v712 = vsel %vm706, %v701, %v693
      %v713 = vsel %vm706, %v703, %v695
      %v714 = vsel %vm706, %v705, %v697
      %s715 = scalar_lea.vmem %s0, 5
      %v716 = vld [vmem:[%s715] ss:$8 sm:$0x3]
      %v718 = vlaneseq
      %v719 = vshrl.u32 %v718, 7
      %v720 = vsub.s32 0, %v719
      %v721 = vrot.slane %v716, %v720
      %v722 = vlaneseq
      %v723 = vshrl.u32 %v722, 7
      %v724 = vsub.s32 1, %v723
      %v725 = vrot.slane %v716, %v724
      %v728 = vmul.f32 %v707, %v721
      %v729 = vmul.f32 %v711, %v725
      %v730 = vmul.f32 %v708, %v721
      %v731 = vmul.f32 %v712, %v725
      %v732 = vmul.f32 %v709, %v721
      %v733 = vmul.f32 %v713, %v725
      %v734 = vmul.f32 %v710, %v721
      %v735 = vmul.f32 %v714, %v725
      %736 = vrot.lane.b32.xlu0 %v466, 113
      %v737 = vpop.permute.xlu0 %736
      %738 = vrot.lane.b32.xlu0 %v470, 113
      %v739 = vpop.permute.xlu0 %738
      %740 = vrot.lane.b32.xlu0 %v476, 113
      %v741 = vpop.permute.xlu0 %740
      %742 = vrot.lane.b32.xlu0 %v480, 113
      %v743 = vpop.permute.xlu0 %742
      %744 = vrot.lane.b32.xlu0 %v468, 113
      %v745 = vpop.permute.xlu0 %744
      %746 = vrot.lane.b32.xlu0 %v472, 113
      %v747 = vpop.permute.xlu0 %746
      %748 = vrot.lane.b32.xlu0 %v478, 113
      %v749 = vpop.permute.xlu0 %748
      %750 = vrot.lane.b32.xlu0 %v482, 113
      %v751 = vpop.permute.xlu0 %750
      %vm752 = vcmp.lt.s32.totalorder %v501, 113
      %v753 = vsel %vm752, %v737, %v745
      %v754 = vsel %vm752, %v739, %v747
      %v755 = vsel %vm752, %v741, %v749
      %v756 = vsel %vm752, %v743, %v751
      %v757 = vsel %vm752, %v745, %v737
      %v758 = vsel %vm752, %v747, %v739
      %v759 = vsel %vm752, %v749, %v741
      %v760 = vsel %vm752, %v751, %v743
      %s761 = scalar_lea.vmem %s0, 6
      %v762 = vld [vmem:[%s761] ss:$8 sm:$0x3]
      %v764 = vlaneseq
      %v765 = vshrl.u32 %v764, 7
      %v766 = vsub.s32 0, %v765
      %v767 = vrot.slane %v762, %v766
      %v768 = vlaneseq
      %v769 = vshrl.u32 %v768, 7
      %v770 = vsub.s32 1, %v769
      %v771 = vrot.slane %v762, %v770
      %v774 = vmul.f32 %v753, %v767
      %v775 = vmul.f32 %v757, %v771
      %v776 = vmul.f32 %v754, %v767
      %v777 = vmul.f32 %v758, %v771
      %v778 = vmul.f32 %v755, %v767
      %v779 = vmul.f32 %v759, %v771
      %v780 = vmul.f32 %v756, %v767
      %v781 = vmul.f32 %v760, %v771
      %782 = vrot.lane.b32.xlu0 %v466, 112
      %v783 = vpop.permute.xlu0 %782
      %784 = vrot.lane.b32.xlu0 %v470, 112
      %v785 = vpop.permute.xlu0 %784
      %786 = vrot.lane.b32.xlu0 %v476, 112
      %v787 = vpop.permute.xlu0 %786
      %788 = vrot.lane.b32.xlu0 %v480, 112
      %v789 = vpop.permute.xlu0 %788
      %790 = vrot.lane.b32.xlu0 %v468, 112
      %v791 = vpop.permute.xlu0 %790
      %792 = vrot.lane.b32.xlu0 %v472, 112
      %v793 = vpop.permute.xlu0 %792
      %794 = vrot.lane.b32.xlu0 %v478, 112
      %v795 = vpop.permute.xlu0 %794
      %796 = vrot.lane.b32.xlu0 %v482, 112
      %v797 = vpop.permute.xlu0 %796
      %vm798 = vcmp.lt.s32.totalorder %v501, 112
      %v799 = vsel %vm798, %v783, %v791
      %v800 = vsel %vm798, %v785, %v793
      %v801 = vsel %vm798, %v787, %v795
      %v802 = vsel %vm798, %v789, %v797
      %v803 = vsel %vm798, %v791, %v783
      %v804 = vsel %vm798, %v793, %v785
      %v805 = vsel %vm798, %v795, %v787
      %v806 = vsel %vm798, %v797, %v789
      %s807 = scalar_lea.vmem %s0, 7
      %v808 = vld [vmem:[%s807] ss:$8 sm:$0x3]
      %v810 = vlaneseq
      %v811 = vshrl.u32 %v810, 7
      %v812 = vsub.s32 0, %v811
      %v813 = vrot.slane %v808, %v812
      %v814 = vlaneseq
      %v815 = vshrl.u32 %v814, 7
      %v816 = vsub.s32 1, %v815
      %v817 = vrot.slane %v808, %v816
      %v820 = vmul.f32 %v799, %v813
      %v821 = vmul.f32 %v803, %v817
      %v822 = vmul.f32 %v800, %v813
      %v823 = vmul.f32 %v804, %v817
      %v824 = vmul.f32 %v801, %v813
      %v825 = vmul.f32 %v805, %v817
      %v826 = vmul.f32 %v802, %v813
      %v827 = vmul.f32 %v806, %v817
      %828 = vrot.lane.b32.xlu0 %v466, 111
      %v829 = vpop.permute.xlu0 %828
      %830 = vrot.lane.b32.xlu0 %v470, 111
      %v831 = vpop.permute.xlu0 %830
      %832 = vrot.lane.b32.xlu0 %v476, 111
      %v833 = vpop.permute.xlu0 %832
      %834 = vrot.lane.b32.xlu0 %v480, 111
      %v835 = vpop.permute.xlu0 %834
      %836 = vrot.lane.b32.xlu0 %v468, 111
      %v837 = vpop.permute.xlu0 %836
      %838 = vrot.lane.b32.xlu0 %v472, 111
      %v839 = vpop.permute.xlu0 %838
      %840 = vrot.lane.b32.xlu0 %v478, 111
      %v841 = vpop.permute.xlu0 %840
      %842 = vrot.lane.b32.xlu0 %v482, 111
      %v843 = vpop.permute.xlu0 %842
      %vm844 = vcmp.lt.s32.totalorder %v501, 111
      %v845 = vsel %vm844, %v829, %v837
      %v846 = vsel %vm844, %v831, %v839
      %v847 = vsel %vm844, %v833, %v841
      %v848 = vsel %vm844, %v835, %v843
      %v849 = vsel %vm844, %v837, %v829
      %v850 = vsel %vm844, %v839, %v831
      %v851 = vsel %vm844, %v841, %v833
      %v852 = vsel %vm844, %v843, %v835
      %s853 = scalar_lea.vmem %s0, 16
      %v854 = vld [vmem:[%s853] ss:$8 sm:$0x3]
      %v856 = vlaneseq
      %v857 = vshrl.u32 %v856, 7
      %v858 = vsub.s32 0, %v857
      %v859 = vrot.slane %v854, %v858
      %v860 = vlaneseq
      %v861 = vshrl.u32 %v860, 7
      %v862 = vsub.s32 1, %v861
      %v863 = vrot.slane %v854, %v862
      %v866 = vmul.f32 %v845, %v859
      %v867 = vmul.f32 %v849, %v863
      %v868 = vmul.f32 %v846, %v859
      %v869 = vmul.f32 %v850, %v863
      %v870 = vmul.f32 %v847, %v859
      %v871 = vmul.f32 %v851, %v863
      %v872 = vmul.f32 %v848, %v859
      %v873 = vmul.f32 %v852, %v863
      %v874 = vpack.c.bf16 %v525, %v523
      %v875 = vpack.c.bf16 %v526, %v524
      %v876 = vpack.c.bf16 %v529, %v527
      %v877 = vpack.c.bf16 %v530, %v528
      %v878 = vpack.c.bf16 %v571, %v569
      %v879 = vpack.c.bf16 %v572, %v570
      %v880 = vpack.c.bf16 %v575, %v573
      %v881 = vpack.c.bf16 %v576, %v574
      %v882 = vpack.c.bf16 %v617, %v615
      %v883 = vpack.c.bf16 %v618, %v616
      %v884 = vpack.c.bf16 %v621, %v619
      %v885 = vpack.c.bf16 %v622, %v620
      %v886 = vpack.c.bf16 %v663, %v661
      %v887 = vpack.c.bf16 %v664, %v662
      %v888 = vpack.c.bf16 %v667, %v665
      %v889 = vpack.c.bf16 %v668, %v666
      %v890 = vpack.c.bf16 %v684, %v682
      %v891 = vpack.c.bf16 %v685, %v683
      %v892 = vpack.c.bf16 %v688, %v686
      %v893 = vpack.c.bf16 %v689, %v687
      %v894 = vpack.c.bf16 %v730, %v728
      %v895 = vpack.c.bf16 %v731, %v729
      %v896 = vpack.c.bf16 %v734, %v732
      %v897 = vpack.c.bf16 %v735, %v733
      %v898 = vpack.c.bf16 %v776, %v774
      %v899 = vpack.c.bf16 %v777, %v775
      %v900 = vpack.c.bf16 %v780, %v778
      %v901 = vpack.c.bf16 %v781, %v779
      %v902 = vpack.c.bf16 %v822, %v820
      %v903 = vpack.c.bf16 %v823, %v821
      %v904 = vpack.c.bf16 %v826, %v824
      %v905 = vpack.c.bf16 %v827, %v825
      %v906 = vpack.c.bf16 %v868, %v866
      %v907 = vpack.c.bf16 %v869, %v867
      %v908 = vpack.c.bf16 %v872, %v870
      %v909 = vpack.c.bf16 %v873, %v871
      %v910 = vld [vmem:[%s4] sm:$0xff]
      %v911 = vld [vmem:[%s4 + $0x8] sm:$0xf]
      %v912 = vld [vmem:[%s4 + $0xc] sm:$0xff]
      %v913 = vld [vmem:[%s4 + $0x14] sm:$0xf]
      %v914 = vld [vmem:[%s4 + $0x18] sm:$0xff]
      %v915 = vld [vmem:[%s4 + $0x20] sm:$0xf]
      %v916 = vld [vmem:[%s4 + $0x24] sm:$0xff]
      %v917 = vld [vmem:[%s4 + $0x2c] sm:$0xf]
      %v918 = vld [vmem:[%s5] sm:$0xff]
      %v919 = vld [vmem:[%s5 + $0x8] sm:$0xff]
      %v920 = vld [vmem:[%s5 + $0x10] sm:$0xff]
      %v921 = vld [vmem:[%s5 + $0x18] sm:$0xff]
      %923 = vset.pattern.permute.xlu0 0
      %924 = vperm.xlu0 %923, %v918
      %v925 = vpop.permute.xlu0 %924
      %928 = vset.pattern.permute.xlu0 0
      %929 = vperm.xlu0 %928, %v919
      %v930 = vpop.permute.xlu0 %929
      %933 = vset.pattern.permute.xlu0 0
      %934 = vperm.xlu0 %933, %v920
      %v935 = vpop.permute.xlu0 %934
      %938 = vset.pattern.permute.xlu0 0
      %939 = vperm.xlu0 %938, %v921
      %v940 = vpop.permute.xlu0 %939
      %v950 = vunpack.c.l.b16 %v910
      %v951 = vunpack.c.h.b16 %v910
      %v952 = vunpack.c.l.b16 %v911
      %v953 = vunpack.c.l.b16 %v912
      %v954 = vunpack.c.h.b16 %v912
      %v955 = vunpack.c.l.b16 %v913
      %v956 = vunpack.c.l.b16 %v914
      %v957 = vunpack.c.h.b16 %v914
      %v958 = vunpack.c.l.b16 %v915
      %v959 = vunpack.c.l.b16 %v916
      %v960 = vunpack.c.h.b16 %v916
      %v961 = vunpack.c.l.b16 %v917
      %v962 = vpack.c.b16 %v953, %v950
      %v963 = vpack.c.b16 %v954, %v951
      %v964 = vpack.c.b16 %v955, %v952
      %v965 = vpack.c.b16 %v959, %v956
      %v966 = vpack.c.b16 %v960, %v957
      %v967 = vpack.c.b16 %v961, %v958
      %vm972 = vcmask 261120
      %v974 = vsel %vm972, %v964, 0
      %v977 = vsel %vm972, %v967, 0
      %979 = vmatprep.subr.bf16.mxu0 %v875
      %980 = vmatpush1.bf16.msra.mxu0 %v874
      %981 = vmatprep.subr.bf16.mxu0 %v877
      %982 = vmatpush1.bf16.msra.mxu0 %v876
      %983 = vmatprep.subr.bf16.mxu0 %v879
      %984 = vmatpush1.bf16.msra.mxu0 %v878
      %985 = vmatprep.subr.bf16.mxu0 %v881
      %986 = vmatpush1.bf16.msra.mxu0 %v880
      %987 = vmatprep.subr.bf16.mxu0 %v883
      %988 = vmatpush1.bf16.msra.mxu0 %v882
      %989 = vmatprep.subr.bf16.mxu0 %v885
      %990 = vmatpush1.bf16.msra.mxu0 %v884
      %991 = vmatprep.subr.bf16.mxu0 %v887
      %992 = vmatpush1.bf16.msra.mxu0 %v886
      %993 = vmatprep.subr.bf16.mxu0 %v889
      %994 = vmatpush1.bf16.msra.mxu0 %v888
      %995 = vmatprep.subr.bf16.mxu0 %v891
      %996 = vmatpush1.bf16.msra.mxu0 %v890
      %997 = vmatprep.subr.bf16.mxu0 %v893
      %998 = vmatpush1.bf16.msra.mxu0 %v892
      %999 = vmatprep.subr.bf16.mxu0 %v895
      %1000 = vmatpush1.bf16.msra.mxu0 %v894
      %1001 = vmatprep.subr.bf16.mxu0 %v897
      %1002 = vmatpush1.bf16.msra.mxu0 %v896
      %1003 = vmatprep.subr.bf16.mxu0 %v899
      %1004 = vmatpush1.bf16.msra.mxu0 %v898
      %1005 = vmatprep.subr.bf16.mxu0 %v901
      %1006 = vmatpush1.bf16.msra.mxu0 %v900
      %1007 = vmatprep.subr.bf16.mxu0 %v903
      %1008 = vmatpush1.bf16.msra.mxu0 %v902
      %1009 = vmatprep.subr.bf16.mxu0 %v905
      %1010 = vmatpush1.bf16.msra.mxu0 %v904
      %1011 = vmatprep.mubr.bf16.mxu0 %v963
      %1012 = vmatmul.mubr.bf16.gmra.mrb[0].mxu0 %v962
      %v1013 = vpop.f32.mrb[0].mxu0
      %v1014 = vadd.f32 %v925, %v1013
      %v1015 = vpop.f32.mrb[0].mxu0
      %v1016 = vadd.f32 %v925, %v1015
      %v1017 = vpop.f32.mrb[0].mxu0
      %v1018 = vadd.f32 %v930, %v1017
      %v1019 = vpop.f32.mrb[0].mxu0
      %v1020 = vadd.f32 %v930, %v1019
      %1021 = vmatprep.mubr.bf16.mxu0 %v966
      %1022 = vmatmul.mubr.bf16.gmra.mrb[0].mxu0 %v965
      %v1023 = vpop.f32.mrb[0].mxu0
      %v1024 = vadd.f32 %v935, %v1023
      %v1025 = vpop.f32.mrb[0].mxu0
      %v1026 = vadd.f32 %v935, %v1025
      %v1027 = vpop.f32.mrb[0].mxu0
      %v1028 = vadd.f32 %v940, %v1027
      %v1029 = vpop.f32.mrb[0].mxu0
      %v1030 = vadd.f32 %v940, %v1029
      %1031 = vdwg.mxu0
      %1032 = vmatprep.subr.bf16.mxu0 %v907
      %1033 = vmatpush1.bf16.msra.mxu0 %v906
      %1034 = vmatprep.subr.bf16.mxu0 %v909
      %1035 = vmatpush1.bf16.msra.mxu0 %v908
      %1036 = vmatprep.subr.bf16.mxu0 0
      %1037 = vmatpush1.bf16.msra.mxu0 0
      %1038 = vmatprep.subr.bf16.mxu0 0
      %1039 = vmatpush1.bf16.msra.mxu0 0
      %1040 = vmatprep.subr.bf16.mxu0 0
      %1041 = vmatpush1.bf16.msra.mxu0 0
      %1042 = vmatprep.subr.bf16.mxu0 0
      %1043 = vmatpush1.bf16.msra.mxu0 0
      %1044 = vmatprep.subr.bf16.mxu0 0
      %1045 = vmatpush1.bf16.msra.mxu0 0
      %1046 = vmatprep.subr.bf16.mxu0 0
      %1047 = vmatpush1.bf16.msra.mxu0 0
      %1048 = vmatprep.subr.bf16.mxu0 0
      %1049 = vmatpush1.bf16.msra.mxu0 0
      %1050 = vmatprep.subr.bf16.mxu0 0
      %1051 = vmatpush1.bf16.msra.mxu0 0
      %1052 = vmatprep.subr.bf16.mxu0 0
      %1053 = vmatpush1.bf16.msra.mxu0 0
      %1054 = vmatprep.subr.bf16.mxu0 0
      %1055 = vmatpush1.bf16.msra.mxu0 0
      %1056 = vmatprep.subr.bf16.mxu0 0
      %1057 = vmatpush1.bf16.msra.mxu0 0
      %1058 = vmatprep.subr.bf16.mxu0 0
      %1059 = vmatpush1.bf16.msra.mxu0 0
      %1060 = vmatprep.subr.bf16.mxu0 0
      %1061 = vmatpush1.bf16.msra.mxu0 0
      %1062 = vmatprep.subr.bf16.mxu0 0
      %1063 = vmatpush1.bf16.msra.mxu0 0
      %1064 = vmatprep.mubr.bf16.mxu0 0
      %1065 = vmatmul.mubr.bf16.gmra.mrb[0].mxu0 %v974
      %v1066 = vpop.f32.mrb[0].mxu0
      %v1067 = vadd.f32 %v1014, %v1066
      %v1068 = vpop.f32.mrb[0].mxu0
      %v1069 = vadd.f32 %v1016, %v1068
      %v1070 = vpop.f32.mrb[0].mxu0
      %v1071 = vadd.f32 %v1018, %v1070
      %v1072 = vpop.f32.mrb[0].mxu0
      %v1073 = vadd.f32 %v1020, %v1072
      %1074 = vmatprep.mubr.bf16.mxu0 0
      %1075 = vmatmul.mubr.bf16.gmra.mrb[0].mxu0 %v977
      %v1076 = vpop.f32.mrb[0].mxu0
      %v1077 = vadd.f32 %v1024, %v1076
      %v1078 = vpop.f32.mrb[0].mxu0
      %v1079 = vadd.f32 %v1026, %v1078
      %v1080 = vpop.f32.mrb[0].mxu0
      %v1081 = vadd.f32 %v1028, %v1080
      %v1082 = vpop.f32.mrb[0].mxu0
      %v1083 = vadd.f32 %v1030, %v1082
      %1084 = vdwg.mxu0
      %v1085 = vmul.f32 %v1067, %v1077
      %v1086 = vmul.f32 %v1069, %v1079
      %v1087 = vmul.f32 %v1071, %v1081
      %v1088 = vmul.f32 %v1073, %v1083
      %v1089 = vpack.c.bf16 %v1087, %v1085
      %v1090 = vpack.c.bf16 %v1088, %v1086
      %v1091 = vld [vmem:[%s6] sm:$0xf]
      %v1092 = vld [vmem:[%s6 + $0x4] sm:$0xf]
      %v1093 = vld [vmem:[%s6 + $0x8] sm:$0xf]
      %v1094 = vld [vmem:[%s6 + $0xc] sm:$0xf]
      %v1095 = vld [vmem:[%s7] sm:$0xff]
      %v1096 = vld [vmem:[%s7 + $0x8] sm:$0xff]
      %v1097 = vld [vmem:[%s7 + $0x10] sm:$0xff]
      %v1098 = vld [vmem:[%s7 + $0x18] sm:$0xff]
      %1100 = vset.pattern.permute.xlu0 0
      %1101 = vperm.xlu0 %1100, %v1095
      %v1102 = vpop.permute.xlu0 %1101
      %1105 = vset.pattern.permute.xlu0 0
      %1106 = vperm.xlu0 %1105, %v1096
      %v1107 = vpop.permute.xlu0 %1106
      %1110 = vset.pattern.permute.xlu0 0
      %1111 = vperm.xlu0 %1110, %v1097
      %v1112 = vpop.permute.xlu0 %1111
      %1115 = vset.pattern.permute.xlu0 0
      %1116 = vperm.xlu0 %1115, %v1098
      %v1117 = vpop.permute.xlu0 %1116
      %v1123 = vunpack.c.l.b16 %v1091
      %v1124 = vunpack.c.l.b16 %v1092
      %v1125 = vunpack.c.l.b16 %v1093
      %v1126 = vunpack.c.l.b16 %v1094
      %v1127 = vpack.c.b16 %v1124, %v1123
      %v1128 = vpack.c.b16 %v1126, %v1125
      %vm1129 = vcmask 130048
      %v1131 = vsel %vm1129, %v1127, 0
      %v1134 = vsel %vm1129, %v1128, 0
      %1136 = vmatprep.subr.bf16.mxu0 %v1090
      %1137 = vmatpush1.bf16.msra.mxu0 %v1089
      %1138 = vmatprep.subr.bf16.mxu0 0
      %1139 = vmatpush1.bf16.msra.mxu0 0
      %1140 = vmatprep.subr.bf16.mxu0 0
      %1141 = vmatpush1.bf16.msra.mxu0 0
      %1142 = vmatprep.subr.bf16.mxu0 0
      %1143 = vmatpush1.bf16.msra.mxu0 0
      %1144 = vmatprep.subr.bf16.mxu0 0
      %1145 = vmatpush1.bf16.msra.mxu0 0
      %1146 = vmatprep.subr.bf16.mxu0 0
      %1147 = vmatpush1.bf16.msra.mxu0 0
      %1148 = vmatprep.subr.bf16.mxu0 0
      %1149 = vmatpush1.bf16.msra.mxu0 0
      %1150 = vmatprep.subr.bf16.mxu0 0
      %1151 = vmatpush1.bf16.msra.mxu0 0
      %1152 = vmatprep.subr.bf16.mxu0 0
      %1153 = vmatpush1.bf16.msra.mxu0 0
      %1154 = vmatprep.subr.bf16.mxu0 0
      %1155 = vmatpush1.bf16.msra.mxu0 0
      %1156 = vmatprep.subr.bf16.mxu0 0
      %1157 = vmatpush1.bf16.msra.mxu0 0
      %1158 = vmatprep.subr.bf16.mxu0 0
      %1159 = vmatpush1.bf16.msra.mxu0 0
      %1160 = vmatprep.subr.bf16.mxu0 0
      %1161 = vmatpush1.bf16.msra.mxu0 0
      %1162 = vmatprep.subr.bf16.mxu0 0
      %1163 = vmatpush1.bf16.msra.mxu0 0
      %1164 = vmatprep.subr.bf16.mxu0 0
      %1165 = vmatpush1.bf16.msra.mxu0 0
      %1166 = vmatprep.subr.bf16.mxu0 0
      %1167 = vmatpush1.bf16.msra.mxu0 0
      %1168 = vmatprep.mubr.bf16.mxu0 0
      %1169 = vmatmul.mubr.bf16.gmra.mrb[0].mxu0 %v1131
      %v1170 = vpop.f32.mrb[0].mxu0
      %v1171 = vadd.f32 %v1102, %v1170
      %v1172 = vpop.f32.mrb[0].mxu0
      %v1173 = vadd.f32 %v1102, %v1172
      %v1174 = vpop.f32.mrb[0].mxu0
      %v1175 = vadd.f32 %v1107, %v1174
      %v1176 = vpop.f32.mrb[0].mxu0
      %v1177 = vadd.f32 %v1107, %v1176
      %1178 = vmatprep.mubr.bf16.mxu0 0
      %1179 = vmatmul.mubr.bf16.gmra.mrb[0].mxu0 %v1134
      %v1180 = vpop.f32.mrb[0].mxu0
      %v1181 = vadd.f32 %v1112, %v1180
      %v1182 = vpop.f32.mrb[0].mxu0
      %v1183 = vadd.f32 %v1112, %v1182
      %v1184 = vpop.f32.mrb[0].mxu0
      %v1185 = vadd.f32 %v1117, %v1184
      %v1186 = vpop.f32.mrb[0].mxu0
      %v1187 = vadd.f32 %v1117, %v1186
      %1188 = vdwg.mxu0
      %v1189 = vadd.f32 %v466, %v1171
      %v1190 = vadd.f32 %v468, %v1173
      %v1191 = vadd.f32 %v470, %v1175
      %v1192 = vadd.f32 %v472, %v1177
      %v1193 = vadd.f32 %v476, %v1181
      %v1194 = vadd.f32 %v478, %v1183
      %v1195 = vadd.f32 %v480, %v1185
      %v1196 = vadd.f32 %v482, %v1187
      %1197 = vrot.lane.b32.xlu0 %v1189, 17
      %v1198 = vpop.permute.xlu0 %1197
      %1199 = vrot.lane.b32.xlu0 %v1191, 17
      %v1200 = vpop.permute.xlu0 %1199
      %1201 = vrot.lane.b32.xlu0 %v1193, 17
      %v1202 = vpop.permute.xlu0 %1201
      %1203 = vrot.lane.b32.xlu0 %v1195, 17
      %v1204 = vpop.permute.xlu0 %1203
      %1205 = vrot.lane.b32.xlu0 %v1190, 17
      %v1206 = vpop.permute.xlu0 %1205
      %1207 = vrot.lane.b32.xlu0 %v1192, 17
      %v1208 = vpop.permute.xlu0 %1207
      %1209 = vrot.lane.b32.xlu0 %v1194, 17
      %v1210 = vpop.permute.xlu0 %1209
      %1211 = vrot.lane.b32.xlu0 %v1196, 17
      %v1212 = vpop.permute.xlu0 %1211
      %v1213 = vsel %vm502, %v1198, %v1206
      %v1214 = vsel %vm502, %v1200, %v1208
      %v1215 = vsel %vm502, %v1202, %v1210
      %v1216 = vsel %vm502, %v1204, %v1212
      %v1217 = vsel %vm502, %v1206, %v1198
      %v1218 = vsel %vm502, %v1208, %v1200
      %v1219 = vsel %vm502, %v1210, %v1202
      %v1220 = vsel %vm502, %v1212, %v1204
      %v1221 = vmul.f32 %v1217, %v516
      %v1222 = vmul.f32 %v1213, %v520
      %v1223 = vmul.f32 %v1218, %v516
      %v1224 = vmul.f32 %v1214, %v520
      %v1225 = vmul.f32 %v1219, %v516
      %v1226 = vmul.f32 %v1215, %v520
      %v1227 = vmul.f32 %v1220, %v516
      %v1228 = vmul.f32 %v1216, %v520
      %1229 = vrot.lane.b32.xlu0 %v1189, 16
      %v1230 = vpop.permute.xlu0 %1229
      %1231 = vrot.lane.b32.xlu0 %v1191, 16
      %v1232 = vpop.permute.xlu0 %1231
      %1233 = vrot.lane.b32.xlu0 %v1193, 16
      %v1234 = vpop.permute.xlu0 %1233
      %1235 = vrot.lane.b32.xlu0 %v1195, 16
      %v1236 = vpop.permute.xlu0 %1235
      %1237 = vrot.lane.b32.xlu0 %v1190, 16
      %v1238 = vpop.permute.xlu0 %1237
      %1239 = vrot.lane.b32.xlu0 %v1192, 16
      %v1240 = vpop.permute.xlu0 %1239
      %1241 = vrot.lane.b32.xlu0 %v1194, 16
      %v1242 = vpop.permute.xlu0 %1241
      %1243 = vrot.lane.b32.xlu0 %v1196, 16
      %v1244 = vpop.permute.xlu0 %1243
      %v1245 = vsel %vm547, %v1230, %v1238
      %v1246 = vsel %vm547, %v1232, %v1240
      %v1247 = vsel %vm547, %v1234, %v1242
      %v1248 = vsel %vm547, %v1236, %v1244
      %v1249 = vsel %vm547, %v1238, %v1230
      %v1250 = vsel %vm547, %v1240, %v1232
      %v1251 = vsel %vm547, %v1242, %v1234
      %v1252 = vsel %vm547, %v1244, %v1236
      %v1253 = vmul.f32 %v1249, %v562
      %v1254 = vmul.f32 %v1245, %v566
      %v1255 = vmul.f32 %v1250, %v562
      %v1256 = vmul.f32 %v1246, %v566
      %v1257 = vmul.f32 %v1251, %v562
      %v1258 = vmul.f32 %v1247, %v566
      %v1259 = vmul.f32 %v1252, %v562
      %v1260 = vmul.f32 %v1248, %v566
      %1261 = vrot.lane.b32.xlu0 %v1189, 15
      %v1262 = vpop.permute.xlu0 %1261
      %1263 = vrot.lane.b32.xlu0 %v1191, 15
      %v1264 = vpop.permute.xlu0 %1263
      %1265 = vrot.lane.b32.xlu0 %v1193, 15
      %v1266 = vpop.permute.xlu0 %1265
      %1267 = vrot.lane.b32.xlu0 %v1195, 15
      %v1268 = vpop.permute.xlu0 %1267
      %1269 = vrot.lane.b32.xlu0 %v1190, 15
      %v1270 = vpop.permute.xlu0 %1269
      %1271 = vrot.lane.b32.xlu0 %v1192, 15
      %v1272 = vpop.permute.xlu0 %1271
      %1273 = vrot.lane.b32.xlu0 %v1194, 15
      %v1274 = vpop.permute.xlu0 %1273
      %1275 = vrot.lane.b32.xlu0 %v1196, 15
      %v1276 = vpop.permute.xlu0 %1275
      %v1277 = vsel %vm593, %v1262, %v1270
      %v1278 = vsel %vm593, %v1264, %v1272
      %v1279 = vsel %vm593, %v1266, %v1274
      %v1280 = vsel %vm593, %v1268, %v1276
      %v1281 = vsel %vm593, %v1270, %v1262
      %v1282 = vsel %vm593, %v1272, %v1264
      %v1283 = vsel %vm593, %v1274, %v1266
      %v1284 = vsel %vm593, %v1276, %v1268
      %v1285 = vmul.f32 %v1281, %v608
      %v1286 = vmul.f32 %v1277, %v612
      %v1287 = vmul.f32 %v1282, %v608
      %v1288 = vmul.f32 %v1278, %v612
      %v1289 = vmul.f32 %v1283, %v608
      %v1290 = vmul.f32 %v1279, %v612
      %v1291 = vmul.f32 %v1284, %v608
      %v1292 = vmul.f32 %v1280, %v612
      %1293 = vrot.lane.b32.xlu0 %v1189, 1
      %v1294 = vpop.permute.xlu0 %1293
      %1295 = vrot.lane.b32.xlu0 %v1191, 1
      %v1296 = vpop.permute.xlu0 %1295
      %1297 = vrot.lane.b32.xlu0 %v1193, 1
      %v1298 = vpop.permute.xlu0 %1297
      %1299 = vrot.lane.b32.xlu0 %v1195, 1
      %v1300 = vpop.permute.xlu0 %1299
      %1301 = vrot.lane.b32.xlu0 %v1190, 1
      %v1302 = vpop.permute.xlu0 %1301
      %1303 = vrot.lane.b32.xlu0 %v1192, 1
      %v1304 = vpop.permute.xlu0 %1303
      %1305 = vrot.lane.b32.xlu0 %v1194, 1
      %v1306 = vpop.permute.xlu0 %1305
      %1307 = vrot.lane.b32.xlu0 %v1196, 1
      %v1308 = vpop.permute.xlu0 %1307
      %v1309 = vsel %vm639, %v1294, %v1302
      %v1310 = vsel %vm639, %v1296, %v1304
      %v1311 = vsel %vm639, %v1298, %v1306
      %v1312 = vsel %vm639, %v1300, %v1308
      %v1313 = vsel %vm639, %v1302, %v1294
      %v1314 = vsel %vm639, %v1304, %v1296
      %v1315 = vsel %vm639, %v1306, %v1298
      %v1316 = vsel %vm639, %v1308, %v1300
      %v1317 = vmul.f32 %v1313, %v654
      %v1318 = vmul.f32 %v1309, %v658
      %v1319 = vmul.f32 %v1314, %v654
      %v1320 = vmul.f32 %v1310, %v658
      %v1321 = vmul.f32 %v1315, %v654
      %v1322 = vmul.f32 %v1311, %v658
      %v1323 = vmul.f32 %v1316, %v654
      %v1324 = vmul.f32 %v1312, %v658
      %v1325 = vmul.f32 %v1189, %v675
      %v1326 = vmul.f32 %v1190, %v679
      %v1327 = vmul.f32 %v1191, %v675
      %v1328 = vmul.f32 %v1192, %v679
      %v1329 = vmul.f32 %v1193, %v675
      %v1330 = vmul.f32 %v1194, %v679
      %v1331 = vmul.f32 %v1195, %v675
      %v1332 = vmul.f32 %v1196, %v679
      %1333 = vrot.lane.b32.xlu0 %v1189, 127
      %v1334 = vpop.permute.xlu0 %1333
      %1335 = vrot.lane.b32.xlu0 %v1191, 127
      %v1336 = vpop.permute.xlu0 %1335
      %1337 = vrot.lane.b32.xlu0 %v1193, 127
      %v1338 = vpop.permute.xlu0 %1337
      %1339 = vrot.lane.b32.xlu0 %v1195, 127
      %v1340 = vpop.permute.xlu0 %1339
      %1341 = vrot.lane.b32.xlu0 %v1190, 127
      %v1342 = vpop.permute.xlu0 %1341
      %1343 = vrot.lane.b32.xlu0 %v1192, 127
      %v1344 = vpop.permute.xlu0 %1343
      %1345 = vrot.lane.b32.xlu0 %v1194, 127
      %v1346 = vpop.permute.xlu0 %1345
      %1347 = vrot.lane.b32.xlu0 %v1196, 127
      %v1348 = vpop.permute.xlu0 %1347
      %v1349 = vsel %vm706, %v1334, %v1342
      %v1350 = vsel %vm706, %v1336, %v1344
      %v1351 = vsel %vm706, %v1338, %v1346
      %v1352 = vsel %vm706, %v1340, %v1348
      %v1353 = vsel %vm706, %v1342, %v1334
      %v1354 = vsel %vm706, %v1344, %v1336
      %v1355 = vsel %vm706, %v1346, %v1338
      %v1356 = vsel %vm706, %v1348, %v1340
      %v1357 = vmul.f32 %v1349, %v721
      %v1358 = vmul.f32 %v1353, %v725
      %v1359 = vmul.f32 %v1350, %v721
      %v1360 = vmul.f32 %v1354, %v725
      %v1361 = vmul.f32 %v1351, %v721
      %v1362 = vmul.f32 %v1355, %v725
      %v1363 = vmul.f32 %v1352, %v721
      %v1364 = vmul.f32 %v1356, %v725
      %1365 = vrot.lane.b32.xlu0 %v1189, 113
      %v1366 = vpop.permute.xlu0 %1365
      %1367 = vrot.lane.b32.xlu0 %v1191, 113
      %v1368 = vpop.permute.xlu0 %1367
      %1369 = vrot.lane.b32.xlu0 %v1193, 113
      %v1370 = vpop.permute.xlu0 %1369
      %1371 = vrot.lane.b32.xlu0 %v1195, 113
      %v1372 = vpop.permute.xlu0 %1371
      %1373 = vrot.lane.b32.xlu0 %v1190, 113
      %v1374 = vpop.permute.xlu0 %1373
      %1375 = vrot.lane.b32.xlu0 %v1192, 113
      %v1376 = vpop.permute.xlu0 %1375
      %1377 = vrot.lane.b32.xlu0 %v1194, 113
      %v1378 = vpop.permute.xlu0 %1377
      %1379 = vrot.lane.b32.xlu0 %v1196, 113
      %v1380 = vpop.permute.xlu0 %1379
      %v1381 = vsel %vm752, %v1366, %v1374
      %v1382 = vsel %vm752, %v1368, %v1376
      %v1383 = vsel %vm752, %v1370, %v1378
      %v1384 = vsel %vm752, %v1372, %v1380
      %v1385 = vsel %vm752, %v1374, %v1366
      %v1386 = vsel %vm752, %v1376, %v1368
      %v1387 = vsel %vm752, %v1378, %v1370
      %v1388 = vsel %vm752, %v1380, %v1372
      %v1389 = vmul.f32 %v1381, %v767
      %v1390 = vmul.f32 %v1385, %v771
      %v1391 = vmul.f32 %v1382, %v767
      %v1392 = vmul.f32 %v1386, %v771
      %v1393 = vmul.f32 %v1383, %v767
      %v1394 = vmul.f32 %v1387, %v771
      %v1395 = vmul.f32 %v1384, %v767
      %v1396 = vmul.f32 %v1388, %v771
      %1397 = vrot.lane.b32.xlu0 %v1189, 112
      %v1398 = vpop.permute.xlu0 %1397
      %1399 = vrot.lane.b32.xlu0 %v1191, 112
      %v1400 = vpop.permute.xlu0 %1399
      %1401 = vrot.lane.b32.xlu0 %v1193, 112
      %v1402 = vpop.permute.xlu0 %1401
      %1403 = vrot.lane.b32.xlu0 %v1195, 112
      %v1404 = vpop.permute.xlu0 %1403
      %1405 = vrot.lane.b32.xlu0 %v1190, 112
      %v1406 = vpop.permute.xlu0 %1405
      %1407 = vrot.lane.b32.xlu0 %v1192, 112
      %v1408 = vpop.permute.xlu0 %1407
      %1409 = vrot.lane.b32.xlu0 %v1194, 112
      %v1410 = vpop.permute.xlu0 %1409
      %1411 = vrot.lane.b32.xlu0 %v1196, 112
      %v1412 = vpop.permute.xlu0 %1411
      %v1413 = vsel %vm798, %v1398, %v1406
      %v1414 = vsel %vm798, %v1400, %v1408
      %v1415 = vsel %vm798, %v1402, %v1410
      %v1416 = vsel %vm798, %v1404, %v1412
      %v1417 = vsel %vm798, %v1406, %v1398
      %v1418 = vsel %vm798, %v1408, %v1400
      %v1419 = vsel %vm798, %v1410, %v1402
      %v1420 = vsel %vm798, %v1412, %v1404
      %v1421 = vmul.f32 %v1413, %v813
      %v1422 = vmul.f32 %v1417, %v817
      %v1423 = vmul.f32 %v1414, %v813
      %v1424 = vmul.f32 %v1418, %v817
      %v1425 = vmul.f32 %v1415, %v813
      %v1426 = vmul.f32 %v1419, %v817
      %v1427 = vmul.f32 %v1416, %v813
      %v1428 = vmul.f32 %v1420, %v817
      %1429 = vrot.lane.b32.xlu0 %v1189, 111
      %v1430 = vpop.permute.xlu0 %1429
      %1431 = vrot.lane.b32.xlu0 %v1191, 111
      %v1432 = vpop.permute.xlu0 %1431
      %1433 = vrot.lane.b32.xlu0 %v1193, 111
      %v1434 = vpop.permute.xlu0 %1433
      %1435 = vrot.lane.b32.xlu0 %v1195, 111
      %v1436 = vpop.permute.xlu0 %1435
      %1437 = vrot.lane.b32.xlu0 %v1190, 111
      %v1438 = vpop.permute.xlu0 %1437
      %1439 = vrot.lane.b32.xlu0 %v1192, 111
      %v1440 = vpop.permute.xlu0 %1439
      %1441 = vrot.lane.b32.xlu0 %v1194, 111
      %v1442 = vpop.permute.xlu0 %1441
      %1443 = vrot.lane.b32.xlu0 %v1196, 111
      %v1444 = vpop.permute.xlu0 %1443
      %v1445 = vsel %vm844, %v1430, %v1438
      %v1446 = vsel %vm844, %v1432, %v1440
      %v1447 = vsel %vm844, %v1434, %v1442
      %v1448 = vsel %vm844, %v1436, %v1444
      %v1449 = vsel %vm844, %v1438, %v1430
      %v1450 = vsel %vm844, %v1440, %v1432
      %v1451 = vsel %vm844, %v1442, %v1434
      %v1452 = vsel %vm844, %v1444, %v1436
      %v1453 = vmul.f32 %v1445, %v859
      %v1454 = vmul.f32 %v1449, %v863
      %v1455 = vmul.f32 %v1446, %v859
      %v1456 = vmul.f32 %v1450, %v863
      %v1457 = vmul.f32 %v1447, %v859
      %v1458 = vmul.f32 %v1451, %v863
      %v1459 = vmul.f32 %v1448, %v859
      %v1460 = vmul.f32 %v1452, %v863
      %v1461 = vpack.c.bf16 %v1223, %v1221
      %v1462 = vpack.c.bf16 %v1224, %v1222
      %v1463 = vpack.c.bf16 %v1227, %v1225
      %v1464 = vpack.c.bf16 %v1228, %v1226
      %v1465 = vpack.c.bf16 %v1255, %v1253
      %v1466 = vpack.c.bf16 %v1256, %v1254
      %v1467 = vpack.c.bf16 %v1259, %v1257
      %v1468 = vpack.c.bf16 %v1260, %v1258
      %v1469 = vpack.c.bf16 %v1287, %v1285
      %v1470 = vpack.c.bf16 %v1288, %v1286
      %v1471 = vpack.c.bf16 %v1291, %v1289
      %v1472 = vpack.c.bf16 %v1292, %v1290
      %v1473 = vpack.c.bf16 %v1319, %v1317
      %v1474 = vpack.c.bf16 %v1320, %v1318
      %v1475 = vpack.c.bf16 %v1323, %v1321
      %v1476 = vpack.c.bf16 %v1324, %v1322
      %v1477 = vpack.c.bf16 %v1327, %v1325
      %v1478 = vpack.c.bf16 %v1328, %v1326
      %v1479 = vpack.c.bf16 %v1331, %v1329
      %v1480 = vpack.c.bf16 %v1332, %v1330
      %v1481 = vpack.c.bf16 %v1359, %v1357
      %v1482 = vpack.c.bf16 %v1360, %v1358
      %v1483 = vpack.c.bf16 %v1363, %v1361
      %v1484 = vpack.c.bf16 %v1364, %v1362
      %v1485 = vpack.c.bf16 %v1391, %v1389
      %v1486 = vpack.c.bf16 %v1392, %v1390
      %v1487 = vpack.c.bf16 %v1395, %v1393
      %v1488 = vpack.c.bf16 %v1396, %v1394
      %v1489 = vpack.c.bf16 %v1423, %v1421
      %v1490 = vpack.c.bf16 %v1424, %v1422
      %v1491 = vpack.c.bf16 %v1427, %v1425
      %v1492 = vpack.c.bf16 %v1428, %v1426
      %v1493 = vpack.c.bf16 %v1455, %v1453
      %v1494 = vpack.c.bf16 %v1456, %v1454
      %v1495 = vpack.c.bf16 %v1459, %v1457
      %v1496 = vpack.c.bf16 %v1460, %v1458
      %v1497 = vld [vmem:[%s8] sm:$0x7]
      %v1498 = vld [vmem:[#allocation2] sm:$0x1]
      %1500 = vset.pattern.permute.xlu0 0
      %1501 = vperm.xlu0 %1500, %v1498
      %v1502 = vpop.permute.xlu0 %1501
      %v1504 = vlaneseq
      %v1505 = vshrl.u32 %v1504, 7
      %v1506 = vsub.s32 0, %v1505
      %v1507 = vrot.slane %v1502, %v1506
      %v1510 = vunpack.c.l.s4 1966171168
      %v1511 = vunpack.c.0.s8 %v1510
      %v1512 = vlaneseq
      %v1513 = vshrl.u32 %v1512, 7
      %v1514 = vsub.s32 %v1511, %v1513
      %v1515 = vrot.slane %v1497, %v1514
      %v1516 = vcombine.high %v1515, %v1515
      %v1518 = vunpack.c.l.s4 1966171168
      %v1519 = vunpack.c.0.s8 %v1518
      %v1520 = vlaneseq
      %v1521 = vshrl.u32 %v1520, 7
      %v1522 = vsub.s32 %v1519, %v1521
      %v1523 = vrot.slane %v1515, %v1522
      %v1525 = vunpack.c.l.s4 1966171168
      %v1526 = vunpack.c.0.s8 %v1525
      %v1527 = vlaneseq
      %v1528 = vshrl.u32 %v1527, 7
      %v1529 = vsub.s32 %v1526, %v1528
      %v1530 = vrot.slane %v1516, %v1529
      %v1531 = vcombine.high %v1523, %v1523
      %v1535 = vsel %vm972, %v1531, 0
      %1537 = vmatprep.subr.bf16.mxu0 %v1462
      %1538 = vmatpush1.bf16.msra.mxu0 %v1461
      %1539 = vmatprep.subr.bf16.mxu0 %v1464
      %1540 = vmatpush1.bf16.msra.mxu0 %v1463
      %1541 = vmatprep.subr.bf16.mxu0 %v1466
      %1542 = vmatpush1.bf16.msra.mxu0 %v1465
      %1543 = vmatprep.subr.bf16.mxu0 %v1468
      %1544 = vmatpush1.bf16.msra.mxu0 %v1467
      %1545 = vmatprep.subr.bf16.mxu0 %v1470
      %1546 = vmatpush1.bf16.msra.mxu0 %v1469
      %1547 = vmatprep.subr.bf16.mxu0 %v1472
      %1548 = vmatpush1.bf16.msra.mxu0 %v1471
      %1549 = vmatprep.subr.bf16.mxu0 %v1474
      %1550 = vmatpush1.bf16.msra.mxu0 %v1473
      %1551 = vmatprep.subr.bf16.mxu0 %v1476
      %1552 = vmatpush1.bf16.msra.mxu0 %v1475
      %1553 = vmatprep.subr.bf16.mxu0 %v1478
      %1554 = vmatpush1.bf16.msra.mxu0 %v1477
      %1555 = vmatprep.subr.bf16.mxu0 %v1480
      %1556 = vmatpush1.bf16.msra.mxu0 %v1479
      %1557 = vmatprep.subr.bf16.mxu0 %v1482
      %1558 = vmatpush1.bf16.msra.mxu0 %v1481
      %1559 = vmatprep.subr.bf16.mxu0 %v1484
      %1560 = vmatpush1.bf16.msra.mxu0 %v1483
      %1561 = vmatprep.subr.bf16.mxu0 %v1486
      %1562 = vmatpush1.bf16.msra.mxu0 %v1485
      %1563 = vmatprep.subr.bf16.mxu0 %v1488
      %1564 = vmatpush1.bf16.msra.mxu0 %v1487
      %1565 = vmatprep.subr.bf16.mxu0 %v1490
      %1566 = vmatpush1.bf16.msra.mxu0 %v1489
      %1567 = vmatprep.subr.bf16.mxu0 %v1492
      %1568 = vmatpush1.bf16.msra.mxu0 %v1491
      %1569 = vmatprep.mubr.bf16.mxu0 %v1530
      %1570 = vmatmul.mubr.bf16.gmra.mrb[0].mxu0 %v1523
      %v1571 = vpop.f32.mrb[0].mxu0
      %v1572 = vadd.f32 %v1507, %v1571
      %v1573 = vpop.f32.mrb[0].mxu0
      %v1574 = vadd.f32 %v1507, %v1573
      %v1575 = vpop.f32.mrb[0].mxu0
      %v1576 = vpop.f32.mrb[0].mxu0
      %1577 = vdwg.mxu0
      %1578 = vmatprep.subr.bf16.mxu0 %v1494
      %1579 = vmatpush1.bf16.msra.mxu0 %v1493
      %1580 = vmatprep.subr.bf16.mxu0 %v1496
      %1581 = vmatpush1.bf16.msra.mxu0 %v1495
      %1582 = vmatprep.subr.bf16.mxu0 0
      %1583 = vmatpush1.bf16.msra.mxu0 0
      %1584 = vmatprep.subr.bf16.mxu0 0
      %1585 = vmatpush1.bf16.msra.mxu0 0
      %1586 = vmatprep.subr.bf16.mxu0 0
      %1587 = vmatpush1.bf16.msra.mxu0 0
      %1588 = vmatprep.subr.bf16.mxu0 0
      %1589 = vmatpush1.bf16.msra.mxu0 0
      %1590 = vmatprep.subr.bf16.mxu0 0
      %1591 = vmatpush1.bf16.msra.mxu0 0
      %1592 = vmatprep.subr.bf16.mxu0 0
      %1593 = vmatpush1.bf16.msra.mxu0 0
      %1594 = vmatprep.subr.bf16.mxu0 0
      %1595 = vmatpush1.bf16.msra.mxu0 0
      %1596 = vmatprep.subr.bf16.mxu0 0
      %1597 = vmatpush1.bf16.msra.mxu0 0
      %1598 = vmatprep.subr.bf16.mxu0 0
      %1599 = vmatpush1.bf16.msra.mxu0 0
      %1600 = vmatprep.subr.bf16.mxu0 0
      %1601 = vmatpush1.bf16.msra.mxu0 0
      %1602 = vmatprep.subr.bf16.mxu0 0
      %1603 = vmatpush1.bf16.msra.mxu0 0
      %1604 = vmatprep.subr.bf16.mxu0 0
      %1605 = vmatpush1.bf16.msra.mxu0 0
      %1606 = vmatprep.subr.bf16.mxu0 0
      %1607 = vmatpush1.bf16.msra.mxu0 0
      %1608 = vmatprep.subr.bf16.mxu0 0
      %1609 = vmatpush1.bf16.msra.mxu0 0
      %1610 = vmatprep.mubr.bf16.mxu0 0
      %1611 = vmatmul.mubr.bf16.gmra.mrb[0].mxu0 %v1535
      %v1612 = vpop.f32.mrb[0].mxu0
      %v1613 = vadd.f32 %v1572, %v1612
      %v1614 = vpop.f32.mrb[0].mxu0
      %v1615 = vadd.f32 %v1574, %v1614
      %v1616 = vpop.f32.mrb[0].mxu0
      %v1617 = vpop.f32.mrb[0].mxu0
      %1618 = vdwg.mxu0
      %v1621 = vcombine.low %v1613, %v1615
      %v1623 = vunpack.c.l.s4 1966171168
      %v1624 = vunpack.c.0.s8 %v1623
      %v1625 = vlaneseq
      %v1626 = vshrl.u32 %v1625, 7
      %v1627 = vsub.s32 %v1624, %v1626
      %v1628 = vrot.slane %v1621, %v1627
      %v1630 = vunpack.c.l.s4 1966171168
      %v1631 = vunpack.c.0.s8 %v1630
      %v1632 = vlaneseq
      %v1633 = vshrl.u32 %v1632, 7
      %v1634 = vsub.s32 %v1631, %v1633
      %v1635 = vrot.slane %v1628, %v1634
      %v1637 = vlaneseq
      %vm1638 = vcmp.ge.s32.totalorder %v1637, 0
      %vm1639 = vcmp.lt.s32.totalorder %v1637, 256
      %vm1640 = vmand %vm1638, %vm1639
      %1641 = vst.msk [vmem:[%s359] sm:$0x3] %vm1640, %v1635
      %p1642 = scmp.lt.s32.totalorder %s23, 1
      %s1643 = scalar_select %p1642, %s23, 1
      %s1644 = smul.addr %s1643, 2
      %s1645 = scalar_lea.vmem %s10, %s1644
      // Predicated region
      $region61: #{zernike_vae_forward.5} parent=59 // pred_check
        %p1646 = pneg %p256
      $region62: #{zernike_vae_forward.5} parent=59 // pred_check_branch
        %1648 = sbr.rel (%p1646) target = $region64
      $region63: #{zernike_vae_forward.5} parent=59 // pred_region
        _
      $region64: #{zernike_vae_forward.5} parent=59 // pred_fallthru
        _
    $region60: #{zernike_vae_forward.5} parent=5 // pred_fallthru
      _
    %p1649 = scmp.le.s32.totalorder 2, %s18
    // Predicated region
    $region65: #{zernike_vae_forward.5} parent=5 // pred_check
      %p1650 = pneg %p1649
    $region66: #{zernike_vae_forward.5} parent=5 // pred_check_branch
      %1652 = sbr.rel (%p1650) target = $region68
    $region67: #{zernike_vae_forward.5} parent=5 // pred_region
      %s1653 = ssub.s32 %s18, 2
      // Predicated region
      $region69: #{zernike_vae_forward.5} parent=67 // pred_check
        %p1654 = pneg %p262
      $region70: #{zernike_vae_forward.5} parent=67 // pred_check_branch
        %1656 = sbr.rel (%p1654) target = $region72
      $region71: #{zernike_vae_forward.5} parent=67 // pred_region
        %p1657 = scmp.lt.s32.totalorder %s24, 1
        %s1658 = scalar_select %p1657, %s24, 1
        %s1659 = smul.addr %s1658, 2
        %s1660 = scalar_lea.vmem %s10, %s1659
      $region72: #{zernike_vae_forward.5} parent=67 // pred_fallthru
        _
    $region68: #{zernike_vae_forward.5} parent=5 // pred_fallthru
      _
  $region6: #{zernike_vae_forward.5} parent=0 // loop_footer
    %s22 = sadd.s32 1, %s18
  $region7: #{zernike_vae_forward.5} parent=0 // loop_footer_branch
    %17 = sbr.rel target = $region3
  $region8: #{zernike_vae_forward.5} parent=0 // loop_exit
    _

</llo_original>
